<compile_context>
chip_gen: v7x
topology: tpu7x:2x2x1
jax: 0.10.0
libtpu: 0.0.40
codegen_flags: <defaults>
</compile_context>

<pallas_src>
import functools

import numpy as np
import jax
import jax.numpy as jnp
from jax import lax
from jax.experimental import pallas as pl
from jax.experimental.pallas import tpu as pltpu

LN_EPS = 1e-5
BN_EPS = 1e-5

# Small shapes consistent with the module (HumanCheck defaults scaled down):
#   ninp (config.recognize_length) -> 128, seq_len (config.seq_len) -> 16,
#   conf_layers = 4, nhead = 4, confhid -> 256, kernel_size = 5.
D_MODEL = 128
SEQ_LEN = 16
N_LAYERS = 4
N_HEAD = 4
FF_HID = 256
KSIZE = 5


# ------------------------------ Pallas kernel ------------------------------

def _sigmoid(x):
    return 1.0 / (1.0 + jnp.exp(-x))


def _swish(x):
    return x * _sigmoid(x)


def _layer_norm(x, g, b):
    mu = jnp.mean(x, axis=-1, keepdims=True)
    xc = x - mu
    var = jnp.mean(xc * xc, axis=-1, keepdims=True)
    return xc * lax.rsqrt(var + LN_EPS) * g + b


def _mm(a, w):
    # bf16 MXU matmul with f32 accumulation.
    return jnp.dot(a.astype(jnp.bfloat16), w, preferred_element_type=jnp.float32)


def _humancheck_kernel(x_ref, lng_ref, lnb_ref,
                       wffi_ref, bffi_ref, wffo_ref, bffo_ref,
                       wqkv_ref, bqkv_ref, wo_ref, bo_ref,
                       wpw1_ref, bpw1_ref, wdw_ref, bdw_ref, bnp_ref,
                       wpw2_ref, bpw2_ref, wd_ref, bd_ref,
                       out_ref, x_scr, *, nhead, ksize):
    layer = pl.program_id(0)

    @pl.when(layer == 0)
    def _():
        x_scr[...] = x_ref[...]

    B, S, D = x_scr.shape
    hd = D // nhead

    x = x_scr[...].reshape(B * S, D)          # residual stream, f32, lane-dense (D = 128)

    lng = lng_ref[0]                          # (5, D) LayerNorm gammas for this layer
    lnb = lnb_ref[0]                          # (5, D) LayerNorm betas
    bffi = bffi_ref[0]                        # (2, H)
    bffo = bffo_ref[0]                        # (2, D)

    # ---------------- FF1 (half-step residual) ----------------
    y = _layer_norm(x, lng[0:1, :], lnb[0:1, :])
    y = _swish(_mm(y, wffi_ref[0, 0]) + bffi[0:1, :])
    y = _mm(y, wffo_ref[0, 0]) + bffo[0:1, :]
    x = x + 0.5 * y

    # ---------------- Multi-head self-attention ----------------
    y = _layer_norm(x, lng[1:2, :], lnb[1:2, :])
    qkv = _mm(y, wqkv_ref[0]) + bqkv_ref[0]                    # (B*S, 3D)
    q = qkv[:, 0:D]
    k = qkv[:, D:2 * D]
    v = qkv[:, 2 * D:3 * D]
    scale = 1.0 / float(np.sqrt(hd))
    heads = []
    for h in range(nhead):
        sl = slice(h * hd, (h + 1) * hd)
        qh = (q[:, sl] * scale).reshape(B, S, hd)
        kh = k[:, sl].reshape(B, S, hd)
        vh = v[:, sl].reshape(B, S, hd)
        s = jnp.einsum('bqd,bkd->bqk', qh.astype(jnp.bfloat16), kh.astype(jnp.bfloat16),
                       preferred_element_type=jnp.float32)      # (B, S, S)
        s = s - jnp.max(s, axis=-1, keepdims=True)
        p = jnp.exp(s)
        p = p / jnp.sum(p, axis=-1, keepdims=True)
        oh = jnp.einsum('bqk,bkd->bqd', p.astype(jnp.bfloat16), vh.astype(jnp.bfloat16),
                        preferred_element_type=jnp.float32)     # (B, S, hd)
        heads.append(oh.reshape(B * S, hd))
    att = jnp.concatenate(heads, axis=-1)                       # (B*S, D)
    att = _mm(att, wo_ref[0]) + bo_ref[0]
    x = x + att

    # ---------------- Convolution module ----------------
    y = _layer_norm(x, lng[2:3, :], lnb[2:3, :])
    y = _mm(y, wpw1_ref[0]) + bpw1_ref[0]                       # pointwise conv1 -> (B*S, 2D)
    y = y[:, 0:D] * _sigmoid(y[:, D:2 * D])                     # GLU over channels
    pad = (ksize - 1) // 2
    y3 = y.reshape(B, S, D)
    zpad = jnp.zeros((B, pad, D), jnp.float32)
    ypad = jnp.concatenate([zpad, y3, zpad], axis=1)            # (B, S + ksize - 1, D)
    wdw = wdw_ref[0]                                            # (ksize, D) depthwise taps, f32
    acc = jnp.zeros((B, S, D), jnp.float32)
    for j in range(ksize):                                      # depthwise conv, 'same' padding
        acc = acc + ypad[:, j:j + S, :] * wdw[j:j + 1, :][None]
    y = acc + bdw_ref[0][None]                                  # (B, S, D)
    bnp = bnp_ref[0]                                            # (4, D): gamma, beta, mean, var
    y = (y - bnp[2:3, :][None]) * lax.rsqrt(bnp[3:4, :][None] + BN_EPS) \
        * bnp[0:1, :][None] + bnp[1:2, :][None]                 # BatchNorm1d (eval, running stats)
    y = _swish(y).reshape(B * S, D)
    y = _mm(y, wpw2_ref[0]) + bpw2_ref[0]                       # pointwise conv2
    x = x + y

    # ---------------- FF2 (half-step residual) ----------------
    y = _layer_norm(x, lng[3:4, :], lnb[3:4, :])
    y = _swish(_mm(y, wffi_ref[0, 1]) + bffi[1:2, :])
    y = _mm(y, wffo_ref[0, 1]) + bffo[1:2, :]
    x = x + 0.5 * y

    # ---------------- final LayerNorm of the Conformer block ----------------
    x = _layer_norm(x, lng[4:5, :], lnb[4:5, :])
    x_scr[...] = x.reshape(B, S, D)

    # ---------------- HumanCheck dense head (only after the last layer) ----------------
    @pl.when(layer == pl.num_programs(0) - 1)
    def _():
        # out[b] = sum_{s,d} x[b,s,d] * wd[s,d] + bd   (== flatten + Linear(S*D, 1))
        prod = x.reshape(B, S, D) * wd_ref[...][None]
        red = jnp.sum(jnp.sum(prod, axis=2), axis=1, keepdims=True)    # (B, 1)
        out_ref[...] = red + bd_ref[...]


# --------------------------------- wrapper ----------------------------------

def make_forward(conf_layers=N_LAYERS, nhead=N_HEAD, ksize=KSIZE):
    def forward(x, p):
        S, D = p['wd'].shape
        x = x.reshape(-1, S, D).astype(jnp.float32)      # mirrors x.view(self.insize)
        B = x.shape[0]

        def per_layer(arr):
            nd = arr.ndim
            return pl.BlockSpec((1,) + arr.shape[1:], lambda l: (l,) + (0,) * (nd - 1))

        def const_spec(arr):
            nd = arr.ndim
            return pl.BlockSpec(arr.shape, lambda l: (0,) * nd)

        in_specs = [
            const_spec(x),
            per_layer(p['lng']), per_layer(p['lnb']),
            per_layer(p['wffi']), per_layer(p['bffi']),
            per_layer(p['wffo']), per_layer(p['bffo']),
            per_layer(p['wqkv']), per_layer(p['bqkv']),
            per_layer(p['wo']), per_layer(p['bo']),
            per_layer(p['wpw1']), per_layer(p['bpw1']),
            per_layer(p['wdw']), per_layer(p['bdw']), per_layer(p['bnp']),
            per_layer(p['wpw2']), per_layer(p['bpw2']),
            const_spec(p['wd']), const_spec(p['bd']),
        ]
        return pl.pallas_call(
            functools.partial(_humancheck_kernel, nhead=nhead, ksize=ksize),
            out_shape=jax.ShapeDtypeStruct((B, 1), jnp.float32),
            grid_spec=pltpu.PrefetchScalarGridSpec(
                num_scalar_prefetch=0,
                grid=(conf_layers,),
                in_specs=in_specs,
                out_specs=pl.BlockSpec((B, 1), lambda l: (0, 0)),
                scratch_shapes=[pltpu.VMEM((B, S, D), jnp.float32)],
            ),
            compiler_params=pltpu.CompilerParams(
                dimension_semantics=("arbitrary",)),
        )(x, p['lng'], p['lnb'], p['wffi'], p['bffi'], p['wffo'], p['bffo'],
          p['wqkv'], p['bqkv'], p['wo'], p['bo'],
          p['wpw1'], p['bpw1'], p['wdw'], p['bdw'], p['bnp'],
          p['wpw2'], p['bpw2'], p['wd'], p['bd'])
    return forward


# ------------------------- host-side init & packing -------------------------

def init_params(key):
    L, D, H, S, K = N_LAYERS, D_MODEL, FF_HID, SEQ_LEN, KSIZE
    assert D % N_HEAD == 0

    def uniform(k, shape, fan_in):
        bound = 1.0 / np.sqrt(fan_in)
        return np.asarray(jax.random.uniform(k, shape, jnp.float32, -bound, bound))

    def bf16_round(a):
        # Round MXU weights to bf16-representable values (shared by kernel and reference).
        return np.asarray(jnp.asarray(a, jnp.bfloat16).astype(jnp.float32))

    keys = jax.random.split(key, L + 1)
    layers = []
    for li in range(L):
        ks = jax.random.split(keys[li], 24)
        p = dict(
            ln_g=1.0 + 0.05 * np.asarray(jax.random.normal(ks[0], (5, D))),
            ln_b=0.05 * np.asarray(jax.random.normal(ks[1], (5, D))),
            wffi=np.stack([bf16_round(uniform(ks[2], (D, H), D)),
                           bf16_round(uniform(ks[3], (D, H), D))]),
            bffi=np.stack([uniform(ks[4], (H,), D), uniform(ks[5], (H,), D)]),
            wffo=np.stack([bf16_round(uniform(ks[6], (H, D), H)),
                           bf16_round(uniform(ks[7], (H, D), H))]),
            bffo=np.stack([uniform(ks[8], (D,), H), uniform(ks[9], (D,), H)]),
            wqkv=bf16_round(uniform(ks[10], (D, 3 * D), D)),
            bqkv=uniform(ks[11], (3 * D,), D),
            wo=bf16_round(uniform(ks[12], (D, D), D)),
            bo=uniform(ks[13], (D,), D),
            wpw1=bf16_round(uniform(ks[14], (D, 2 * D), D)),
            bpw1=uniform(ks[15], (2 * D,), D),
            wdw=uniform(ks[16], (K, D), K),
            bdw=uniform(ks[17], (D,), K),
            bn_g=1.0 + 0.05 * np.asarray(jax.random.normal(ks[18], (D,))),
            bn_b=0.05 * np.asarray(jax.random.normal(ks[19], (D,))),
            bn_m=0.05 * np.asarray(jax.random.normal(ks[20], (D,))),
            bn_v=1.0 + 0.05 * np.abs(np.asarray(jax.random.normal(ks[21], (D,)))),
            wpw2=bf16_round(uniform(ks[22], (D, D), D)),
            bpw2=uniform(ks[23], (D,), D),
        )
        layers.append({k: np.asarray(v, np.float32) for k, v in p.items()})
    kd = jax.random.split(keys[L], 2)
    wd = np.asarray(uniform(kd[0], (S, D), S * D), np.float32)
    bd = np.asarray(uniform(kd[1], (1, 1), S * D), np.float32)
    return layers, wd, bd


def prepare_params(layers, wd, bd):
    """Run once outside jit: stack per-layer weights along a leading layer axis (streamed by the
    grid), cast MXU weights to bf16, give 1-D biases a singleton middle dim for layout safety."""
    def stack(name):
        return np.stack([lp[name] for lp in layers], axis=0)

    return dict(
        lng=jnp.asarray(stack('ln_g'), jnp.float32),                  # (L, 5, D)
        lnb=jnp.asarray(stack('ln_b'), jnp.float32),                  # (L, 5, D)
        wffi=jnp.asarray(stack('wffi'), jnp.bfloat16),                # (L, 2, D, H)
        bffi=jnp.asarray(stack('bffi'), jnp.float32),                 # (L, 2, H)
        wffo=jnp.asarray(stack('wffo'), jnp.bfloat16),                # (L, 2, H, D)
        bffo=jnp.asarray(stack('bffo'), jnp.float32),                 # (L, 2, D)
        wqkv=jnp.asarray(stack('wqkv'), jnp.bfloat16),                # (L, D, 3D)
        bqkv=jnp.asarray(stack('bqkv')[:, None, :], jnp.float32),     # (L, 1, 3D)
        wo=jnp.asarray(stack('wo'), jnp.bfloat16),                    # (L, D, D)
        bo=jnp.asarray(stack('bo')[:, None, :], jnp.float32),         # (L, 1, D)
        wpw1=jnp.asarray(stack('wpw1'), jnp.bfloat16),                # (L, D, 2D)
        bpw1=jnp.asarray(stack('bpw1')[:, None, :], jnp.float32),     # (L, 1, 2D)
        wdw=jnp.asarray(stack('wdw'), jnp.float32),                   # (L, K, D)
        bdw=jnp.asarray(stack('bdw')[:, None, :], jnp.float32),       # (L, 1, D)
        bnp=jnp.asarray(np.stack([np.stack([lp['bn_g'], lp['bn_b'], lp['bn_m'], lp['bn_v']])
                                  for lp in layers]), jnp.float32),   # (L, 4, D)
        wpw2=jnp.asarray(stack('wpw2'), jnp.bfloat16),                # (L, D, D)
        bpw2=jnp.asarray(stack('bpw2')[:, None, :], jnp.float32),     # (L, 1, D)
        wd=jnp.asarray(wd, jnp.float32),                              # (S, D)
        bd=jnp.asarray(bd, jnp.float32),                              # (1, 1)
    )


# ------------------------------ NumPy reference ------------------------------

def _ref_forward(x, layers, wd, bd, *, nhead=N_HEAD, ksize=KSIZE):
    x = np.asarray(x, np.float64)
    B, S, D = x.shape
    hd = D // nhead

    def ln(v, g, b):
        mu = v.mean(-1, keepdims=True)
        var = ((v - mu) ** 2).mean(-1, keepdims=True)
        return (v - mu) / np.sqrt(var + LN_EPS) * g + b

    def sig(v):
        return 1.0 / (1.0 + np.exp(-v))

    def swish(v):
        return v * sig(v)

    h = x.reshape(B * S, D)
    for p32 in layers:
        p = {k: np.asarray(v, np.float64) for k, v in p32.items()}
        # FF1
        y = ln(h, p['ln_g'][0], p['ln_b'][0])
        y = swish(y @ p['wffi'][0] + p['bffi'][0])
        y = y @ p['wffo'][0] + p['bffo'][0]
        h = h + 0.5 * y
        # MHSA
        y = ln(h, p['ln_g'][1], p['ln_b'][1])
        qkv = y @ p['wqkv'] + p['bqkv']
        q, k, v = qkv[:, :D], qkv[:, D:2 * D], qkv[:, 2 * D:]
        outs = []
        for hh in range(nhead):
            sl = slice(hh * hd, (hh + 1) * hd)
            qh = (q[:, sl] / np.sqrt(hd)).reshape(B, S, hd)
            kh = k[:, sl].reshape(B, S, hd)
            vh = v[:, sl].reshape(B, S, hd)
            s = np.einsum('bqd,bkd->bqk', qh, kh)
            s = s - s.max(-1, keepdims=True)
            pr = np.exp(s)
            pr = pr / pr.sum(-1, keepdims=True)
            outs.append(np.einsum('bqk,bkd->bqd', pr, vh).reshape(B * S, hd))
        h = h + np.concatenate(outs, -1) @ p['wo'] + p['bo']
        # Conv module
        y = ln(h, p['ln_g'][2], p['ln_b'][2])
        y = y @ p['wpw1'] + p['bpw1']
        y = y[:, :D] * sig(y[:, D:])
        y3 = y.reshape(B, S, D)
        pad = (ksize - 1) // 2
        ypad = np.concatenate([np.zeros((B, pad, D)), y3, np.zeros((B, pad, D))], axis=1)
        acc = np.zeros((B, S, D))
        for j in range(ksize):
            acc = acc + ypad[:, j:j + S, :] * p['wdw'][j]
        y = acc + p['bdw']
        y = (y - p['bn_m']) / np.sqrt(p['bn_v'] + BN_EPS) * p['bn_g'] + p['bn_b']
        y = swish(y).reshape(B * S, D) @ p['wpw2'] + p['bpw2']
        h = h + y
        # FF2
        y = ln(h, p['ln_g'][3], p['ln_b'][3])
        y = swish(y @ p['wffi'][1] + p['bffi'][1])
        y = y @ p['wffo'][1] + p['bffo'][1]
        h = h + 0.5 * y
        # block LayerNorm
        h = ln(h, p['ln_g'][4], p['ln_b'][4])
    flat = h.reshape(B, S * D)
    return flat @ np.asarray(wd, np.float64).reshape(-1, 1) + np.asarray(bd, np.float64).reshape(1, 1)


# ----------------------------------- main ------------------------------------

if __name__ == "__main__":
    key = jax.random.PRNGKey(0)
    kx, kp = jax.random.split(key)
    x = jax.random.normal(kx, (2, SEQ_LEN, D_MODEL), jnp.float32)   # (B, seq_len, ninp)

    layers, wd, bd = init_params(kp)
    packed = prepare_params(layers, wd, bd)                          # host-side, outside jit

    fwd = jax.jit(make_forward())
    y = jax.block_until_ready(fwd(x, packed))
    assert y.shape == (2, 1), y.shape

    y_ref = _ref_forward(np.asarray(x), layers, wd, bd)
    # bf16 MXU operands (with exactly-shared bf16-rounded weights) through 4 Conformer blocks
    # vs. a float64 reference: expect ~1e-2 absolute error on an O(0.5)-scale output.
    np.testing.assert_allclose(np.asarray(y, np.float64), y_ref, atol=7.5e-2, rtol=5e-2)

    print("KERNEL_OK")
</pallas_src>

<mosaic_0001>
module attributes {stable_mosaic.version = 11 : i64} {
  func.func @_humancheck_kernel(%arg0: i32, %arg1: memref<2x16x128xf32, #tpu.memory_space<vmem>>, %arg2: memref<1x5x128xf32, #tpu.memory_space<vmem>>, %arg3: memref<1x5x128xf32, #tpu.memory_space<vmem>>, %arg4: memref<1x2x128x256xbf16, #tpu.memory_space<vmem>>, %arg5: memref<1x2x256xf32, #tpu.memory_space<vmem>>, %arg6: memref<1x2x256x128xbf16, #tpu.memory_space<vmem>>, %arg7: memref<1x2x128xf32, #tpu.memory_space<vmem>>, %arg8: memref<1x128x384xbf16, #tpu.memory_space<vmem>>, %arg9: memref<1x1x384xf32, #tpu.memory_space<vmem>>, %arg10: memref<1x128x128xbf16, #tpu.memory_space<vmem>>, %arg11: memref<1x1x128xf32, #tpu.memory_space<vmem>>, %arg12: memref<1x128x256xbf16, #tpu.memory_space<vmem>>, %arg13: memref<1x1x256xf32, #tpu.memory_space<vmem>>, %arg14: memref<1x5x128xf32, #tpu.memory_space<vmem>>, %arg15: memref<1x1x128xf32, #tpu.memory_space<vmem>>, %arg16: memref<1x4x128xf32, #tpu.memory_space<vmem>>, %arg17: memref<1x128x128xbf16, #tpu.memory_space<vmem>>, %arg18: memref<1x1x128xf32, #tpu.memory_space<vmem>>, %arg19: memref<16x128xf32, #tpu.memory_space<vmem>>, %arg20: memref<1x1xf32, #tpu.memory_space<vmem>>, %arg21: memref<2x1xf32, #tpu.memory_space<vmem>>, %arg22: memref<2x16x128xf32, #tpu.memory_space<vmem>>) attributes {dimension_semantics = [#tpu.dimension_semantics<arbitrary>], iteration_bounds = array<i64: 4>, scalar_prefetch = 0 : i64, scratch_operands = 1 : i64, tpu.core_type = #tpu.core_type<tc>, window_params = [{pipeline_mode = #tpu.pipeline_mode<synchronous>, transform_indices = @transform_0, window_bounds = array<i64: 2, 16, 128>}, {transform_indices = @transform_1, window_bounds = array<i64: 1, 5, 128>}, {transform_indices = @transform_2, window_bounds = array<i64: 1, 5, 128>}, {transform_indices = @transform_3, window_bounds = array<i64: 1, 2, 128, 256>}, {transform_indices = @transform_4, window_bounds = array<i64: 1, 2, 256>}, {transform_indices = @transform_5, window_bounds = array<i64: 1, 2, 256, 128>}, {transform_indices = @transform_6, window_bounds = array<i64: 1, 2, 128>}, {transform_indices = @transform_7, window_bounds = array<i64: 1, 128, 384>}, {transform_indices = @transform_8, window_bounds = array<i64: 1, 1, 384>}, {transform_indices = @transform_9, window_bounds = array<i64: 1, 128, 128>}, {transform_indices = @transform_10, window_bounds = array<i64: 1, 1, 128>}, {transform_indices = @transform_11, window_bounds = array<i64: 1, 128, 256>}, {transform_indices = @transform_12, window_bounds = array<i64: 1, 1, 256>}, {transform_indices = @transform_13, window_bounds = array<i64: 1, 5, 128>}, {transform_indices = @transform_14, window_bounds = array<i64: 1, 1, 128>}, {transform_indices = @transform_15, window_bounds = array<i64: 1, 4, 128>}, {transform_indices = @transform_16, window_bounds = array<i64: 1, 128, 128>}, {transform_indices = @transform_17, window_bounds = array<i64: 1, 1, 128>}, {pipeline_mode = #tpu.pipeline_mode<synchronous>, transform_indices = @transform_18, window_bounds = array<i64: 16, 128>}, {pipeline_mode = #tpu.pipeline_mode<synchronous>, transform_indices = @transform_19, window_bounds = array<i64: 1, 1>}, {pipeline_mode = #tpu.pipeline_mode<synchronous>, transform_indices = @transform_20, window_bounds = array<i64: 2, 1>}]} {
    %c0_i32 = arith.constant 0 : i32
    %0 = arith.cmpi eq, %arg0, %c0_i32 : i32
    %1 = arith.extui %0 : i1 to i32
    %c0_i32_0 = arith.constant 0 : i32
    %2 = arith.cmpi ne, %1, %c0_i32_0 : i32
    scf.if %2 {
      %c0_136 = arith.constant 0 : index
      %c0_137 = arith.constant 0 : index
      %c0_138 = arith.constant 0 : index
      %393 = vector.load %arg1[%c0_136, %c0_137, %c0_138] : memref<2x16x128xf32, #tpu.memory_space<vmem>>, vector<2x16x128xf32>
      %c0_139 = arith.constant 0 : index
      %c0_140 = arith.constant 0 : index
      %c0_141 = arith.constant 0 : index
      %394 = vector.load %arg22[%c0_139, %c0_140, %c0_141] : memref<2x16x128xf32, #tpu.memory_space<vmem>>, vector<2x16x128xf32>
      tpu.vector_store %arg22[%c0_139, %c0_140, %c0_141], %393 {strides = array<i32>} : memref<2x16x128xf32, #tpu.memory_space<vmem>>, vector<2x16x128xf32>,
    } else {
    }
    %c0 = arith.constant 0 : index
    %c0_1 = arith.constant 0 : index
    %c0_2 = arith.constant 0 : index
    %3 = vector.load %arg22[%c0, %c0_1, %c0_2] : memref<2x16x128xf32, #tpu.memory_space<vmem>>, vector<2x16x128xf32>
    %4 = vector.shape_cast %3 : vector<2x16x128xf32> to vector<32x128xf32>
    %c0_3 = arith.constant 0 : index
    %c0_4 = arith.constant 0 : index
    %c0_5 = arith.constant 0 : index
    %5 = vector.load %arg2[%c0_3, %c0_4, %c0_5] : memref<1x5x128xf32, #tpu.memory_space<vmem>>, vector<1x5x128xf32>
    %6 = vector.shape_cast %5 : vector<1x5x128xf32> to vector<5x128xf32>
    %c0_6 = arith.constant 0 : index
    %c0_7 = arith.constant 0 : index
    %c0_8 = arith.constant 0 : index
    %7 = vector.load %arg3[%c0_6, %c0_7, %c0_8] : memref<1x5x128xf32, #tpu.memory_space<vmem>>, vector<1x5x128xf32>
    %8 = vector.shape_cast %7 : vector<1x5x128xf32> to vector<5x128xf32>
    %c0_9 = arith.constant 0 : index
    %c0_10 = arith.constant 0 : index
    %c0_11 = arith.constant 0 : index
    %9 = vector.load %arg5[%c0_9, %c0_10, %c0_11] : memref<1x2x256xf32, #tpu.memory_space<vmem>>, vector<1x2x256xf32>
    %10 = vector.shape_cast %9 : vector<1x2x256xf32> to vector<2x256xf32>
    %c0_12 = arith.constant 0 : index
    %c0_13 = arith.constant 0 : index
    %c0_14 = arith.constant 0 : index
    %11 = vector.load %arg7[%c0_12, %c0_13, %c0_14] : memref<1x2x128xf32, #tpu.memory_space<vmem>>, vector<1x2x128xf32>
    %12 = vector.shape_cast %11 : vector<1x2x128xf32> to vector<2x128xf32>
    %13 = vector.extract_strided_slice %6 {offsets = [0, 0], sizes = [1, 128], strides = [1, 1]} : vector<5x128xf32> to vector<1x128xf32>
    %14 = vector.extract_strided_slice %8 {offsets = [0, 0], sizes = [1, 128], strides = [1, 1]} : vector<5x128xf32> to vector<1x128xf32>
    %cst = arith.constant dense<0.000000e+00> : vector<32xf32>
    %15 = vector.multi_reduction <add>, %4, %cst [1] : vector<32x128xf32> to vector<32xf32>
    %16 = vector.shape_cast %15 : vector<32xf32> to vector<32x1xf32>
    %cst_15 = arith.constant 1.280000e+02 : f32
    %17 = vector.broadcast %cst_15 : f32 to vector<32x1xf32>
    %18 = arith.divf %16, %17 : vector<32x1xf32>
    %19 = vector.broadcast %18 : vector<32x1xf32> to vector<32x128xf32>
    %20 = arith.subf %4, %19 : vector<32x128xf32>
    %21 = arith.mulf %20, %20 : vector<32x128xf32>
    %cst_16 = arith.constant dense<0.000000e+00> : vector<32xf32>
    %22 = vector.multi_reduction <add>, %21, %cst_16 [1] : vector<32x128xf32> to vector<32xf32>
    %23 = vector.shape_cast %22 : vector<32xf32> to vector<32x1xf32>
    %cst_17 = arith.constant 1.280000e+02 : f32
    %24 = vector.broadcast %cst_17 : f32 to vector<32x1xf32>
    %25 = arith.divf %23, %24 : vector<32x1xf32>
    %cst_18 = arith.constant 9.99999974E-6 : f32
    %26 = vector.broadcast %cst_18 : f32 to vector<32x1xf32>
    %27 = arith.addf %25, %26 : vector<32x1xf32>
    %28 = math.rsqrt %27 : vector<32x1xf32>
    %29 = vector.broadcast %28 : vector<32x1xf32> to vector<32x128xf32>
    %30 = arith.mulf %20, %29 : vector<32x128xf32>
    %31 = vector.broadcast %13 : vector<1x128xf32> to vector<32x128xf32>
    %32 = arith.mulf %30, %31 : vector<32x128xf32>
    %33 = vector.broadcast %14 : vector<1x128xf32> to vector<32x128xf32>
    %34 = arith.addf %32, %33 : vector<32x128xf32>
    %c0_19 = arith.constant 0 : index
    %c0_20 = arith.constant 0 : index
    %c0_21 = arith.constant 0 : index
    %c0_22 = arith.constant 0 : index
    %35 = vector.load %arg4[%c0_19, %c0_20, %c0_21, %c0_22] : memref<1x2x128x256xbf16, #tpu.memory_space<vmem>>, vector<1x1x128x256xbf16>
    %36 = vector.shape_cast %35 : vector<1x1x128x256xbf16> to vector<128x256xbf16>
    %37 = arith.truncf %34 : vector<32x128xf32> to vector<32x128xbf16>
    %cst_23 = arith.constant dense<0.000000e+00> : vector<32x256xf32>
    %38 = tpu.matmul %37, %36, %cst_23 {dimension_numbers = #tpu.dot_dimension_numbers<[1], [0], [0], [1], [0, 0, 1, 1], [], []>} : vector<32x128xbf16>, vector<128x256xbf16>, vector<32x256xf32> -> vector<32x256xf32>
    %39 = vector.extract_strided_slice %10 {offsets = [0, 0], sizes = [1, 256], strides = [1, 1]} : vector<2x256xf32> to vector<1x256xf32>
    %40 = vector.broadcast %39 : vector<1x256xf32> to vector<32x256xf32>
    %41 = arith.addf %38, %40 : vector<32x256xf32>
    %cst_24 = arith.constant 0.000000e+00 : f32
    %42 = vector.broadcast %cst_24 : f32 to vector<32x256xf32>
    %43 = arith.subf %42, %41 : vector<32x256xf32>
    %44 = math.exp %43 : vector<32x256xf32>
    %cst_25 = arith.constant 1.000000e+00 : f32
    %45 = vector.broadcast %cst_25 : f32 to vector<32x256xf32>
    %46 = arith.addf %45, %44 : vector<32x256xf32>
    %cst_26 = arith.constant 1.000000e+00 : f32
    %47 = vector.broadcast %cst_26 : f32 to vector<32x256xf32>
    %48 = arith.divf %47, %46 : vector<32x256xf32>
    %49 = arith.mulf %41, %48 : vector<32x256xf32>
    %c0_27 = arith.constant 0 : index
    %c0_28 = arith.constant 0 : index
    %c0_29 = arith.constant 0 : index
    %c0_30 = arith.constant 0 : index
    %50 = vector.load %arg6[%c0_27, %c0_28, %c0_29, %c0_30] : memref<1x2x256x128xbf16, #tpu.memory_space<vmem>>, vector<1x1x256x128xbf16>
    %51 = vector.shape_cast %50 : vector<1x1x256x128xbf16> to vector<256x128xbf16>
    %52 = arith.truncf %49 : vector<32x256xf32> to vector<32x256xbf16>
    %cst_31 = arith.constant dense<0.000000e+00> : vector<32x128xf32>
    %53 = tpu.matmul %52, %51, %cst_31 {dimension_numbers = #tpu.dot_dimension_numbers<[1], [0], [0], [1], [0, 0, 1, 1], [], []>} : vector<32x256xbf16>, vector<256x128xbf16>, vector<32x128xf32> -> vector<32x128xf32>
    %54 = vector.extract_strided_slice %12 {offsets = [0, 0], sizes = [1, 128], strides = [1, 1]} : vector<2x128xf32> to vector<1x128xf32>
    %55 = vector.broadcast %54 : vector<1x128xf32> to vector<32x128xf32>
    %56 = arith.addf %53, %55 : vector<32x128xf32>
    %cst_32 = arith.constant 5.000000e-01 : f32
    %57 = vector.broadcast %cst_32 : f32 to vector<32x128xf32>
    %58 = arith.mulf %57, %56 : vector<32x128xf32>
    %59 = arith.addf %4, %58 : vector<32x128xf32>
    %60 = vector.extract_strided_slice %6 {offsets = [1, 0], sizes = [1, 128], strides = [1, 1]} : vector<5x128xf32> to vector<1x128xf32>
    %61 = vector.extract_strided_slice %8 {offsets = [1, 0], sizes = [1, 128], strides = [1, 1]} : vector<5x128xf32> to vector<1x128xf32>
    %cst_33 = arith.constant dense<0.000000e+00> : vector<32xf32>
    %62 = vector.multi_reduction <add>, %59, %cst_33 [1] : vector<32x128xf32> to vector<32xf32>
    %63 = vector.shape_cast %62 : vector<32xf32> to vector<32x1xf32>
    %cst_34 = arith.constant 1.280000e+02 : f32
    %64 = vector.broadcast %cst_34 : f32 to vector<32x1xf32>
    %65 = arith.divf %63, %64 : vector<32x1xf32>
    %66 = vector.broadcast %65 : vector<32x1xf32> to vector<32x128xf32>
    %67 = arith.subf %59, %66 : vector<32x128xf32>
    %68 = arith.mulf %67, %67 : vector<32x128xf32>
    %cst_35 = arith.constant dense<0.000000e+00> : vector<32xf32>
    %69 = vector.multi_reduction <add>, %68, %cst_35 [1] : vector<32x128xf32> to vector<32xf32>
    %70 = vector.shape_cast %69 : vector<32xf32> to vector<32x1xf32>
    %cst_36 = arith.constant 1.280000e+02 : f32
    %71 = vector.broadcast %cst_36 : f32 to vector<32x1xf32>
    %72 = arith.divf %70, %71 : vector<32x1xf32>
    %cst_37 = arith.constant 9.99999974E-6 : f32
    %73 = vector.broadcast %cst_37 : f32 to vector<32x1xf32>
    %74 = arith.addf %72, %73 : vector<32x1xf32>
    %75 = math.rsqrt %74 : vector<32x1xf32>
    %76 = vector.broadcast %75 : vector<32x1xf32> to vector<32x128xf32>
    %77 = arith.mulf %67, %76 : vector<32x128xf32>
    %78 = vector.broadcast %60 : vector<1x128xf32> to vector<32x128xf32>
    %79 = arith.mulf %77, %78 : vector<32x128xf32>
    %80 = vector.broadcast %61 : vector<1x128xf32> to vector<32x128xf32>
    %81 = arith.addf %79, %80 : vector<32x128xf32>
    %c0_38 = arith.constant 0 : index
    %c0_39 = arith.constant 0 : index
    %c0_40 = arith.constant 0 : index
    %82 = vector.load %arg8[%c0_38, %c0_39, %c0_40] : memref<1x128x384xbf16, #tpu.memory_space<vmem>>, vector<1x128x384xbf16>
    %83 = vector.shape_cast %82 : vector<1x128x384xbf16> to vector<128x384xbf16>
    %84 = arith.truncf %81 : vector<32x128xf32> to vector<32x128xbf16>
    %cst_41 = arith.constant dense<0.000000e+00> : vector<32x384xf32>
    %85 = tpu.matmul %84, %83, %cst_41 {dimension_numbers = #tpu.dot_dimension_numbers<[1], [0], [0], [1], [0, 0, 1, 1], [], []>} : vector<32x128xbf16>, vector<128x384xbf16>, vector<32x384xf32> -> vector<32x384xf32>
    %c0_42 = arith.constant 0 : index
    %c0_43 = arith.constant 0 : index
    %c0_44 = arith.constant 0 : index
    %86 = vector.load %arg9[%c0_42, %c0_43, %c0_44] : memref<1x1x384xf32, #tpu.memory_space<vmem>>, vector<1x1x384xf32>
    %87 = vector.shape_cast %86 : vector<1x1x384xf32> to vector<1x384xf32>
    %88 = vector.broadcast %87 : vector<1x384xf32> to vector<32x384xf32>
    %89 = arith.addf %85, %88 : vector<32x384xf32>
    %90 = vector.extract_strided_slice %89 {offsets = [0, 0], sizes = [32, 128], strides = [1, 1]} : vector<32x384xf32> to vector<32x128xf32>
    %91 = vector.extract_strided_slice %89 {offsets = [0, 128], sizes = [32, 128], strides = [1, 1]} : vector<32x384xf32> to vector<32x128xf32>
    %92 = vector.extract_strided_slice %89 {offsets = [0, 256], sizes = [32, 128], strides = [1, 1]} : vector<32x384xf32> to vector<32x128xf32>
    %93 = vector.extract_strided_slice %90 {offsets = [0, 0], sizes = [32, 32], strides = [1, 1]} : vector<32x128xf32> to vector<32x32xf32>
    %cst_45 = arith.constant 0.176776692 : f32
    %94 = vector.broadcast %cst_45 : f32 to vector<32x32xf32>
    %95 = arith.mulf %93, %94 : vector<32x32xf32>
    %96 = vector.shape_cast %95 : vector<32x32xf32> to vector<2x16x32xf32>
    %97 = vector.extract_strided_slice %91 {offsets = [0, 0], sizes = [32, 32], strides = [1, 1]} : vector<32x128xf32> to vector<32x32xf32>
    %98 = vector.shape_cast %97 : vector<32x32xf32> to vector<2x16x32xf32>
    %99 = vector.extract_strided_slice %92 {offsets = [0, 0], sizes = [32, 32], strides = [1, 1]} : vector<32x128xf32> to vector<32x32xf32>
    %100 = vector.shape_cast %99 : vector<32x32xf32> to vector<2x16x32xf32>
    %101 = arith.truncf %96 : vector<2x16x32xf32> to vector<2x16x32xbf16>
    %102 = arith.truncf %98 : vector<2x16x32xf32> to vector<2x16x32xbf16>
    "tpu.trace_start"() <{level = 10 : i32, message = "bqd,bkd->bqk"}> : () -> ()
    %cst_46 = arith.constant dense<0.000000e+00> : vector<2x16x16xf32>
    %103 = tpu.matmul %101, %102, %cst_46 {dimension_numbers = #tpu.dot_dimension_numbers<[2], [2], [1], [1], [0, 0, 0, 1, 1, 1], [0], [0]>} : vector<2x16x32xbf16>, vector<2x16x32xbf16>, vector<2x16x16xf32> -> vector<2x16x16xf32>
    "tpu.trace_stop"() : () -> ()
    %cst_47 = arith.constant dense<0xFF800000> : vector<2x16xf32>
    %104 = vector.multi_reduction <maximumf>, %103, %cst_47 [2] : vector<2x16x16xf32> to vector<2x16xf32>
    %105 = vector.shape_cast %104 : vector<2x16xf32> to vector<2x16x1xf32>
    %106 = vector.broadcast %105 : vector<2x16x1xf32> to vector<2x16x16xf32>
    %107 = arith.subf %103, %106 : vector<2x16x16xf32>
    %108 = math.exp %107 : vector<2x16x16xf32>
    %cst_48 = arith.constant dense<0.000000e+00> : vector<2x16xf32>
    %109 = vector.multi_reduction <add>, %108, %cst_48 [2] : vector<2x16x16xf32> to vector<2x16xf32>
    %110 = vector.shape_cast %109 : vector<2x16xf32> to vector<2x16x1xf32>
    %111 = vector.broadcast %110 : vector<2x16x1xf32> to vector<2x16x16xf32>
    %112 = arith.divf %108, %111 : vector<2x16x16xf32>
    %113 = arith.truncf %112 : vector<2x16x16xf32> to vector<2x16x16xbf16>
    %114 = arith.truncf %100 : vector<2x16x32xf32> to vector<2x16x32xbf16>
    "tpu.trace_start"() <{level = 10 : i32, message = "bqk,bkd->bqd"}> : () -> ()
    %cst_49 = arith.constant dense<0.000000e+00> : vector<2x16x32xf32>
    %115 = tpu.matmul %113, %114, %cst_49 {dimension_numbers = #tpu.dot_dimension_numbers<[2], [1], [1], [2], [0, 0, 0, 1, 1, 2], [0], [0]>} : vector<2x16x16xbf16>, vector<2x16x32xbf16>, vector<2x16x32xf32> -> vector<2x16x32xf32>
    "tpu.trace_stop"() : () -> ()
    %116 = vector.shape_cast %115 : vector<2x16x32xf32> to vector<32x32xf32>
    %117 = vector.extract_strided_slice %90 {offsets = [0, 32], sizes = [32, 32], strides = [1, 1]} : vector<32x128xf32> to vector<32x32xf32>
    %cst_50 = arith.constant 0.176776692 : f32
    %118 = vector.broadcast %cst_50 : f32 to vector<32x32xf32>
    %119 = arith.mulf %117, %118 : vector<32x32xf32>
    %120 = vector.shape_cast %119 : vector<32x32xf32> to vector<2x16x32xf32>
    %121 = vector.extract_strided_slice %91 {offsets = [0, 32], sizes = [32, 32], strides = [1, 1]} : vector<32x128xf32> to vector<32x32xf32>
    %122 = vector.shape_cast %121 : vector<32x32xf32> to vector<2x16x32xf32>
    %123 = vector.extract_strided_slice %92 {offsets = [0, 32], sizes = [32, 32], strides = [1, 1]} : vector<32x128xf32> to vector<32x32xf32>
    %124 = vector.shape_cast %123 : vector<32x32xf32> to vector<2x16x32xf32>
    %125 = arith.truncf %120 : vector<2x16x32xf32> to vector<2x16x32xbf16>
    %126 = arith.truncf %122 : vector<2x16x32xf32> to vector<2x16x32xbf16>
    "tpu.trace_start"() <{level = 10 : i32, message = "bqd,bkd->bqk"}> : () -> ()
    %cst_51 = arith.constant dense<0.000000e+00> : vector<2x16x16xf32>
    %127 = tpu.matmul %125, %126, %cst_51 {dimension_numbers = #tpu.dot_dimension_numbers<[2], [2], [1], [1], [0, 0, 0, 1, 1, 1], [0], [0]>} : vector<2x16x32xbf16>, vector<2x16x32xbf16>, vector<2x16x16xf32> -> vector<2x16x16xf32>
    "tpu.trace_stop"() : () -> ()
    %cst_52 = arith.constant dense<0xFF800000> : vector<2x16xf32>
    %128 = vector.multi_reduction <maximumf>, %127, %cst_52 [2] : vector<2x16x16xf32> to vector<2x16xf32>
    %129 = vector.shape_cast %128 : vector<2x16xf32> to vector<2x16x1xf32>
    %130 = vector.broadcast %129 : vector<2x16x1xf32> to vector<2x16x16xf32>
    %131 = arith.subf %127, %130 : vector<2x16x16xf32>
    %132 = math.exp %131 : vector<2x16x16xf32>
    %cst_53 = arith.constant dense<0.000000e+00> : vector<2x16xf32>
    %133 = vector.multi_reduction <add>, %132, %cst_53 [2] : vector<2x16x16xf32> to vector<2x16xf32>
    %134 = vector.shape_cast %133 : vector<2x16xf32> to vector<2x16x1xf32>
    %135 = vector.broadcast %134 : vector<2x16x1xf32> to vector<2x16x16xf32>
    %136 = arith.divf %132, %135 : vector<2x16x16xf32>
    %137 = arith.truncf %136 : vector<2x16x16xf32> to vector<2x16x16xbf16>
    %138 = arith.truncf %124 : vector<2x16x32xf32> to vector<2x16x32xbf16>
    "tpu.trace_start"() <{level = 10 : i32, message = "bqk,bkd->bqd"}> : () -> ()
    %cst_54 = arith.constant dense<0.000000e+00> : vector<2x16x32xf32>
    %139 = tpu.matmul %137, %138, %cst_54 {dimension_numbers = #tpu.dot_dimension_numbers<[2], [1], [1], [2], [0, 0, 0, 1, 1, 2], [0], [0]>} : vector<2x16x16xbf16>, vector<2x16x32xbf16>, vector<2x16x32xf32> -> vector<2x16x32xf32>
    "tpu.trace_stop"() : () -> ()
    %140 = vector.shape_cast %139 : vector<2x16x32xf32> to vector<32x32xf32>
    %141 = vector.extract_strided_slice %90 {offsets = [0, 64], sizes = [32, 32], strides = [1, 1]} : vector<32x128xf32> to vector<32x32xf32>
    %cst_55 = arith.constant 0.176776692 : f32
    %142 = vector.broadcast %cst_55 : f32 to vector<32x32xf32>
    %143 = arith.mulf %141, %142 : vector<32x32xf32>
    %144 = vector.shape_cast %143 : vector<32x32xf32> to vector<2x16x32xf32>
    %145 = vector.extract_strided_slice %91 {offsets = [0, 64], sizes = [32, 32], strides = [1, 1]} : vector<32x128xf32> to vector<32x32xf32>
    %146 = vector.shape_cast %145 : vector<32x32xf32> to vector<2x16x32xf32>
    %147 = vector.extract_strided_slice %92 {offsets = [0, 64], sizes = [32, 32], strides = [1, 1]} : vector<32x128xf32> to vector<32x32xf32>
    %148 = vector.shape_cast %147 : vector<32x32xf32> to vector<2x16x32xf32>
    %149 = arith.truncf %144 : vector<2x16x32xf32> to vector<2x16x32xbf16>
    %150 = arith.truncf %146 : vector<2x16x32xf32> to vector<2x16x32xbf16>
    "tpu.trace_start"() <{level = 10 : i32, message = "bqd,bkd->bqk"}> : () -> ()
    %cst_56 = arith.constant dense<0.000000e+00> : vector<2x16x16xf32>
    %151 = tpu.matmul %149, %150, %cst_56 {dimension_numbers = #tpu.dot_dimension_numbers<[2], [2], [1], [1], [0, 0, 0, 1, 1, 1], [0], [0]>} : vector<2x16x32xbf16>, vector<2x16x32xbf16>, vector<2x16x16xf32> -> vector<2x16x16xf32>
    "tpu.trace_stop"() : () -> ()
    %cst_57 = arith.constant dense<0xFF800000> : vector<2x16xf32>
    %152 = vector.multi_reduction <maximumf>, %151, %cst_57 [2] : vector<2x16x16xf32> to vector<2x16xf32>
    %153 = vector.shape_cast %152 : vector<2x16xf32> to vector<2x16x1xf32>
    %154 = vector.broadcast %153 : vector<2x16x1xf32> to vector<2x16x16xf32>
    %155 = arith.subf %151, %154 : vector<2x16x16xf32>
    %156 = math.exp %155 : vector<2x16x16xf32>
    %cst_58 = arith.constant dense<0.000000e+00> : vector<2x16xf32>
    %157 = vector.multi_reduction <add>, %156, %cst_58 [2] : vector<2x16x16xf32> to vector<2x16xf32>
    %158 = vector.shape_cast %157 : vector<2x16xf32> to vector<2x16x1xf32>
    %159 = vector.broadcast %158 : vector<2x16x1xf32> to vector<2x16x16xf32>
    %160 = arith.divf %156, %159 : vector<2x16x16xf32>
    %161 = arith.truncf %160 : vector<2x16x16xf32> to vector<2x16x16xbf16>
    %162 = arith.truncf %148 : vector<2x16x32xf32> to vector<2x16x32xbf16>
    "tpu.trace_start"() <{level = 10 : i32, message = "bqk,bkd->bqd"}> : () -> ()
    %cst_59 = arith.constant dense<0.000000e+00> : vector<2x16x32xf32>
    %163 = tpu.matmul %161, %162, %cst_59 {dimension_numbers = #tpu.dot_dimension_numbers<[2], [1], [1], [2], [0, 0, 0, 1, 1, 2], [0], [0]>} : vector<2x16x16xbf16>, vector<2x16x32xbf16>, vector<2x16x32xf32> -> vector<2x16x32xf32>
    "tpu.trace_stop"() : () -> ()
    %164 = vector.shape_cast %163 : vector<2x16x32xf32> to vector<32x32xf32>
    %165 = vector.extract_strided_slice %90 {offsets = [0, 96], sizes = [32, 32], strides = [1, 1]} : vector<32x128xf32> to vector<32x32xf32>
    %cst_60 = arith.constant 0.176776692 : f32
    %166 = vector.broadcast %cst_60 : f32 to vector<32x32xf32>
    %167 = arith.mulf %165, %166 : vector<32x32xf32>
    %168 = vector.shape_cast %167 : vector<32x32xf32> to vector<2x16x32xf32>
    %169 = vector.extract_strided_slice %91 {offsets = [0, 96], sizes = [32, 32], strides = [1, 1]} : vector<32x128xf32> to vector<32x32xf32>
    %170 = vector.shape_cast %169 : vector<32x32xf32> to vector<2x16x32xf32>
    %171 = vector.extract_strided_slice %92 {offsets = [0, 96], sizes = [32, 32], strides = [1, 1]} : vector<32x128xf32> to vector<32x32xf32>
    %172 = vector.shape_cast %171 : vector<32x32xf32> to vector<2x16x32xf32>
    %173 = arith.truncf %168 : vector<2x16x32xf32> to vector<2x16x32xbf16>
    %174 = arith.truncf %170 : vector<2x16x32xf32> to vector<2x16x32xbf16>
    "tpu.trace_start"() <{level = 10 : i32, message = "bqd,bkd->bqk"}> : () -> ()
    %cst_61 = arith.constant dense<0.000000e+00> : vector<2x16x16xf32>
    %175 = tpu.matmul %173, %174, %cst_61 {dimension_numbers = #tpu.dot_dimension_numbers<[2], [2], [1], [1], [0, 0, 0, 1, 1, 1], [0], [0]>} : vector<2x16x32xbf16>, vector<2x16x32xbf16>, vector<2x16x16xf32> -> vector<2x16x16xf32>
    "tpu.trace_stop"() : () -> ()
    %cst_62 = arith.constant dense<0xFF800000> : vector<2x16xf32>
    %176 = vector.multi_reduction <maximumf>, %175, %cst_62 [2] : vector<2x16x16xf32> to vector<2x16xf32>
    %177 = vector.shape_cast %176 : vector<2x16xf32> to vector<2x16x1xf32>
    %178 = vector.broadcast %177 : vector<2x16x1xf32> to vector<2x16x16xf32>
    %179 = arith.subf %175, %178 : vector<2x16x16xf32>
    %180 = math.exp %179 : vector<2x16x16xf32>
    %cst_63 = arith.constant dense<0.000000e+00> : vector<2x16xf32>
    %181 = vector.multi_reduction <add>, %180, %cst_63 [2] : vector<2x16x16xf32> to vector<2x16xf32>
    %182 = vector.shape_cast %181 : vector<2x16xf32> to vector<2x16x1xf32>
    %183 = vector.broadcast %182 : vector<2x16x1xf32> to vector<2x16x16xf32>
    %184 = arith.divf %180, %183 : vector<2x16x16xf32>
    %185 = arith.truncf %184 : vector<2x16x16xf32> to vector<2x16x16xbf16>
    %186 = arith.truncf %172 : vector<2x16x32xf32> to vector<2x16x32xbf16>
    "tpu.trace_start"() <{level = 10 : i32, message = "bqk,bkd->bqd"}> : () -> ()
    %cst_64 = arith.constant dense<0.000000e+00> : vector<2x16x32xf32>
    %187 = tpu.matmul %185, %186, %cst_64 {dimension_numbers = #tpu.dot_dimension_numbers<[2], [1], [1], [2], [0, 0, 0, 1, 1, 2], [0], [0]>} : vector<2x16x16xbf16>, vector<2x16x32xbf16>, vector<2x16x32xf32> -> vector<2x16x32xf32>
    "tpu.trace_stop"() : () -> ()
    %188 = vector.shape_cast %187 : vector<2x16x32xf32> to vector<32x32xf32>
    %189 = tpu.concatenate %116, %140, %164, %188 in 1 : vector<32x32xf32>, vector<32x32xf32>, vector<32x32xf32>, vector<32x32xf32> -> vector<32x128xf32>
    %c0_65 = arith.constant 0 : index
    %c0_66 = arith.constant 0 : index
    %c0_67 = arith.constant 0 : index
    %190 = vector.load %arg10[%c0_65, %c0_66, %c0_67] : memref<1x128x128xbf16, #tpu.memory_space<vmem>>, vector<1x128x128xbf16>
    %191 = vector.shape_cast %190 : vector<1x128x128xbf16> to vector<128x128xbf16>
    %192 = arith.truncf %189 : vector<32x128xf32> to vector<32x128xbf16>
    %cst_68 = arith.constant dense<0.000000e+00> : vector<32x128xf32>
    %193 = tpu.matmul %192, %191, %cst_68 {dimension_numbers = #tpu.dot_dimension_numbers<[1], [0], [0], [1], [0, 0, 1, 1], [], []>} : vector<32x128xbf16>, vector<128x128xbf16>, vector<32x128xf32> -> vector<32x128xf32>
    %c0_69 = arith.constant 0 : index
    %c0_70 = arith.constant 0 : index
    %c0_71 = arith.constant 0 : index
    %194 = vector.load %arg11[%c0_69, %c0_70, %c0_71] : memref<1x1x128xf32, #tpu.memory_space<vmem>>, vector<1x1x128xf32>
    %195 = vector.shape_cast %194 : vector<1x1x128xf32> to vector<1x128xf32>
    %196 = vector.broadcast %195 : vector<1x128xf32> to vector<32x128xf32>
    %197 = arith.addf %193, %196 : vector<32x128xf32>
    %198 = arith.addf %59, %197 : vector<32x128xf32>
    %199 = vector.extract_strided_slice %6 {offsets = [2, 0], sizes = [1, 128], strides = [1, 1]} : vector<5x128xf32> to vector<1x128xf32>
    %200 = vector.extract_strided_slice %8 {offsets = [2, 0], sizes = [1, 128], strides = [1, 1]} : vector<5x128xf32> to vector<1x128xf32>
    %cst_72 = arith.constant dense<0.000000e+00> : vector<32xf32>
    %201 = vector.multi_reduction <add>, %198, %cst_72 [1] : vector<32x128xf32> to vector<32xf32>
    %202 = vector.shape_cast %201 : vector<32xf32> to vector<32x1xf32>
    %cst_73 = arith.constant 1.280000e+02 : f32
    %203 = vector.broadcast %cst_73 : f32 to vector<32x1xf32>
    %204 = arith.divf %202, %203 : vector<32x1xf32>
    %205 = vector.broadcast %204 : vector<32x1xf32> to vector<32x128xf32>
    %206 = arith.subf %198, %205 : vector<32x128xf32>
    %207 = arith.mulf %206, %206 : vector<32x128xf32>
    %cst_74 = arith.constant dense<0.000000e+00> : vector<32xf32>
    %208 = vector.multi_reduction <add>, %207, %cst_74 [1] : vector<32x128xf32> to vector<32xf32>
    %209 = vector.shape_cast %208 : vector<32xf32> to vector<32x1xf32>
    %cst_75 = arith.constant 1.280000e+02 : f32
    %210 = vector.broadcast %cst_75 : f32 to vector<32x1xf32>
    %211 = arith.divf %209, %210 : vector<32x1xf32>
    %cst_76 = arith.constant 9.99999974E-6 : f32
    %212 = vector.broadcast %cst_76 : f32 to vector<32x1xf32>
    %213 = arith.addf %211, %212 : vector<32x1xf32>
    %214 = math.rsqrt %213 : vector<32x1xf32>
    %215 = vector.broadcast %214 : vector<32x1xf32> to vector<32x128xf32>
    %216 = arith.mulf %206, %215 : vector<32x128xf32>
    %217 = vector.broadcast %199 : vector<1x128xf32> to vector<32x128xf32>
    %218 = arith.mulf %216, %217 : vector<32x128xf32>
    %219 = vector.broadcast %200 : vector<1x128xf32> to vector<32x128xf32>
    %220 = arith.addf %218, %219 : vector<32x128xf32>
    %c0_77 = arith.constant 0 : index
    %c0_78 = arith.constant 0 : index
    %c0_79 = arith.constant 0 : index
    %221 = vector.load %arg12[%c0_77, %c0_78, %c0_79] : memref<1x128x256xbf16, #tpu.memory_space<vmem>>, vector<1x128x256xbf16>
    %222 = vector.shape_cast %221 : vector<1x128x256xbf16> to vector<128x256xbf16>
    %223 = arith.truncf %220 : vector<32x128xf32> to vector<32x128xbf16>
    %cst_80 = arith.constant dense<0.000000e+00> : vector<32x256xf32>
    %224 = tpu.matmul %223, %222, %cst_80 {dimension_numbers = #tpu.dot_dimension_numbers<[1], [0], [0], [1], [0, 0, 1, 1], [], []>} : vector<32x128xbf16>, vector<128x256xbf16>, vector<32x256xf32> -> vector<32x256xf32>
    %c0_81 = arith.constant 0 : index
    %c0_82 = arith.constant 0 : index
    %c0_83 = arith.constant 0 : index
    %225 = vector.load %arg13[%c0_81, %c0_82, %c0_83] : memref<1x1x256xf32, #tpu.memory_space<vmem>>, vector<1x1x256xf32>
    %226 = vector.shape_cast %225 : vector<1x1x256xf32> to vector<1x256xf32>
    %227 = vector.broadcast %226 : vector<1x256xf32> to vector<32x256xf32>
    %228 = arith.addf %224, %227 : vector<32x256xf32>
    %229 = vector.extract_strided_slice %228 {offsets = [0, 0], sizes = [32, 128], strides = [1, 1]} : vector<32x256xf32> to vector<32x128xf32>
    %230 = vector.extract_strided_slice %228 {offsets = [0, 128], sizes = [32, 128], strides = [1, 1]} : vector<32x256xf32> to vector<32x128xf32>
    %cst_84 = arith.constant 0.000000e+00 : f32
    %231 = vector.broadcast %cst_84 : f32 to vector<32x128xf32>
    %232 = arith.subf %231, %230 : vector<32x128xf32>
    %233 = math.exp %232 : vector<32x128xf32>
    %cst_85 = arith.constant 1.000000e+00 : f32
    %234 = vector.broadcast %cst_85 : f32 to vector<32x128xf32>
    %235 = arith.addf %234, %233 : vector<32x128xf32>
    %cst_86 = arith.constant 1.000000e+00 : f32
    %236 = vector.broadcast %cst_86 : f32 to vector<32x128xf32>
    %237 = arith.divf %236, %235 : vector<32x128xf32>
    %238 = arith.mulf %229, %237 : vector<32x128xf32>
    %239 = vector.shape_cast %238 : vector<32x128xf32> to vector<2x16x128xf32>
    %cst_87 = arith.constant 0.000000e+00 : f32
    %240 = vector.broadcast %cst_87 : f32 to vector<2x2x128xf32>
    %241 = tpu.concatenate %240, %239, %240 in 1 : vector<2x2x128xf32>, vector<2x16x128xf32>, vector<2x2x128xf32> -> vector<2x20x128xf32>
    %c0_88 = arith.constant 0 : index
    %c0_89 = arith.constant 0 : index
    %c0_90 = arith.constant 0 : index
    %242 = vector.load %arg14[%c0_88, %c0_89, %c0_90] : memref<1x5x128xf32, #tpu.memory_space<vmem>>, vector<1x5x128xf32>
    %243 = vector.shape_cast %242 : vector<1x5x128xf32> to vector<5x128xf32>
    %cst_91 = arith.constant 0.000000e+00 : f32
    %244 = vector.broadcast %cst_91 : f32 to vector<2x16x128xf32>
    %245 = vector.extract_strided_slice %241 {offsets = [0, 0, 0], sizes = [2, 16, 128], strides = [1, 1, 1]} : vector<2x20x128xf32> to vector<2x16x128xf32>
    %246 = vector.extract_strided_slice %243 {offsets = [0, 0], sizes = [1, 128], strides = [1, 1]} : vector<5x128xf32> to vector<1x128xf32>
    %247 = vector.shape_cast %246 : vector<1x128xf32> to vector<1x1x128xf32>
    %248 = vector.broadcast %247 : vector<1x1x128xf32> to vector<2x16x128xf32>
    %249 = arith.mulf %245, %248 : vector<2x16x128xf32>
    %250 = arith.addf %244, %249 : vector<2x16x128xf32>
    %251 = vector.extract_strided_slice %241 {offsets = [0, 1, 0], sizes = [2, 16, 128], strides = [1, 1, 1]} : vector<2x20x128xf32> to vector<2x16x128xf32>
    %252 = vector.extract_strided_slice %243 {offsets = [1, 0], sizes = [1, 128], strides = [1, 1]} : vector<5x128xf32> to vector<1x128xf32>
    %253 = vector.shape_cast %252 : vector<1x128xf32> to vector<1x1x128xf32>
    %254 = vector.broadcast %253 : vector<1x1x128xf32> to vector<2x16x128xf32>
    %255 = arith.mulf %251, %254 : vector<2x16x128xf32>
    %256 = arith.addf %250, %255 : vector<2x16x128xf32>
    %257 = vector.extract_strided_slice %241 {offsets = [0, 2, 0], sizes = [2, 16, 128], strides = [1, 1, 1]} : vector<2x20x128xf32> to vector<2x16x128xf32>
    %258 = vector.extract_strided_slice %243 {offsets = [2, 0], sizes = [1, 128], strides = [1, 1]} : vector<5x128xf32> to vector<1x128xf32>
    %259 = vector.shape_cast %258 : vector<1x128xf32> to vector<1x1x128xf32>
    %260 = vector.broadcast %259 : vector<1x1x128xf32> to vector<2x16x128xf32>
    %261 = arith.mulf %257, %260 : vector<2x16x128xf32>
    %262 = arith.addf %256, %261 : vector<2x16x128xf32>
    %263 = vector.extract_strided_slice %241 {offsets = [0, 3, 0], sizes = [2, 16, 128], strides = [1, 1, 1]} : vector<2x20x128xf32> to vector<2x16x128xf32>
    %264 = vector.extract_strided_slice %243 {offsets = [3, 0], sizes = [1, 128], strides = [1, 1]} : vector<5x128xf32> to vector<1x128xf32>
    %265 = vector.shape_cast %264 : vector<1x128xf32> to vector<1x1x128xf32>
    %266 = vector.broadcast %265 : vector<1x1x128xf32> to vector<2x16x128xf32>
    %267 = arith.mulf %263, %266 : vector<2x16x128xf32>
    %268 = arith.addf %262, %267 : vector<2x16x128xf32>
    %269 = vector.extract_strided_slice %241 {offsets = [0, 4, 0], sizes = [2, 16, 128], strides = [1, 1, 1]} : vector<2x20x128xf32> to vector<2x16x128xf32>
    %270 = vector.extract_strided_slice %243 {offsets = [4, 0], sizes = [1, 128], strides = [1, 1]} : vector<5x128xf32> to vector<1x128xf32>
    %271 = vector.shape_cast %270 : vector<1x128xf32> to vector<1x1x128xf32>
    %272 = vector.broadcast %271 : vector<1x1x128xf32> to vector<2x16x128xf32>
    %273 = arith.mulf %269, %272 : vector<2x16x128xf32>
    %274 = arith.addf %268, %273 : vector<2x16x128xf32>
    %c0_92 = arith.constant 0 : index
    %c0_93 = arith.constant 0 : index
    %c0_94 = arith.constant 0 : index
    %275 = vector.load %arg15[%c0_92, %c0_93, %c0_94] : memref<1x1x128xf32, #tpu.memory_space<vmem>>, vector<1x1x128xf32>
    %276 = vector.shape_cast %275 : vector<1x1x128xf32> to vector<1x128xf32>
    %277 = vector.shape_cast %276 : vector<1x128xf32> to vector<1x1x128xf32>
    %278 = vector.broadcast %277 : vector<1x1x128xf32> to vector<2x16x128xf32>
    %279 = arith.addf %274, %278 : vector<2x16x128xf32>
    %c0_95 = arith.constant 0 : index
    %c0_96 = arith.constant 0 : index
    %c0_97 = arith.constant 0 : index
    %280 = vector.load %arg16[%c0_95, %c0_96, %c0_97] : memref<1x4x128xf32, #tpu.memory_space<vmem>>, vector<1x4x128xf32>
    %281 = vector.shape_cast %280 : vector<1x4x128xf32> to vector<4x128xf32>
    %282 = vector.extract_strided_slice %281 {offsets = [2, 0], sizes = [1, 128], strides = [1, 1]} : vector<4x128xf32> to vector<1x128xf32>
    %283 = vector.shape_cast %282 : vector<1x128xf32> to vector<1x1x128xf32>
    %284 = vector.broadcast %283 : vector<1x1x128xf32> to vector<2x16x128xf32>
    %285 = arith.subf %279, %284 : vector<2x16x128xf32>
    %286 = vector.extract_strided_slice %281 {offsets = [3, 0], sizes = [1, 128], strides = [1, 1]} : vector<4x128xf32> to vector<1x128xf32>
    %287 = vector.shape_cast %286 : vector<1x128xf32> to vector<1x1x128xf32>
    %cst_98 = arith.constant 9.99999974E-6 : f32
    %288 = vector.broadcast %cst_98 : f32 to vector<1x1x128xf32>
    %289 = arith.addf %287, %288 : vector<1x1x128xf32>
    %290 = math.rsqrt %289 : vector<1x1x128xf32>
    %291 = vector.broadcast %290 : vector<1x1x128xf32> to vector<2x16x128xf32>
    %292 = arith.mulf %285, %291 : vector<2x16x128xf32>
    %293 = vector.extract_strided_slice %281 {offsets = [0, 0], sizes = [1, 128], strides = [1, 1]} : vector<4x128xf32> to vector<1x128xf32>
    %294 = vector.shape_cast %293 : vector<1x128xf32> to vector<1x1x128xf32>
    %295 = vector.broadcast %294 : vector<1x1x128xf32> to vector<2x16x128xf32>
    %296 = arith.mulf %292, %295 : vector<2x16x128xf32>
    %297 = vector.extract_strided_slice %281 {offsets = [1, 0], sizes = [1, 128], strides = [1, 1]} : vector<4x128xf32> to vector<1x128xf32>
    %298 = vector.shape_cast %297 : vector<1x128xf32> to vector<1x1x128xf32>
    %299 = vector.broadcast %298 : vector<1x1x128xf32> to vector<2x16x128xf32>
    %300 = arith.addf %296, %299 : vector<2x16x128xf32>
    %cst_99 = arith.constant 0.000000e+00 : f32
    %301 = vector.broadcast %cst_99 : f32 to vector<2x16x128xf32>
    %302 = arith.subf %301, %300 : vector<2x16x128xf32>
    %303 = math.exp %302 : vector<2x16x128xf32>
    %cst_100 = arith.constant 1.000000e+00 : f32
    %304 = vector.broadcast %cst_100 : f32 to vector<2x16x128xf32>
    %305 = arith.addf %304, %303 : vector<2x16x128xf32>
    %cst_101 = arith.constant 1.000000e+00 : f32
    %306 = vector.broadcast %cst_101 : f32 to vector<2x16x128xf32>
    %307 = arith.divf %306, %305 : vector<2x16x128xf32>
    %308 = arith.mulf %300, %307 : vector<2x16x128xf32>
    %309 = vector.shape_cast %308 : vector<2x16x128xf32> to vector<32x128xf32>
    %c0_102 = arith.constant 0 : index
    %c0_103 = arith.constant 0 : index
    %c0_104 = arith.constant 0 : index
    %310 = vector.load %arg17[%c0_102, %c0_103, %c0_104] : memref<1x128x128xbf16, #tpu.memory_space<vmem>>, vector<1x128x128xbf16>
    %311 = vector.shape_cast %310 : vector<1x128x128xbf16> to vector<128x128xbf16>
    %312 = arith.truncf %309 : vector<32x128xf32> to vector<32x128xbf16>
    %cst_105 = arith.constant dense<0.000000e+00> : vector<32x128xf32>
    %313 = tpu.matmul %312, %311, %cst_105 {dimension_numbers = #tpu.dot_dimension_numbers<[1], [0], [0], [1], [0, 0, 1, 1], [], []>} : vector<32x128xbf16>, vector<128x128xbf16>, vector<32x128xf32> -> vector<32x128xf32>
    %c0_106 = arith.constant 0 : index
    %c0_107 = arith.constant 0 : index
    %c0_108 = arith.constant 0 : index
    %314 = vector.load %arg18[%c0_106, %c0_107, %c0_108] : memref<1x1x128xf32, #tpu.memory_space<vmem>>, vector<1x1x128xf32>
    %315 = vector.shape_cast %314 : vector<1x1x128xf32> to vector<1x128xf32>
    %316 = vector.broadcast %315 : vector<1x128xf32> to vector<32x128xf32>
    %317 = arith.addf %313, %316 : vector<32x128xf32>
    %318 = arith.addf %198, %317 : vector<32x128xf32>
    %319 = vector.extract_strided_slice %6 {offsets = [3, 0], sizes = [1, 128], strides = [1, 1]} : vector<5x128xf32> to vector<1x128xf32>
    %320 = vector.extract_strided_slice %8 {offsets = [3, 0], sizes = [1, 128], strides = [1, 1]} : vector<5x128xf32> to vector<1x128xf32>
    %cst_109 = arith.constant dense<0.000000e+00> : vector<32xf32>
    %321 = vector.multi_reduction <add>, %318, %cst_109 [1] : vector<32x128xf32> to vector<32xf32>
    %322 = vector.shape_cast %321 : vector<32xf32> to vector<32x1xf32>
    %cst_110 = arith.constant 1.280000e+02 : f32
    %323 = vector.broadcast %cst_110 : f32 to vector<32x1xf32>
    %324 = arith.divf %322, %323 : vector<32x1xf32>
    %325 = vector.broadcast %324 : vector<32x1xf32> to vector<32x128xf32>
    %326 = arith.subf %318, %325 : vector<32x128xf32>
    %327 = arith.mulf %326, %326 : vector<32x128xf32>
    %cst_111 = arith.constant dense<0.000000e+00> : vector<32xf32>
    %328 = vector.multi_reduction <add>, %327, %cst_111 [1] : vector<32x128xf32> to vector<32xf32>
    %329 = vector.shape_cast %328 : vector<32xf32> to vector<32x1xf32>
    %cst_112 = arith.constant 1.280000e+02 : f32
    %330 = vector.broadcast %cst_112 : f32 to vector<32x1xf32>
    %331 = arith.divf %329, %330 : vector<32x1xf32>
    %cst_113 = arith.constant 9.99999974E-6 : f32
    %332 = vector.broadcast %cst_113 : f32 to vector<32x1xf32>
    %333 = arith.addf %331, %332 : vector<32x1xf32>
    %334 = math.rsqrt %333 : vector<32x1xf32>
    %335 = vector.broadcast %334 : vector<32x1xf32> to vector<32x128xf32>
    %336 = arith.mulf %326, %335 : vector<32x128xf32>
    %337 = vector.broadcast %319 : vector<1x128xf32> to vector<32x128xf32>
    %338 = arith.mulf %336, %337 : vector<32x128xf32>
    %339 = vector.broadcast %320 : vector<1x128xf32> to vector<32x128xf32>
    %340 = arith.addf %338, %339 : vector<32x128xf32>
    %c0_114 = arith.constant 0 : index
    %c1 = arith.constant 1 : index
    %c0_115 = arith.constant 0 : index
    %c0_116 = arith.constant 0 : index
    %341 = vector.load %arg4[%c0_114, %c1, %c0_115, %c0_116] : memref<1x2x128x256xbf16, #tpu.memory_space<vmem>>, vector<1x1x128x256xbf16>
    %342 = vector.shape_cast %341 : vector<1x1x128x256xbf16> to vector<128x256xbf16>
    %343 = arith.truncf %340 : vector<32x128xf32> to vector<32x128xbf16>
    %cst_117 = arith.constant dense<0.000000e+00> : vector<32x256xf32>
    %344 = tpu.matmul %343, %342, %cst_117 {dimension_numbers = #tpu.dot_dimension_numbers<[1], [0], [0], [1], [0, 0, 1, 1], [], []>} : vector<32x128xbf16>, vector<128x256xbf16>, vector<32x256xf32> -> vector<32x256xf32>
    %345 = vector.extract_strided_slice %10 {offsets = [1, 0], sizes = [1, 256], strides = [1, 1]} : vector<2x256xf32> to vector<1x256xf32>
    %346 = vector.broadcast %345 : vector<1x256xf32> to vector<32x256xf32>
    %347 = arith.addf %344, %346 : vector<32x256xf32>
    %cst_118 = arith.constant 0.000000e+00 : f32
    %348 = vector.broadcast %cst_118 : f32 to vector<32x256xf32>
    %349 = arith.subf %348, %347 : vector<32x256xf32>
    %350 = math.exp %349 : vector<32x256xf32>
    %cst_119 = arith.constant 1.000000e+00 : f32
    %351 = vector.broadcast %cst_119 : f32 to vector<32x256xf32>
    %352 = arith.addf %351, %350 : vector<32x256xf32>
    %cst_120 = arith.constant 1.000000e+00 : f32
    %353 = vector.broadcast %cst_120 : f32 to vector<32x256xf32>
    %354 = arith.divf %353, %352 : vector<32x256xf32>
    %355 = arith.mulf %347, %354 : vector<32x256xf32>
    %c0_121 = arith.constant 0 : index
    %c1_122 = arith.constant 1 : index
    %c0_123 = arith.constant 0 : index
    %c0_124 = arith.constant 0 : index
    %356 = vector.load %arg6[%c0_121, %c1_122, %c0_123, %c0_124] : memref<1x2x256x128xbf16, #tpu.memory_space<vmem>>, vector<1x1x256x128xbf16>
    %357 = vector.shape_cast %356 : vector<1x1x256x128xbf16> to vector<256x128xbf16>
    %358 = arith.truncf %355 : vector<32x256xf32> to vector<32x256xbf16>
    %cst_125 = arith.constant dense<0.000000e+00> : vector<32x128xf32>
    %359 = tpu.matmul %358, %357, %cst_125 {dimension_numbers = #tpu.dot_dimension_numbers<[1], [0], [0], [1], [0, 0, 1, 1], [], []>} : vector<32x256xbf16>, vector<256x128xbf16>, vector<32x128xf32> -> vector<32x128xf32>
    %360 = vector.extract_strided_slice %12 {offsets = [1, 0], sizes = [1, 128], strides = [1, 1]} : vector<2x128xf32> to vector<1x128xf32>
    %361 = vector.broadcast %360 : vector<1x128xf32> to vector<32x128xf32>
    %362 = arith.addf %359, %361 : vector<32x128xf32>
    %cst_126 = arith.constant 5.000000e-01 : f32
    %363 = vector.broadcast %cst_126 : f32 to vector<32x128xf32>
    %364 = arith.mulf %363, %362 : vector<32x128xf32>
    %365 = arith.addf %318, %364 : vector<32x128xf32>
    %366 = vector.extract_strided_slice %6 {offsets = [4, 0], sizes = [1, 128], strides = [1, 1]} : vector<5x128xf32> to vector<1x128xf32>
    %367 = vector.extract_strided_slice %8 {offsets = [4, 0], sizes = [1, 128], strides = [1, 1]} : vector<5x128xf32> to vector<1x128xf32>
    %cst_127 = arith.constant dense<0.000000e+00> : vector<32xf32>
    %368 = vector.multi_reduction <add>, %365, %cst_127 [1] : vector<32x128xf32> to vector<32xf32>
    %369 = vector.shape_cast %368 : vector<32xf32> to vector<32x1xf32>
    %cst_128 = arith.constant 1.280000e+02 : f32
    %370 = vector.broadcast %cst_128 : f32 to vector<32x1xf32>
    %371 = arith.divf %369, %370 : vector<32x1xf32>
    %372 = vector.broadcast %371 : vector<32x1xf32> to vector<32x128xf32>
    %373 = arith.subf %365, %372 : vector<32x128xf32>
    %374 = arith.mulf %373, %373 : vector<32x128xf32>
    %cst_129 = arith.constant dense<0.000000e+00> : vector<32xf32>
    %375 = vector.multi_reduction <add>, %374, %cst_129 [1] : vector<32x128xf32> to vector<32xf32>
    %376 = vector.shape_cast %375 : vector<32xf32> to vector<32x1xf32>
    %cst_130 = arith.constant 1.280000e+02 : f32
    %377 = vector.broadcast %cst_130 : f32 to vector<32x1xf32>
    %378 = arith.divf %376, %377 : vector<32x1xf32>
    %cst_131 = arith.constant 9.99999974E-6 : f32
    %379 = vector.broadcast %cst_131 : f32 to vector<32x1xf32>
    %380 = arith.addf %378, %379 : vector<32x1xf32>
    %381 = math.rsqrt %380 : vector<32x1xf32>
    %382 = vector.broadcast %381 : vector<32x1xf32> to vector<32x128xf32>
    %383 = arith.mulf %373, %382 : vector<32x128xf32>
    %384 = vector.broadcast %366 : vector<1x128xf32> to vector<32x128xf32>
    %385 = arith.mulf %383, %384 : vector<32x128xf32>
    %386 = vector.broadcast %367 : vector<1x128xf32> to vector<32x128xf32>
    %387 = arith.addf %385, %386 : vector<32x128xf32>
    %388 = vector.shape_cast %387 : vector<32x128xf32> to vector<2x16x128xf32>
    %c0_132 = arith.constant 0 : index
    %c0_133 = arith.constant 0 : index
    %c0_134 = arith.constant 0 : index
    %389 = vector.load %arg22[%c0_132, %c0_133, %c0_134] : memref<2x16x128xf32, #tpu.memory_space<vmem>>, vector<2x16x128xf32>
    tpu.vector_store %arg22[%c0_132, %c0_133, %c0_134], %388 {strides = array<i32>} : memref<2x16x128xf32, #tpu.memory_space<vmem>>, vector<2x16x128xf32>,
    %c3_i32 = arith.constant 3 : i32
    %390 = arith.cmpi eq, %arg0, %c3_i32 : i32
    %391 = arith.extui %390 : i1 to i32
    %c0_i32_135 = arith.constant 0 : i32
    %392 = arith.cmpi ne, %391, %c0_i32_135 : i32
    scf.if %392 {
      %393 = vector.shape_cast %387 : vector<32x128xf32> to vector<2x16x128xf32>
      %c0_136 = arith.constant 0 : index
      %c0_137 = arith.constant 0 : index
      %394 = vector.load %arg19[%c0_136, %c0_137] : memref<16x128xf32, #tpu.memory_space<vmem>>, vector<16x128xf32>
      %395 = vector.shape_cast %394 : vector<16x128xf32> to vector<1x16x128xf32>
      %396 = vector.broadcast %395 : vector<1x16x128xf32> to vector<2x16x128xf32>
      %397 = arith.mulf %393, %396 : vector<2x16x128xf32>
      %cst_138 = arith.constant dense<0.000000e+00> : vector<2x16xf32>
      %398 = vector.multi_reduction <add>, %397, %cst_138 [2] : vector<2x16x128xf32> to vector<2x16xf32>
      %cst_139 = arith.constant dense<0.000000e+00> : vector<2xf32>
      %399 = vector.multi_reduction <add>, %398, %cst_139 [1] : vector<2x16xf32> to vector<2xf32>
      %400 = vector.shape_cast %399 : vector<2xf32> to vector<2x1xf32>
      %c0_140 = arith.constant 0 : index
      %c0_141 = arith.constant 0 : index
      %401 = vector.load %arg20[%c0_140, %c0_141] : memref<1x1xf32, #tpu.memory_space<vmem>>, vector<1x1xf32>
      %402 = vector.broadcast %401 : vector<1x1xf32> to vector<2x1xf32>
      %403 = arith.addf %400, %402 : vector<2x1xf32>
      %c0_142 = arith.constant 0 : index
      %c0_143 = arith.constant 0 : index
      %404 = vector.load %arg21[%c0_142, %c0_143] : memref<2x1xf32, #tpu.memory_space<vmem>>, vector<2x1xf32>
      tpu.vector_store %arg21[%c0_142, %c0_143], %403 {strides = array<i32>} : memref<2x1xf32, #tpu.memory_space<vmem>>, vector<2x1xf32>,
    } else {
    }
    return
  }
  func.func @transform_0(%arg0: i32) -> (i32, i32, i32) {
    %c0_i32 = arith.constant 0 : i32
    %c0_i32_0 = arith.constant 0 : i32
    %c0_i32_1 = arith.constant 0 : i32
    %c0_i32_2 = arith.constant 0 : i32
    return %c0_i32, %c0_i32_0, %c0_i32_1 : i32, i32, i32
  }
  func.func @transform_1(%arg0: i32) -> (i32, i32, i32) {
    %c0_i32 = arith.constant 0 : i32
    %c0_i32_0 = arith.constant 0 : i32
    %c0_i32_1 = arith.constant 0 : i32
    return %arg0, %c0_i32, %c0_i32_0 : i32, i32, i32
  }
  func.func @transform_2(%arg0: i32) -> (i32, i32, i32) {
    %c0_i32 = arith.constant 0 : i32
    %c0_i32_0 = arith.constant 0 : i32
    %c0_i32_1 = arith.constant 0 : i32
    return %arg0, %c0_i32, %c0_i32_0 : i32, i32, i32
  }
  func.func @transform_3(%arg0: i32) -> (i32, i32, i32, i32) {
    %c0_i32 = arith.constant 0 : i32
    %c0_i32_0 = arith.constant 0 : i32
    %c0_i32_1 = arith.constant 0 : i32
    %c0_i32_2 = arith.constant 0 : i32
    return %arg0, %c0_i32, %c0_i32_0, %c0_i32_1 : i32, i32, i32, i32
  }
  func.func @transform_4(%arg0: i32) -> (i32, i32, i32) {
    %c0_i32 = arith.constant 0 : i32
    %c0_i32_0 = arith.constant 0 : i32
    %c0_i32_1 = arith.constant 0 : i32
    return %arg0, %c0_i32, %c0_i32_0 : i32, i32, i32
  }
  func.func @transform_5(%arg0: i32) -> (i32, i32, i32, i32) {
    %c0_i32 = arith.constant 0 : i32
    %c0_i32_0 = arith.constant 0 : i32
    %c0_i32_1 = arith.constant 0 : i32
    %c0_i32_2 = arith.constant 0 : i32
    return %arg0, %c0_i32, %c0_i32_0, %c0_i32_1 : i32, i32, i32, i32
  }
  func.func @transform_6(%arg0: i32) -> (i32, i32, i32) {
    %c0_i32 = arith.constant 0 : i32
    %c0_i32_0 = arith.constant 0 : i32
    %c0_i32_1 = arith.constant 0 : i32
    return %arg0, %c0_i32, %c0_i32_0 : i32, i32, i32
  }
  func.func @transform_7(%arg0: i32) -> (i32, i32, i32) {
    %c0_i32 = arith.constant 0 : i32
    %c0_i32_0 = arith.constant 0 : i32
    %c0_i32_1 = arith.constant 0 : i32
    return %arg0, %c0_i32, %c0_i32_0 : i32, i32, i32
  }
  func.func @transform_8(%arg0: i32) -> (i32, i32, i32) {
    %c0_i32 = arith.constant 0 : i32
    %c0_i32_0 = arith.constant 0 : i32
    %c0_i32_1 = arith.constant 0 : i32
    return %arg0, %c0_i32, %c0_i32_0 : i32, i32, i32
  }
  func.func @transform_9(%arg0: i32) -> (i32, i32, i32) {
    %c0_i32 = arith.constant 0 : i32
    %c0_i32_0 = arith.constant 0 : i32
    %c0_i32_1 = arith.constant 0 : i32
    return %arg0, %c0_i32, %c0_i32_0 : i32, i32, i32
  }
  func.func @transform_10(%arg0: i32) -> (i32, i32, i32) {
    %c0_i32 = arith.constant 0 : i32
    %c0_i32_0 = arith.constant 0 : i32
    %c0_i32_1 = arith.constant 0 : i32
    return %arg0, %c0_i32, %c0_i32_0 : i32, i32, i32
  }
  func.func @transform_11(%arg0: i32) -> (i32, i32, i32) {
    %c0_i32 = arith.constant 0 : i32
    %c0_i32_0 = arith.constant 0 : i32
    %c0_i32_1 = arith.constant 0 : i32
    return %arg0, %c0_i32, %c0_i32_0 : i32, i32, i32
  }
  func.func @transform_12(%arg0: i32) -> (i32, i32, i32) {
    %c0_i32 = arith.constant 0 : i32
    %c0_i32_0 = arith.constant 0 : i32
    %c0_i32_1 = arith.constant 0 : i32
    return %arg0, %c0_i32, %c0_i32_0 : i32, i32, i32
  }
  func.func @transform_13(%arg0: i32) -> (i32, i32, i32) {
    %c0_i32 = arith.constant 0 : i32
    %c0_i32_0 = arith.constant 0 : i32
    %c0_i32_1 = arith.constant 0 : i32
    return %arg0, %c0_i32, %c0_i32_0 : i32, i32, i32
  }
  func.func @transform_14(%arg0: i32) -> (i32, i32, i32) {
    %c0_i32 = arith.constant 0 : i32
    %c0_i32_0 = arith.constant 0 : i32
    %c0_i32_1 = arith.constant 0 : i32
    return %arg0, %c0_i32, %c0_i32_0 : i32, i32, i32
  }
  func.func @transform_15(%arg0: i32) -> (i32, i32, i32) {
    %c0_i32 = arith.constant 0 : i32
    %c0_i32_0 = arith.constant 0 : i32
    %c0_i32_1 = arith.constant 0 : i32
    return %arg0, %c0_i32, %c0_i32_0 : i32, i32, i32
  }
  func.func @transform_16(%arg0: i32) -> (i32, i32, i32) {
    %c0_i32 = arith.constant 0 : i32
    %c0_i32_0 = arith.constant 0 : i32
    %c0_i32_1 = arith.constant 0 : i32
    return %arg0, %c0_i32, %c0_i32_0 : i32, i32, i32
  }
  func.func @transform_17(%arg0: i32) -> (i32, i32, i32) {
    %c0_i32 = arith.constant 0 : i32
    %c0_i32_0 = arith.constant 0 : i32
    %c0_i32_1 = arith.constant 0 : i32
    return %arg0, %c0_i32, %c0_i32_0 : i32, i32, i32
  }
  func.func @transform_18(%arg0: i32) -> (i32, i32) {
    %c0_i32 = arith.constant 0 : i32
    %c0_i32_0 = arith.constant 0 : i32
    %c0_i32_1 = arith.constant 0 : i32
    return %c0_i32, %c0_i32_0 : i32, i32
  }
  func.func @transform_19(%arg0: i32) -> (i32, i32) {
    %c0_i32 = arith.constant 0 : i32
    %c0_i32_0 = arith.constant 0 : i32
    %c0_i32_1 = arith.constant 0 : i32
    return %c0_i32, %c0_i32_0 : i32, i32
  }
  func.func @transform_20(%arg0: i32) -> (i32, i32) {
    %c0_i32 = arith.constant 0 : i32
    %c0_i32_0 = arith.constant 0 : i32
    %c0_i32_1 = arith.constant 0 : i32
    return %c0_i32, %c0_i32_0 : i32, i32
  }
}

</mosaic_0001>

<llo_original>
// kernel: forward.1
$region0: #{forward.1}
  #allocation0 [shape = 'u32[]', space=smem, size = 0x4, offset = 0x4, fixed_abs, tag = 'smem constant byte address 0x4 - core index']
  #allocation1 [shape = 'u32[144,128]{1,0:T(1,128)}', space=vmem, size = 0x12000, scoped, tag = 'internal scratch']
  #allocation2 [shape = 'f32[2,16,128]{2,1,0:T(8,128)}', space=vmem, size = 0x4000, scoped, tag = 'scratch operand']
  #allocation3 [shape = 'f32[1,1]{1,0:T(1,128)S(1)}', space=vmem, size = 0x200, scoped, tag = 'scoped memory for forward.1']
  %s0 = inlined_call_operand.vmem [shape: f32[2,16,128], index: 0, kind: input, shape index: {}]
  %s1 = inlined_call_operand.vmem [shape: f32[4,5,128], index: 1, kind: input, shape index: {}]
  %s2 = inlined_call_operand.vmem [shape: f32[4,5,128], index: 2, kind: input, shape index: {}]
  %s3 = inlined_call_operand.hbm [shape: bf16[4,2,128,256], index: 3, kind: input, shape index: {}]
  %s4 = inlined_call_operand.vmem [shape: f32[4,2,256], index: 4, kind: input, shape index: {}]
  %s5 = inlined_call_operand.hbm [shape: bf16[4,2,256,128], index: 5, kind: input, shape index: {}]
  %s6 = inlined_call_operand.vmem [shape: f32[4,2,128], index: 6, kind: input, shape index: {}]
  %s7 = inlined_call_operand.hbm [shape: bf16[4,128,384], index: 7, kind: input, shape index: {}]
  %s8 = inlined_call_operand.vmem [shape: f32[4,1,384], index: 8, kind: input, shape index: {}]
  %s9 = inlined_call_operand.hbm [shape: bf16[4,128,128], index: 9, kind: input, shape index: {}]
  %s10 = inlined_call_operand.vmem [shape: f32[4,1,128], index: 10, kind: input, shape index: {}]
  %s11 = inlined_call_operand.hbm [shape: bf16[4,128,256], index: 11, kind: input, shape index: {}]
  %s12 = inlined_call_operand.vmem [shape: f32[4,1,256], index: 12, kind: input, shape index: {}]
  %s13 = inlined_call_operand.vmem [shape: f32[4,5,128], index: 13, kind: input, shape index: {}]
  %s14 = inlined_call_operand.vmem [shape: f32[4,1,128], index: 14, kind: input, shape index: {}]
  %s15 = inlined_call_operand.vmem [shape: f32[4,4,128], index: 15, kind: input, shape index: {}]
  %s16 = inlined_call_operand.hbm [shape: bf16[4,128,128], index: 16, kind: input, shape index: {}]
  %s17 = inlined_call_operand.vmem [shape: f32[4,1,128], index: 17, kind: input, shape index: {}]
  %s18 = inlined_call_operand.vmem [shape: f32[16,128], index: 18, kind: input, shape index: {}]
  %s19 = inlined_call_operand.<no memory space> [shape: f32[1,1], index: 19, kind: input, shape index: {}]
  %s20 = inlined_call_operand.vmem [shape: f32[2,1], index: 20, kind: output, shape index: {}]
  %s21 = sld [smem:[#allocation0]]
  $region145: #{forward.1} parent=0
    _
  %s23 = ssub.s32 1, %s21
  %s24 = scalar_select 0, %s23, %s21
  %v25 = vstv %s19
  %26 = vst [vmem:[#allocation3] sm:$0x1] %v25
  $region1: #{forward.1} parent=0
    #allocation4 [shape = 'u8[262144]{0}', space=vmem, size = 0x40000, scoped, tag = 'input window, operand 3']
    #allocation5 [shape = 's32[2]{0}', space=sflag, size = 0x8, scoped, tag = 'scoped memory for forward.1']
    #allocation6 [shape = 'u8[262144]{0}', space=vmem, size = 0x40000, scoped, tag = 'input window, operand 5']
    #allocation7 [shape = 's32[2]{0}', space=sflag, size = 0x8, scoped, tag = 'scoped memory for forward.1']
    #allocation8 [shape = 'u8[196608]{0}', space=vmem, size = 0x30000, scoped, tag = 'input window, operand 7']
    #allocation9 [shape = 'u8[65536]{0}', space=vmem, size = 0x10000, scoped, tag = 'input window, operand 9']
    #allocation10 [shape = 's32[2]{0}', space=sflag, size = 0x8, scoped, tag = 'scoped memory for forward.1']
    #allocation11 [shape = 'u8[131072]{0}', space=vmem, size = 0x20000, scoped, tag = 'input window, operand 11']
    #allocation12 [shape = 'u8[65536]{0}', space=vmem, size = 0x10000, scoped, tag = 'input window, operand 16']
    #allocation13 [shape = 's32[2]{0}', space=sflag, size = 0x8, scoped, tag = 'scoped memory for forward.1']
    %27 = vsyncpa [#allocation5], 0
    %s28 = scalar_lea.sflag [#allocation5], 1
    %29 = vsyncpa %s28, 0
    %30 = vsyncpa [#allocation7], 0
    %s31 = scalar_lea.sflag [#allocation7], 1
    %32 = vsyncpa %s31, 0
    %33 = vsyncpa [#allocation10], 0
    %s34 = scalar_lea.sflag [#allocation10], 1
    %35 = vsyncpa %s34, 0
    %36 = vsyncpa [#allocation13], 0
    %s37 = scalar_lea.sflag [#allocation13], 1
    %38 = vsyncpa %s37, 0
    loop: start=0, step=1, limit=6
    $region2: #{forward.1} parent=1 // loop_pre_header
      _
    $region3: #{forward.1} parent=1 // loop_header
      %s40 = sphi 0, %s44
      %p41 = scmp.ge.s32.totalorder %s40, 6
      %s48 = sphi 0, %s48
      %s50 = sphi 0, %s48
      %s51 = sphi 0, %s50
      %s65 = sphi 0, %s51
      %s71 = sphi 0, %s73
      %s74 = sphi 0, %s71
      %s75 = sphi 0, %s74
      %s91 = sphi 0, %s75
      %s97 = sphi 0, %s99
      %s100 = sphi 0, %s97
      %s101 = sphi 0, %s100
      %s117 = sphi 0, %s101
      %s123 = sphi 0, %s125
      %s126 = sphi 0, %s123
      %s127 = sphi 0, %s126
      %s143 = sphi 0, %s127
      %s149 = sphi 0, %s151
      %s152 = sphi 0, %s149
      %s153 = sphi 0, %s152
      %s169 = sphi 0, %s153
      %s175 = sphi 0, %s177
      %s178 = sphi 0, %s175
      %s179 = sphi 0, %s178
      %s195 = sphi 0, %s179
      %s201 = sphi 0, %s203
      %s204 = sphi 0, %s201
      %s205 = sphi 0, %s204
      %s221 = sphi 0, %s205
      %s227 = sphi 0, %s229
      %s230 = sphi 0, %s227
      %s231 = sphi 0, %s230
      %s247 = sphi 0, %s231
      %s253 = sphi 0, %s255
      %s256 = sphi 0, %s253
      %s257 = sphi 0, %s256
      %s273 = sphi 0, %s257
      %s279 = sphi 0, %s281
      %s282 = sphi 0, %s279
      %s283 = sphi 0, %s282
      %s299 = sphi 0, %s283
      %s305 = sphi 0, %s307
      %s308 = sphi 0, %s305
      %s309 = sphi 0, %s308
      %s325 = sphi 0, %s309
      %s331 = sphi 0, %s333
      %s334 = sphi 0, %s331
      %s335 = sphi 0, %s334
      %s351 = sphi 0, %s335
      %s357 = sphi 0, %s359
      %s360 = sphi 0, %s357
      %s361 = sphi 0, %s360
      %s377 = sphi 0, %s361
      %s383 = sphi 0, %s385
      %s386 = sphi 0, %s383
      %s387 = sphi 0, %s386
      %s403 = sphi 0, %s387
      %s409 = sphi 0, %s411
      %s412 = sphi 0, %s409
      %s413 = sphi 0, %s412
      %s429 = sphi 0, %s413
      %s435 = sphi 0, %s437
      %s438 = sphi 0, %s435
      %s439 = sphi 0, %s438
      %s455 = sphi 0, %s439
      %s461 = sphi 0, %s463
      %s464 = sphi 0, %s461
      %s465 = sphi 0, %s464
      %s481 = sphi 0, %s465
      %s487 = sphi 0, %s489
      %s490 = sphi 0, %s487
      %s491 = sphi 0, %s490
      %s507 = sphi 0, %s491
      %s511 = sphi 0, %s511
      %s513 = sphi 0, %s511
      %s514 = sphi 0, %s513
      %s528 = sphi 0, %s514
      %s532 = sphi 0, %s532
      %s534 = sphi 0, %s532
      %s535 = sphi 0, %s534
      %s549 = sphi 0, %s535
      %s553 = sphi 0, %s553
      %s555 = sphi 0, %s553
      %s556 = sphi 0, %s555
      %s570 = sphi 0, %s556
    $region4: #{forward.1} parent=1 // loop_header_branch
      %43 = sbr.rel (%p41) target = $region8
    $region5: #{forward.1} parent=1 // loop_body
      %s45 = ssub.s32 %s40, 1
      %s46 = ssub.s32 %s40, 2
      %s47 = sadd.s32 %s40, 1
      %s49 = sadd.s32 %s48, 1
      %p52 = scmp.eq.s32.totalorder %s40, 3
      %p53 = scmp.ne.s32.totalorder %s48, %s50
      %p54 = scmp.eq.s32.totalorder %s40, 0
      %p55 = por %p53, %p54
      %p56 = scmp.ne.s32.totalorder %s48, %s50
      %p57 = scmp.eq.s32.totalorder %s45, 3
      %p58 = por %p56, %p57
      %p59 = scmp.ne.s32.totalorder %s50, %s51
      %p60 = scmp.eq.s32.totalorder %s45, 0
      %p61 = por %p59, %p60
      %p62 = scmp.ne.s32.totalorder %s50, %s51
      %p63 = scmp.eq.s32.totalorder %s46, 3
      %p64 = por %p62, %p63
      %p66 = scmp.ne.s32.totalorder %s51, %s65
      %p67 = scmp.eq.s32.totalorder %s46, 0
      %p68 = por %p66, %p67
      %s69 = ssub.s32 %s40, %s47
      %p70 = scmp.eq.s32.totalorder %s69, 0
      %s72 = sadd.s32 %s71, 1
      %s73 = scalar_select %p70, %s71, %s72
      %p76 = pneg %p70
      %p77 = scmp.eq.s32.totalorder %s40, 3
      %p78 = por %p76, %p77
      %p79 = scmp.ne.s32.totalorder %s71, %s74
      %p80 = scmp.eq.s32.totalorder %s40, 0
      %p81 = por %p79, %p80
      %p82 = scmp.ne.s32.totalorder %s71, %s74
      %p83 = scmp.eq.s32.totalorder %s45, 3
      %p84 = por %p82, %p83
      %p85 = scmp.ne.s32.totalorder %s74, %s75
      %p86 = scmp.eq.s32.totalorder %s45, 0
      %p87 = por %p85, %p86
      %p88 = scmp.ne.s32.totalorder %s74, %s75
      %p89 = scmp.eq.s32.totalorder %s46, 3
      %p90 = por %p88, %p89
      %p92 = scmp.ne.s32.totalorder %s75, %s91
      %p93 = scmp.eq.s32.totalorder %s46, 0
      %p94 = por %p92, %p93
      %s95 = ssub.s32 %s40, %s47
      %p96 = scmp.eq.s32.totalorder %s95, 0
      %s98 = sadd.s32 %s97, 1
      %s99 = scalar_select %p96, %s97, %s98
      %p102 = pneg %p96
      %p103 = scmp.eq.s32.totalorder %s40, 3
      %p104 = por %p102, %p103
      %p105 = scmp.ne.s32.totalorder %s97, %s100
      %p106 = scmp.eq.s32.totalorder %s40, 0
      %p107 = por %p105, %p106
      %p108 = scmp.ne.s32.totalorder %s97, %s100
      %p109 = scmp.eq.s32.totalorder %s45, 3
      %p110 = por %p108, %p109
      %p111 = scmp.ne.s32.totalorder %s100, %s101
      %p112 = scmp.eq.s32.totalorder %s45, 0
      %p113 = por %p111, %p112
      %p114 = scmp.ne.s32.totalorder %s100, %s101
      %p115 = scmp.eq.s32.totalorder %s46, 3
      %p116 = por %p114, %p115
      %p118 = scmp.ne.s32.totalorder %s101, %s117
      %p119 = scmp.eq.s32.totalorder %s46, 0
      %p120 = por %p118, %p119
      %s121 = ssub.s32 %s40, %s47
      %p122 = scmp.eq.s32.totalorder %s121, 0
      %s124 = sadd.s32 %s123, 1
      %s125 = scalar_select %p122, %s123, %s124
      %p128 = pneg %p122
      %p129 = scmp.eq.s32.totalorder %s40, 3
      %p130 = por %p128, %p129
      %p131 = scmp.ne.s32.totalorder %s123, %s126
      %p132 = scmp.eq.s32.totalorder %s40, 0
      %p133 = por %p131, %p132
      %p134 = scmp.ne.s32.totalorder %s123, %s126
      %p135 = scmp.eq.s32.totalorder %s45, 3
      %p136 = por %p134, %p135
      %p137 = scmp.ne.s32.totalorder %s126, %s127
      %p138 = scmp.eq.s32.totalorder %s45, 0
      %p139 = por %p137, %p138
      %p140 = scmp.ne.s32.totalorder %s126, %s127
      %p141 = scmp.eq.s32.totalorder %s46, 3
      %p142 = por %p140, %p141
      %p144 = scmp.ne.s32.totalorder %s127, %s143
      %p145 = scmp.eq.s32.totalorder %s46, 0
      %p146 = por %p144, %p145
      %s147 = ssub.s32 %s40, %s47
      %p148 = scmp.eq.s32.totalorder %s147, 0
      %s150 = sadd.s32 %s149, 1
      %s151 = scalar_select %p148, %s149, %s150
      %p154 = pneg %p148
      %p155 = scmp.eq.s32.totalorder %s40, 3
      %p156 = por %p154, %p155
      %p157 = scmp.ne.s32.totalorder %s149, %s152
      %p158 = scmp.eq.s32.totalorder %s40, 0
      %p159 = por %p157, %p158
      %p160 = scmp.ne.s32.totalorder %s149, %s152
      %p161 = scmp.eq.s32.totalorder %s45, 3
      %p162 = por %p160, %p161
      %p163 = scmp.ne.s32.totalorder %s152, %s153
      %p164 = scmp.eq.s32.totalorder %s45, 0
      %p165 = por %p163, %p164
      %p166 = scmp.ne.s32.totalorder %s152, %s153
      %p167 = scmp.eq.s32.totalorder %s46, 3
      %p168 = por %p166, %p167
      %p170 = scmp.ne.s32.totalorder %s153, %s169
      %p171 = scmp.eq.s32.totalorder %s46, 0
      %p172 = por %p170, %p171
      %s173 = ssub.s32 %s40, %s47
      %p174 = scmp.eq.s32.totalorder %s173, 0
      %s176 = sadd.s32 %s175, 1
      %s177 = scalar_select %p174, %s175, %s176
      %p180 = pneg %p174
      %p181 = scmp.eq.s32.totalorder %s40, 3
      %p182 = por %p180, %p181
      %p183 = scmp.ne.s32.totalorder %s175, %s178
      %p184 = scmp.eq.s32.totalorder %s40, 0
      %p185 = por %p183, %p184
      %p186 = scmp.ne.s32.totalorder %s175, %s178
      %p187 = scmp.eq.s32.totalorder %s45, 3
      %p188 = por %p186, %p187
      %p189 = scmp.ne.s32.totalorder %s178, %s179
      %p190 = scmp.eq.s32.totalorder %s45, 0
      %p191 = por %p189, %p190
      %p192 = scmp.ne.s32.totalorder %s178, %s179
      %p193 = scmp.eq.s32.totalorder %s46, 3
      %p194 = por %p192, %p193
      %p196 = scmp.ne.s32.totalorder %s179, %s195
      %p197 = scmp.eq.s32.totalorder %s46, 0
      %p198 = por %p196, %p197
      %s199 = ssub.s32 %s40, %s47
      %p200 = scmp.eq.s32.totalorder %s199, 0
      %s202 = sadd.s32 %s201, 1
      %s203 = scalar_select %p200, %s201, %s202
      %p206 = pneg %p200
      %p207 = scmp.eq.s32.totalorder %s40, 3
      %p208 = por %p206, %p207
      %p209 = scmp.ne.s32.totalorder %s201, %s204
      %p210 = scmp.eq.s32.totalorder %s40, 0
      %p211 = por %p209, %p210
      %p212 = scmp.ne.s32.totalorder %s201, %s204
      %p213 = scmp.eq.s32.totalorder %s45, 3
      %p214 = por %p212, %p213
      %p215 = scmp.ne.s32.totalorder %s204, %s205
      %p216 = scmp.eq.s32.totalorder %s45, 0
      %p217 = por %p215, %p216
      %p218 = scmp.ne.s32.totalorder %s204, %s205
      %p219 = scmp.eq.s32.totalorder %s46, 3
      %p220 = por %p218, %p219
      %p222 = scmp.ne.s32.totalorder %s205, %s221
      %p223 = scmp.eq.s32.totalorder %s46, 0
      %p224 = por %p222, %p223
      %s225 = ssub.s32 %s40, %s47
      %p226 = scmp.eq.s32.totalorder %s225, 0
      %s228 = sadd.s32 %s227, 1
      %s229 = scalar_select %p226, %s227, %s228
      %p232 = pneg %p226
      %p233 = scmp.eq.s32.totalorder %s40, 3
      %p234 = por %p232, %p233
      %p235 = scmp.ne.s32.totalorder %s227, %s230
      %p236 = scmp.eq.s32.totalorder %s40, 0
      %p237 = por %p235, %p236
      %p238 = scmp.ne.s32.totalorder %s227, %s230
      %p239 = scmp.eq.s32.totalorder %s45, 3
      %p240 = por %p238, %p239
      %p241 = scmp.ne.s32.totalorder %s230, %s231
      %p242 = scmp.eq.s32.totalorder %s45, 0
      %p243 = por %p241, %p242
      %p244 = scmp.ne.s32.totalorder %s230, %s231
      %p245 = scmp.eq.s32.totalorder %s46, 3
      %p246 = por %p244, %p245
      %p248 = scmp.ne.s32.totalorder %s231, %s247
      %p249 = scmp.eq.s32.totalorder %s46, 0
      %p250 = por %p248, %p249
      %s251 = ssub.s32 %s40, %s47
      %p252 = scmp.eq.s32.totalorder %s251, 0
      %s254 = sadd.s32 %s253, 1
      %s255 = scalar_select %p252, %s253, %s254
      %p258 = pneg %p252
      %p259 = scmp.eq.s32.totalorder %s40, 3
      %p260 = por %p258, %p259
      %p261 = scmp.ne.s32.totalorder %s253, %s256
      %p262 = scmp.eq.s32.totalorder %s40, 0
      %p263 = por %p261, %p262
      %p264 = scmp.ne.s32.totalorder %s253, %s256
      %p265 = scmp.eq.s32.totalorder %s45, 3
      %p266 = por %p264, %p265
      %p267 = scmp.ne.s32.totalorder %s256, %s257
      %p268 = scmp.eq.s32.totalorder %s45, 0
      %p269 = por %p267, %p268
      %p270 = scmp.ne.s32.totalorder %s256, %s257
      %p271 = scmp.eq.s32.totalorder %s46, 3
      %p272 = por %p270, %p271
      %p274 = scmp.ne.s32.totalorder %s257, %s273
      %p275 = scmp.eq.s32.totalorder %s46, 0
      %p276 = por %p274, %p275
      %s277 = ssub.s32 %s40, %s47
      %p278 = scmp.eq.s32.totalorder %s277, 0
      %s280 = sadd.s32 %s279, 1
      %s281 = scalar_select %p278, %s279, %s280
      %p284 = pneg %p278
      %p285 = scmp.eq.s32.totalorder %s40, 3
      %p286 = por %p284, %p285
      %p287 = scmp.ne.s32.totalorder %s279, %s282
      %p288 = scmp.eq.s32.totalorder %s40, 0
      %p289 = por %p287, %p288
      %p290 = scmp.ne.s32.totalorder %s279, %s282
      %p291 = scmp.eq.s32.totalorder %s45, 3
      %p292 = por %p290, %p291
      %p293 = scmp.ne.s32.totalorder %s282, %s283
      %p294 = scmp.eq.s32.totalorder %s45, 0
      %p295 = por %p293, %p294
      %p296 = scmp.ne.s32.totalorder %s282, %s283
      %p297 = scmp.eq.s32.totalorder %s46, 3
      %p298 = por %p296, %p297
      %p300 = scmp.ne.s32.totalorder %s283, %s299
      %p301 = scmp.eq.s32.totalorder %s46, 0
      %p302 = por %p300, %p301
      %s303 = ssub.s32 %s40, %s47
      %p304 = scmp.eq.s32.totalorder %s303, 0
      %s306 = sadd.s32 %s305, 1
      %s307 = scalar_select %p304, %s305, %s306
      %p310 = pneg %p304
      %p311 = scmp.eq.s32.totalorder %s40, 3
      %p312 = por %p310, %p311
      %p313 = scmp.ne.s32.totalorder %s305, %s308
      %p314 = scmp.eq.s32.totalorder %s40, 0
      %p315 = por %p313, %p314
      %p316 = scmp.ne.s32.totalorder %s305, %s308
      %p317 = scmp.eq.s32.totalorder %s45, 3
      %p318 = por %p316, %p317
      %p319 = scmp.ne.s32.totalorder %s308, %s309
      %p320 = scmp.eq.s32.totalorder %s45, 0
      %p321 = por %p319, %p320
      %p322 = scmp.ne.s32.totalorder %s308, %s309
      %p323 = scmp.eq.s32.totalorder %s46, 3
      %p324 = por %p322, %p323
      %p326 = scmp.ne.s32.totalorder %s309, %s325
      %p327 = scmp.eq.s32.totalorder %s46, 0
      %p328 = por %p326, %p327
      %s329 = ssub.s32 %s40, %s47
      %p330 = scmp.eq.s32.totalorder %s329, 0
      %s332 = sadd.s32 %s331, 1
      %s333 = scalar_select %p330, %s331, %s332
      %p336 = pneg %p330
      %p337 = scmp.eq.s32.totalorder %s40, 3
      %p338 = por %p336, %p337
      %p339 = scmp.ne.s32.totalorder %s331, %s334
      %p340 = scmp.eq.s32.totalorder %s40, 0
      %p341 = por %p339, %p340
      %p342 = scmp.ne.s32.totalorder %s331, %s334
      %p343 = scmp.eq.s32.totalorder %s45, 3
      %p344 = por %p342, %p343
      %p345 = scmp.ne.s32.totalorder %s334, %s335
      %p346 = scmp.eq.s32.totalorder %s45, 0
      %p347 = por %p345, %p346
      %p348 = scmp.ne.s32.totalorder %s334, %s335
      %p349 = scmp.eq.s32.totalorder %s46, 3
      %p350 = por %p348, %p349
      %p352 = scmp.ne.s32.totalorder %s335, %s351
      %p353 = scmp.eq.s32.totalorder %s46, 0
      %p354 = por %p352, %p353
      %s355 = ssub.s32 %s40, %s47
      %p356 = scmp.eq.s32.totalorder %s355, 0
      %s358 = sadd.s32 %s357, 1
      %s359 = scalar_select %p356, %s357, %s358
      %p362 = pneg %p356
      %p363 = scmp.eq.s32.totalorder %s40, 3
      %p364 = por %p362, %p363
      %p365 = scmp.ne.s32.totalorder %s357, %s360
      %p366 = scmp.eq.s32.totalorder %s40, 0
      %p367 = por %p365, %p366
      %p368 = scmp.ne.s32.totalorder %s357, %s360
      %p369 = scmp.eq.s32.totalorder %s45, 3
      %p370 = por %p368, %p369
      %p371 = scmp.ne.s32.totalorder %s360, %s361
      %p372 = scmp.eq.s32.totalorder %s45, 0
      %p373 = por %p371, %p372
      %p374 = scmp.ne.s32.totalorder %s360, %s361
      %p375 = scmp.eq.s32.totalorder %s46, 3
      %p376 = por %p374, %p375
      %p378 = scmp.ne.s32.totalorder %s361, %s377
      %p379 = scmp.eq.s32.totalorder %s46, 0
      %p380 = por %p378, %p379
      %s381 = ssub.s32 %s40, %s47
      %p382 = scmp.eq.s32.totalorder %s381, 0
      %s384 = sadd.s32 %s383, 1
      %s385 = scalar_select %p382, %s383, %s384
      %p388 = pneg %p382
      %p389 = scmp.eq.s32.totalorder %s40, 3
      %p390 = por %p388, %p389
      %p391 = scmp.ne.s32.totalorder %s383, %s386
      %p392 = scmp.eq.s32.totalorder %s40, 0
      %p393 = por %p391, %p392
      %p394 = scmp.ne.s32.totalorder %s383, %s386
      %p395 = scmp.eq.s32.totalorder %s45, 3
      %p396 = por %p394, %p395
      %p397 = scmp.ne.s32.totalorder %s386, %s387
      %p398 = scmp.eq.s32.totalorder %s45, 0
      %p399 = por %p397, %p398
      %p400 = scmp.ne.s32.totalorder %s386, %s387
      %p401 = scmp.eq.s32.totalorder %s46, 3
      %p402 = por %p400, %p401
      %p404 = scmp.ne.s32.totalorder %s387, %s403
      %p405 = scmp.eq.s32.totalorder %s46, 0
      %p406 = por %p404, %p405
      %s407 = ssub.s32 %s40, %s47
      %p408 = scmp.eq.s32.totalorder %s407, 0
      %s410 = sadd.s32 %s409, 1
      %s411 = scalar_select %p408, %s409, %s410
      %p414 = pneg %p408
      %p415 = scmp.eq.s32.totalorder %s40, 3
      %p416 = por %p414, %p415
      %p417 = scmp.ne.s32.totalorder %s409, %s412
      %p418 = scmp.eq.s32.totalorder %s40, 0
      %p419 = por %p417, %p418
      %p420 = scmp.ne.s32.totalorder %s409, %s412
      %p421 = scmp.eq.s32.totalorder %s45, 3
      %p422 = por %p420, %p421
      %p423 = scmp.ne.s32.totalorder %s412, %s413
      %p424 = scmp.eq.s32.totalorder %s45, 0
      %p425 = por %p423, %p424
      %p426 = scmp.ne.s32.totalorder %s412, %s413
      %p427 = scmp.eq.s32.totalorder %s46, 3
      %p428 = por %p426, %p427
      %p430 = scmp.ne.s32.totalorder %s413, %s429
      %p431 = scmp.eq.s32.totalorder %s46, 0
      %p432 = por %p430, %p431
      %s433 = ssub.s32 %s40, %s47
      %p434 = scmp.eq.s32.totalorder %s433, 0
      %s436 = sadd.s32 %s435, 1
      %s437 = scalar_select %p434, %s435, %s436
      %p440 = pneg %p434
      %p441 = scmp.eq.s32.totalorder %s40, 3
      %p442 = por %p440, %p441
      %p443 = scmp.ne.s32.totalorder %s435, %s438
      %p444 = scmp.eq.s32.totalorder %s40, 0
      %p445 = por %p443, %p444
      %p446 = scmp.ne.s32.totalorder %s435, %s438
      %p447 = scmp.eq.s32.totalorder %s45, 3
      %p448 = por %p446, %p447
      %p449 = scmp.ne.s32.totalorder %s438, %s439
      %p450 = scmp.eq.s32.totalorder %s45, 0
      %p451 = por %p449, %p450
      %p452 = scmp.ne.s32.totalorder %s438, %s439
      %p453 = scmp.eq.s32.totalorder %s46, 3
      %p454 = por %p452, %p453
      %p456 = scmp.ne.s32.totalorder %s439, %s455
      %p457 = scmp.eq.s32.totalorder %s46, 0
      %p458 = por %p456, %p457
      %s459 = ssub.s32 %s40, %s47
      %p460 = scmp.eq.s32.totalorder %s459, 0
      %s462 = sadd.s32 %s461, 1
      %s463 = scalar_select %p460, %s461, %s462
      %p466 = pneg %p460
      %p467 = scmp.eq.s32.totalorder %s40, 3
      %p468 = por %p466, %p467
      %p469 = scmp.ne.s32.totalorder %s461, %s464
      %p470 = scmp.eq.s32.totalorder %s40, 0
      %p471 = por %p469, %p470
      %p472 = scmp.ne.s32.totalorder %s461, %s464
      %p473 = scmp.eq.s32.totalorder %s45, 3
      %p474 = por %p472, %p473
      %p475 = scmp.ne.s32.totalorder %s464, %s465
      %p476 = scmp.eq.s32.totalorder %s45, 0
      %p477 = por %p475, %p476
      %p478 = scmp.ne.s32.totalorder %s464, %s465
      %p479 = scmp.eq.s32.totalorder %s46, 3
      %p480 = por %p478, %p479
      %p482 = scmp.ne.s32.totalorder %s465, %s481
      %p483 = scmp.eq.s32.totalorder %s46, 0
      %p484 = por %p482, %p483
      %s485 = ssub.s32 %s40, %s47
      %p486 = scmp.eq.s32.totalorder %s485, 0
      %s488 = sadd.s32 %s487, 1
      %s489 = scalar_select %p486, %s487, %s488
      %p492 = pneg %p486
      %p493 = scmp.eq.s32.totalorder %s40, 3
      %p494 = por %p492, %p493
      %p495 = scmp.ne.s32.totalorder %s487, %s490
      %p496 = scmp.eq.s32.totalorder %s40, 0
      %p497 = por %p495, %p496
      %p498 = scmp.ne.s32.totalorder %s487, %s490
      %p499 = scmp.eq.s32.totalorder %s45, 3
      %p500 = por %p498, %p499
      %p501 = scmp.ne.s32.totalorder %s490, %s491
      %p502 = scmp.eq.s32.totalorder %s45, 0
      %p503 = por %p501, %p502
      %p504 = scmp.ne.s32.totalorder %s490, %s491
      %p505 = scmp.eq.s32.totalorder %s46, 3
      %p506 = por %p504, %p505
      %p508 = scmp.ne.s32.totalorder %s491, %s507
      %p509 = scmp.eq.s32.totalorder %s46, 0
      %p510 = por %p508, %p509
      %s512 = sadd.s32 %s511, 1
      %p515 = scmp.eq.s32.totalorder %s40, 3
      %p516 = scmp.ne.s32.totalorder %s511, %s513
      %p517 = scmp.eq.s32.totalorder %s40, 0
      %p518 = por %p516, %p517
      %p519 = scmp.ne.s32.totalorder %s511, %s513
      %p520 = scmp.eq.s32.totalorder %s45, 3
      %p521 = por %p519, %p520
      %p522 = scmp.ne.s32.totalorder %s513, %s514
      %p523 = scmp.eq.s32.totalorder %s45, 0
      %p524 = por %p522, %p523
      %p525 = scmp.ne.s32.totalorder %s513, %s514
      %p526 = scmp.eq.s32.totalorder %s46, 3
      %p527 = por %p525, %p526
      %p529 = scmp.ne.s32.totalorder %s514, %s528
      %p530 = scmp.eq.s32.totalorder %s46, 0
      %p531 = por %p529, %p530
      %s533 = sadd.s32 %s532, 1
      %p536 = scmp.eq.s32.totalorder %s40, 3
      %p537 = scmp.ne.s32.totalorder %s532, %s534
      %p538 = scmp.eq.s32.totalorder %s40, 0
      %p539 = por %p537, %p538
      %p540 = scmp.ne.s32.totalorder %s532, %s534
      %p541 = scmp.eq.s32.totalorder %s45, 3
      %p542 = por %p540, %p541
      %p543 = scmp.ne.s32.totalorder %s534, %s535
      %p544 = scmp.eq.s32.totalorder %s45, 0
      %p545 = por %p543, %p544
      %p546 = scmp.ne.s32.totalorder %s534, %s535
      %p547 = scmp.eq.s32.totalorder %s46, 3
      %p548 = por %p546, %p547
      %p550 = scmp.ne.s32.totalorder %s535, %s549
      %p551 = scmp.eq.s32.totalorder %s46, 0
      %p552 = por %p550, %p551
      %s554 = sadd.s32 %s553, 1
      %p557 = scmp.eq.s32.totalorder %s40, 3
      %p558 = scmp.ne.s32.totalorder %s553, %s555
      %p559 = scmp.eq.s32.totalorder %s40, 0
      %p560 = por %p558, %p559
      %p561 = scmp.ne.s32.totalorder %s553, %s555
      %p562 = scmp.eq.s32.totalorder %s45, 3
      %p563 = por %p561, %p562
      %p564 = scmp.ne.s32.totalorder %s555, %s556
      %p565 = scmp.eq.s32.totalorder %s45, 0
      %p566 = por %p564, %p565
      %p567 = scmp.ne.s32.totalorder %s555, %s556
      %p568 = scmp.eq.s32.totalorder %s46, 3
      %p569 = por %p567, %p568
      %p571 = scmp.ne.s32.totalorder %s556, %s570
      %p572 = scmp.eq.s32.totalorder %s46, 0
      %p573 = por %p571, %p572
      %p574 = scmp.le.s32.totalorder 1, %s40
      %p575 = scmp.lt.s32.totalorder %s40, 5
      %p576 = pnand %p574, %p575
      %p577 = pneg %p576
      // Predicated region
      $region9: #{forward.1} parent=5 // pred_check
        _
      $region10: #{forward.1} parent=5 // pred_check_branch
        %579 = sbr.rel (%p576) target = $region12
      $region11: #{forward.1} parent=5 // pred_region
        %s580 = ssub.s32 %s40, 1
        // Predicated region
        $region13: #{forward.1} parent=11 // pred_check
          %p581 = pneg %p61
        $region14: #{forward.1} parent=11 // pred_check_branch
          %583 = sbr.rel (%p581) target = $region16
        $region15: #{forward.1} parent=11 // pred_region
          _
        $region16: #{forward.1} parent=11 // pred_fallthru
          _
        // Predicated region
        $region17: #{forward.1} parent=11 // pred_check
          %p584 = pneg %p524
        $region18: #{forward.1} parent=11 // pred_check_branch
          %586 = sbr.rel (%p584) target = $region20
        $region19: #{forward.1} parent=11 // pred_region
          _
        $region20: #{forward.1} parent=11 // pred_fallthru
          _
        // Predicated region
        $region21: #{forward.1} parent=11 // pred_check
          %p587 = pneg %p545
        $region22: #{forward.1} parent=11 // pred_check_branch
          %589 = sbr.rel (%p587) target = $region24
        $region23: #{forward.1} parent=11 // pred_region
          _
        $region24: #{forward.1} parent=11 // pred_fallthru
          _
      $region12: #{forward.1} parent=5 // pred_fallthru
        _
      %p590 = scmp.lt.s32.totalorder %s40, 4
      // Predicated region
      $region25: #{forward.1} parent=5 // pred_check
        %p591 = pneg %p590
      $region26: #{forward.1} parent=5 // pred_check_branch
        %593 = sbr.rel (%p591) target = $region28
      $region27: #{forward.1} parent=5 // pred_region
        // Predicated region
        $region29: #{forward.1} parent=27 // pred_check
          %p594 = pneg %p81
        $region30: #{forward.1} parent=27 // pred_check_branch
          %596 = sbr.rel (%p594) target = $region32
        $region31: #{forward.1} parent=27 // pred_region
          %p597 = scmp.lt.s32.totalorder %s40, 3
          %s598 = scalar_select %p597, %s40, 3
          %s599 = smul.addr %s598, 8
          %s600 = scalar_lea.vmem %s1, %s599
        $region32: #{forward.1} parent=27 // pred_fallthru
          _
        // Predicated region
        $region33: #{forward.1} parent=27 // pred_check
          %p601 = pneg %p107
        $region34: #{forward.1} parent=27 // pred_check_branch
          %603 = sbr.rel (%p601) target = $region36
        $region35: #{forward.1} parent=27 // pred_region
          %p604 = scmp.lt.s32.totalorder %s40, 3
          %s605 = scalar_select %p604, %s40, 3
          %s606 = smul.addr %s605, 8
          %s607 = scalar_lea.vmem %s2, %s606
        $region36: #{forward.1} parent=27 // pred_fallthru
          _
        // Predicated region
        $region37: #{forward.1} parent=27 // pred_check
          %p608 = pneg %p133
        $region38: #{forward.1} parent=27 // pred_check_branch
          %610 = sbr.rel (%p608) target = $region40
        $region39: #{forward.1} parent=27 // pred_region
          %s611 = sand.u32 %s123, 1
          %s612 = scalar_lea.sflag [#allocation5], %s611
          %s613 = sand.u32 %s123, 1
          %s614 = smul.addr %s613, 256
          %s615 = scalar_lea.vmem [#allocation4], %s614
          %s617 = ssub.s32 4096, 4096
          %618 = vsyncadd %s612, %s617
          %s619 = smul.addr %s40, 64
          %s620 = smul.addr %s619, 64
          %s621 = scalar_lea.hbm %s3, %s620
          %s622 = sshll.u32 %s615, 4
          %s623 = int_to_ptr.vmem [resolvable:$true] %s622
          %628 = dma.hbm_to_vmem [thread:$0]  %s621, 4096, %s623, %s612, 128, 128, 8
        $region40: #{forward.1} parent=27 // pred_fallthru
          _
        // Predicated region
        $region41: #{forward.1} parent=27 // pred_check
          %p629 = pneg %p159
        $region42: #{forward.1} parent=27 // pred_check_branch
          %631 = sbr.rel (%p629) target = $region44
        $region43: #{forward.1} parent=27 // pred_region
          %p632 = scmp.lt.s32.totalorder %s40, 3
          %s633 = scalar_select %p632, %s40, 3
          %s634 = smul.addr %s633, 2
          %s635 = smul.addr %s634, 2
          %s636 = scalar_lea.vmem %s4, %s635
        $region44: #{forward.1} parent=27 // pred_fallthru
          _
        // Predicated region
        $region45: #{forward.1} parent=27 // pred_check
          %p637 = pneg %p185
        $region46: #{forward.1} parent=27 // pred_check_branch
          %639 = sbr.rel (%p637) target = $region48
        $region47: #{forward.1} parent=27 // pred_region
          %s640 = sand.u32 %s40, 1
          %s641 = scalar_lea.sflag [#allocation7], %s640
          %s642 = sand.u32 %s175, 1
          %s643 = smul.addr %s642, 256
          %s644 = scalar_lea.vmem [#allocation6], %s643
          %s646 = ssub.s32 4096, 4096
          %647 = vsyncadd %s641, %s646
          %s648 = smul.addr %s40, 64
          %s649 = smul.addr %s648, 64
          %s650 = scalar_lea.hbm %s5, %s649
          %s651 = sshll.u32 %s644, 4
          %s652 = int_to_ptr.vmem [resolvable:$true] %s651
          %657 = dma.hbm_to_vmem [thread:$0]  %s650, 4096, %s652, %s641, 64, 64, 4
        $region48: #{forward.1} parent=27 // pred_fallthru
          _
        // Predicated region
        $region49: #{forward.1} parent=27 // pred_check
          %p658 = pneg %p211
        $region50: #{forward.1} parent=27 // pred_check_branch
          %660 = sbr.rel (%p658) target = $region52
        $region51: #{forward.1} parent=27 // pred_region
          %p661 = scmp.lt.s32.totalorder %s40, 3
          %s662 = scalar_select %p661, %s40, 3
          %s663 = smul.addr %s662, 2
          %s664 = scalar_lea.vmem %s6, %s663
        $region52: #{forward.1} parent=27 // pred_fallthru
          _
        // Predicated region
        $region53: #{forward.1} parent=27 // pred_check
          %p665 = pneg %p237
        $region54: #{forward.1} parent=27 // pred_check_branch
          %667 = sbr.rel (%p665) target = $region56
        $region55: #{forward.1} parent=27 // pred_region
          %s668 = sand.u32 %s40, 1
          %s669 = scalar_lea.sflag [#allocation7], %s668
          %s670 = sand.u32 %s227, 1
          %s671 = smul.addr %s670, 192
          %s672 = scalar_lea.vmem [#allocation8], %s671
          %s674 = ssub.s32 3072, 3072
          %675 = vsyncadd %s669, %s674
          %s676 = smul.addr %s40, 48
          %s677 = smul.addr %s676, 64
          %s678 = scalar_lea.hbm %s7, %s677
          %s679 = sshll.u32 %s672, 4
          %s680 = int_to_ptr.vmem [resolvable:$true] %s679
          %685 = dma.hbm_to_vmem [thread:$0]  %s678, 3072, %s680, %s669, 192, 192, 12
        $region56: #{forward.1} parent=27 // pred_fallthru
          _
        // Predicated region
        $region57: #{forward.1} parent=27 // pred_check
          %p686 = pneg %p263
        $region58: #{forward.1} parent=27 // pred_check_branch
          %688 = sbr.rel (%p686) target = $region60
        $region59: #{forward.1} parent=27 // pred_region
          %p689 = scmp.lt.s32.totalorder %s40, 3
          %s690 = scalar_select %p689, %s40, 3
          %s691 = smul.addr %s690, 3
          %s692 = scalar_lea.vmem %s8, %s691
        $region60: #{forward.1} parent=27 // pred_fallthru
          _
        // Predicated region
        $region61: #{forward.1} parent=27 // pred_check
          %p693 = pneg %p289
        $region62: #{forward.1} parent=27 // pred_check_branch
          %695 = sbr.rel (%p693) target = $region64
        $region63: #{forward.1} parent=27 // pred_region
          %s696 = sand.u32 %s40, 1
          %s697 = scalar_lea.sflag [#allocation10], %s696
          %s698 = sand.u32 %s279, 1
          %s699 = smul.addr %s698, 64
          %s700 = scalar_lea.vmem [#allocation9], %s699
          %s702 = ssub.s32 1024, 1024
          %703 = vsyncadd %s697, %s702
          %s704 = smul.addr %s40, 16
          %s705 = smul.addr %s704, 64
          %s706 = scalar_lea.hbm %s9, %s705
          %s707 = sshll.u32 %s700, 4
          %s708 = int_to_ptr.vmem [resolvable:$true] %s707
          %713 = dma.hbm_to_vmem [thread:$0]  %s706, 1024, %s708, %s697, 64, 64, 4
        $region64: #{forward.1} parent=27 // pred_fallthru
          _
        // Predicated region
        $region65: #{forward.1} parent=27 // pred_check
          %p714 = pneg %p315
        $region66: #{forward.1} parent=27 // pred_check_branch
          %716 = sbr.rel (%p714) target = $region68
        $region67: #{forward.1} parent=27 // pred_region
          %p717 = scmp.lt.s32.totalorder %s40, 3
          %s718 = scalar_select %p717, %s40, 3
          %s719 = scalar_lea.vmem %s10, %s718
        $region68: #{forward.1} parent=27 // pred_fallthru
          _
        // Predicated region
        $region69: #{forward.1} parent=27 // pred_check
          %p720 = pneg %p341
        $region70: #{forward.1} parent=27 // pred_check_branch
          %722 = sbr.rel (%p720) target = $region72
        $region71: #{forward.1} parent=27 // pred_region
          %s723 = sand.u32 %s40, 1
          %s724 = scalar_lea.sflag [#allocation10], %s723
          %s725 = sand.u32 %s331, 1
          %s726 = smul.addr %s725, 128
          %s727 = scalar_lea.vmem [#allocation11], %s726
          %s729 = ssub.s32 2048, 2048
          %730 = vsyncadd %s724, %s729
          %s731 = smul.addr %s40, 32
          %s732 = smul.addr %s731, 64
          %s733 = scalar_lea.hbm %s11, %s732
          %s734 = sshll.u32 %s727, 4
          %s735 = int_to_ptr.vmem [resolvable:$true] %s734
          %740 = dma.hbm_to_vmem [thread:$0]  %s733, 2048, %s735, %s724, 128, 128, 8
        $region72: #{forward.1} parent=27 // pred_fallthru
          _
        // Predicated region
        $region73: #{forward.1} parent=27 // pred_check
          %p741 = pneg %p367
        $region74: #{forward.1} parent=27 // pred_check_branch
          %743 = sbr.rel (%p741) target = $region76
        $region75: #{forward.1} parent=27 // pred_region
          %p744 = scmp.lt.s32.totalorder %s40, 3
          %s745 = scalar_select %p744, %s40, 3
          %s746 = smul.addr %s745, 2
          %s747 = scalar_lea.vmem %s12, %s746
        $region76: #{forward.1} parent=27 // pred_fallthru
          _
        // Predicated region
        $region77: #{forward.1} parent=27 // pred_check
          %p748 = pneg %p393
        $region78: #{forward.1} parent=27 // pred_check_branch
          %750 = sbr.rel (%p748) target = $region80
        $region79: #{forward.1} parent=27 // pred_region
          %p751 = scmp.lt.s32.totalorder %s40, 3
          %s752 = scalar_select %p751, %s40, 3
          %s753 = smul.addr %s752, 8
          %s754 = scalar_lea.vmem %s13, %s753
        $region80: #{forward.1} parent=27 // pred_fallthru
          _
        // Predicated region
        $region81: #{forward.1} parent=27 // pred_check
          %p755 = pneg %p419
        $region82: #{forward.1} parent=27 // pred_check_branch
          %757 = sbr.rel (%p755) target = $region84
        $region83: #{forward.1} parent=27 // pred_region
          %p758 = scmp.lt.s32.totalorder %s40, 3
          %s759 = scalar_select %p758, %s40, 3
          %s760 = scalar_lea.vmem %s14, %s759
        $region84: #{forward.1} parent=27 // pred_fallthru
          _
        // Predicated region
        $region85: #{forward.1} parent=27 // pred_check
          %p761 = pneg %p445
        $region86: #{forward.1} parent=27 // pred_check_branch
          %763 = sbr.rel (%p761) target = $region88
        $region87: #{forward.1} parent=27 // pred_region
          %p764 = scmp.lt.s32.totalorder %s40, 3
          %s765 = scalar_select %p764, %s40, 3
          %s766 = smul.addr %s765, 4
          %s767 = scalar_lea.vmem %s15, %s766
        $region88: #{forward.1} parent=27 // pred_fallthru
          _
        // Predicated region
        $region89: #{forward.1} parent=27 // pred_check
          %p768 = pneg %p471
        $region90: #{forward.1} parent=27 // pred_check_branch
          %770 = sbr.rel (%p768) target = $region92
        $region91: #{forward.1} parent=27 // pred_region
          %s771 = sand.u32 %s461, 1
          %s772 = scalar_lea.sflag [#allocation13], %s771
          %s773 = sand.u32 %s461, 1
          %s774 = smul.addr %s773, 64
          %s775 = scalar_lea.vmem [#allocation12], %s774
          %s777 = ssub.s32 1024, 1024
          %778 = vsyncadd %s772, %s777
          %s779 = smul.addr %s40, 16
          %s780 = smul.addr %s779, 64
          %s781 = scalar_lea.hbm %s16, %s780
          %s782 = sshll.u32 %s775, 4
          %s783 = int_to_ptr.vmem [resolvable:$true] %s782
          %788 = dma.hbm_to_vmem [thread:$0]  %s781, 1024, %s783, %s772, 64, 64, 4
        $region92: #{forward.1} parent=27 // pred_fallthru
          _
        // Predicated region
        $region93: #{forward.1} parent=27 // pred_check
          %p789 = pneg %p497
        $region94: #{forward.1} parent=27 // pred_check_branch
          %791 = sbr.rel (%p789) target = $region96
        $region95: #{forward.1} parent=27 // pred_region
          %p792 = scmp.lt.s32.totalorder %s40, 3
          %s793 = scalar_select %p792, %s40, 3
          %s794 = scalar_lea.vmem %s17, %s793
        $region96: #{forward.1} parent=27 // pred_fallthru
          _
      $region28: #{forward.1} parent=5 // pred_fallthru
        _
      %p795 = scmp.le.s32.totalorder 1, %s40
      %p796 = scmp.lt.s32.totalorder %s40, 5
      %p797 = pnand %p795, %p796
      %p798 = pneg %p797
      // Predicated region
      $region97: #{forward.1} parent=5 // pred_check
        _
      $region98: #{forward.1} parent=5 // pred_check_branch
        %800 = sbr.rel (%p797) target = $region100
      $region99: #{forward.1} parent=5 // pred_region
        %s801 = ssub.s32 %s40, 1
        %s802 = sand.u32 %s126, 1
        %s803 = scalar_lea.sflag [#allocation5], %s802
        %s804 = sand.u32 %s126, 1
        %s805 = smul.addr %s804, 256
        %s806 = scalar_lea.vmem [#allocation4], %s805
        // Predicated region
        $region101: #{forward.1} parent=99 // pred_check
          %p807 = pneg %p139
        $region102: #{forward.1} parent=99 // pred_check_branch
          %809 = sbr.rel (%p807) target = $region104
        $region103: #{forward.1} parent=99 // pred_region
          %810 = dma.done %s803, 4096
        $region104: #{forward.1} parent=99 // pred_fallthru
          _
        %s811 = sand.u32 %s45, 1
        %s812 = scalar_lea.sflag [#allocation7], %s811
        %s813 = sand.u32 %s178, 1
        %s814 = smul.addr %s813, 256
        %s815 = scalar_lea.vmem [#allocation6], %s814
        // Predicated region
        $region105: #{forward.1} parent=99 // pred_check
          %p816 = pneg %p191
        $region106: #{forward.1} parent=99 // pred_check_branch
          %818 = sbr.rel (%p816) target = $region108
        $region107: #{forward.1} parent=99 // pred_region
          %819 = dma.done %s812, 4096
        $region108: #{forward.1} parent=99 // pred_fallthru
          _
        %s820 = sand.u32 %s45, 1
        %s821 = scalar_lea.sflag [#allocation7], %s820
        %s822 = sand.u32 %s230, 1
        %s823 = smul.addr %s822, 192
        %s824 = scalar_lea.vmem [#allocation8], %s823
        // Predicated region
        $region109: #{forward.1} parent=99 // pred_check
          %p825 = pneg %p243
        $region110: #{forward.1} parent=99 // pred_check_branch
          %827 = sbr.rel (%p825) target = $region112
        $region111: #{forward.1} parent=99 // pred_region
          %828 = dma.done %s821, 3072
        $region112: #{forward.1} parent=99 // pred_fallthru
          _
        %s829 = sand.u32 %s45, 1
        %s830 = scalar_lea.sflag [#allocation10], %s829
        %s831 = sand.u32 %s282, 1
        %s832 = smul.addr %s831, 64
        %s833 = scalar_lea.vmem [#allocation9], %s832
        // Predicated region
        $region113: #{forward.1} parent=99 // pred_check
          %p834 = pneg %p295
        $region114: #{forward.1} parent=99 // pred_check_branch
          %836 = sbr.rel (%p834) target = $region116
        $region115: #{forward.1} parent=99 // pred_region
          %837 = dma.done %s830, 1024
        $region116: #{forward.1} parent=99 // pred_fallthru
          _
        %s838 = sand.u32 %s45, 1
        %s839 = scalar_lea.sflag [#allocation10], %s838
        %s840 = sand.u32 %s334, 1
        %s841 = smul.addr %s840, 128
        %s842 = scalar_lea.vmem [#allocation11], %s841
        // Predicated region
        $region117: #{forward.1} parent=99 // pred_check
          %p843 = pneg %p347
        $region118: #{forward.1} parent=99 // pred_check_branch
          %845 = sbr.rel (%p843) target = $region120
        $region119: #{forward.1} parent=99 // pred_region
          %846 = dma.done %s839, 2048
        $region120: #{forward.1} parent=99 // pred_fallthru
          _
        %s847 = sand.u32 %s464, 1
        %s848 = scalar_lea.sflag [#allocation13], %s847
        %s849 = sand.u32 %s464, 1
        %s850 = smul.addr %s849, 64
        %s851 = scalar_lea.vmem [#allocation12], %s850
        // Predicated region
        $region121: #{forward.1} parent=99 // pred_check
          %p852 = pneg %p477
        $region122: #{forward.1} parent=99 // pred_check_branch
          %854 = sbr.rel (%p852) target = $region124
        $region123: #{forward.1} parent=99 // pred_region
          %855 = dma.done %s848, 1024
        $region124: #{forward.1} parent=99 // pred_fallthru
          _
        %p856 = pneg %p61
        %p857 = pneg %p58
        %p858 = scmp.lt.s32.totalorder %s45, 3
        %s859 = scalar_select %p858, %s45, 3
        %s860 = smul.addr %s859, 8
        %s861 = scalar_lea.vmem %s1, %s860
        %p862 = pneg %p87
        %p863 = pneg %p84
        %p864 = scmp.lt.s32.totalorder %s45, 3
        %s865 = scalar_select %p864, %s45, 3
        %s866 = smul.addr %s865, 8
        %s867 = scalar_lea.vmem %s2, %s866
        %p868 = pneg %p113
        %p869 = pneg %p110
        %s870 = sand.u32 %s126, 1
        %s871 = scalar_lea.sflag [#allocation5], %s870
        %s872 = sand.u32 %s126, 1
        %s873 = smul.addr %s872, 256
        %s874 = scalar_lea.vmem [#allocation4], %s873
        %p875 = pneg %p139
        %p876 = pneg %p136
        %p877 = scmp.lt.s32.totalorder %s45, 3
        %s878 = scalar_select %p877, %s45, 3
        %s879 = smul.addr %s878, 2
        %s880 = smul.addr %s879, 2
        %s881 = scalar_lea.vmem %s4, %s880
        %p882 = pneg %p165
        %p883 = pneg %p162
        %s884 = sand.u32 %s45, 1
        %s885 = scalar_lea.sflag [#allocation7], %s884
        %s886 = sand.u32 %s178, 1
        %s887 = smul.addr %s886, 256
        %s888 = scalar_lea.vmem [#allocation6], %s887
        %p889 = pneg %p191
        %p890 = pneg %p188
        %p891 = scmp.lt.s32.totalorder %s45, 3
        %s892 = scalar_select %p891, %s45, 3
        %s893 = smul.addr %s892, 2
        %s894 = scalar_lea.vmem %s6, %s893
        %p895 = pneg %p217
        %p896 = pneg %p214
        %s897 = sand.u32 %s45, 1
        %s898 = scalar_lea.sflag [#allocation7], %s897
        %s899 = sand.u32 %s230, 1
        %s900 = smul.addr %s899, 192
        %s901 = scalar_lea.vmem [#allocation8], %s900
        %p902 = pneg %p243
        %p903 = pneg %p240
        %p904 = scmp.lt.s32.totalorder %s45, 3
        %s905 = scalar_select %p904, %s45, 3
        %s906 = smul.addr %s905, 3
        %s907 = scalar_lea.vmem %s8, %s906
        %p908 = pneg %p269
        %p909 = pneg %p266
        %s910 = sand.u32 %s45, 1
        %s911 = scalar_lea.sflag [#allocation10], %s910
        %s912 = sand.u32 %s282, 1
        %s913 = smul.addr %s912, 64
        %s914 = scalar_lea.vmem [#allocation9], %s913
        %p915 = pneg %p295
        %p916 = pneg %p292
        %p917 = scmp.lt.s32.totalorder %s45, 3
        %s918 = scalar_select %p917, %s45, 3
        %s919 = scalar_lea.vmem %s10, %s918
        %p920 = pneg %p321
        %p921 = pneg %p318
        %s922 = sand.u32 %s45, 1
        %s923 = scalar_lea.sflag [#allocation10], %s922
        %s924 = sand.u32 %s334, 1
        %s925 = smul.addr %s924, 128
        %s926 = scalar_lea.vmem [#allocation11], %s925
        %p927 = pneg %p347
        %p928 = pneg %p344
        %p929 = scmp.lt.s32.totalorder %s45, 3
        %s930 = scalar_select %p929, %s45, 3
        %s931 = smul.addr %s930, 2
        %s932 = scalar_lea.vmem %s12, %s931
        %p933 = pneg %p373
        %p934 = pneg %p370
        %p935 = scmp.lt.s32.totalorder %s45, 3
        %s936 = scalar_select %p935, %s45, 3
        %s937 = smul.addr %s936, 8
        %s938 = scalar_lea.vmem %s13, %s937
        %p939 = pneg %p399
        %p940 = pneg %p396
        %p941 = scmp.lt.s32.totalorder %s45, 3
        %s942 = scalar_select %p941, %s45, 3
        %s943 = scalar_lea.vmem %s14, %s942
        %p944 = pneg %p425
        %p945 = pneg %p422
        %p946 = scmp.lt.s32.totalorder %s45, 3
        %s947 = scalar_select %p946, %s45, 3
        %s948 = smul.addr %s947, 4
        %s949 = scalar_lea.vmem %s15, %s948
        %p950 = pneg %p451
        %p951 = pneg %p448
        %s952 = sand.u32 %s464, 1
        %s953 = scalar_lea.sflag [#allocation13], %s952
        %s954 = sand.u32 %s464, 1
        %s955 = smul.addr %s954, 64
        %s956 = scalar_lea.vmem [#allocation12], %s955
        %p957 = pneg %p477
        %p958 = pneg %p474
        %p959 = scmp.lt.s32.totalorder %s45, 3
        %s960 = scalar_select %p959, %s45, 3
        %s961 = scalar_lea.vmem %s17, %s960
        %p962 = pneg %p503
        %p963 = pneg %p500
        %p964 = pneg %p524
        %p965 = pneg %p521
        %p966 = pneg %p545
        %p967 = pneg %p542
        %p968 = pneg %p566
        %p969 = pneg %p563
        %p970 = scmp.lt.s32.totalorder %s45, 3
        %s971 = scalar_select %p970, %s45, 3
        %s972 = smul.addr %s971, 8
        %s973 = scalar_lea.vmem %s1, %s972
        %p974 = scmp.lt.s32.totalorder %s45, 3
        %s975 = scalar_select %p974, %s45, 3
        %s976 = smul.addr %s975, 8
        %s977 = scalar_lea.vmem %s2, %s976
        %p978 = scmp.lt.s32.totalorder %s45, 3
        %s979 = scalar_select %p978, %s45, 3
        %s980 = smul.addr %s979, 2
        %s981 = smul.addr %s980, 2
        %s982 = scalar_lea.vmem %s4, %s981
        %p983 = scmp.lt.s32.totalorder %s45, 3
        %s984 = scalar_select %p983, %s45, 3
        %s985 = smul.addr %s984, 2
        %s986 = scalar_lea.vmem %s6, %s985
        %p987 = scmp.lt.s32.totalorder %s45, 3
        %s988 = scalar_select %p987, %s45, 3
        %s989 = smul.addr %s988, 3
        %s990 = scalar_lea.vmem %s8, %s989
        %p991 = scmp.lt.s32.totalorder %s45, 3
        %s992 = scalar_select %p991, %s45, 3
        %s993 = scalar_lea.vmem %s10, %s992
        %p994 = scmp.lt.s32.totalorder %s45, 3
        %s995 = scalar_select %p994, %s45, 3
        %s996 = smul.addr %s995, 2
        %s997 = scalar_lea.vmem %s12, %s996
        %p998 = scmp.lt.s32.totalorder %s45, 3
        %s999 = scalar_select %p998, %s45, 3
        %s1000 = smul.addr %s999, 8
        %s1001 = scalar_lea.vmem %s13, %s1000
        %p1002 = scmp.lt.s32.totalorder %s45, 3
        %s1003 = scalar_select %p1002, %s45, 3
        %s1004 = scalar_lea.vmem %s14, %s1003
        %p1005 = scmp.lt.s32.totalorder %s45, 3
        %s1006 = scalar_select %p1005, %s45, 3
        %s1007 = smul.addr %s1006, 4
        %s1008 = scalar_lea.vmem %s15, %s1007
        %p1009 = scmp.lt.s32.totalorder %s45, 3
        %s1010 = scalar_select %p1009, %s45, 3
        %s1011 = scalar_lea.vmem %s17, %s1010
        %p1013 = scmp.eq.s32.totalorder %s45, 0
        // Predicated region
        $region125: #{forward.1} parent=99 // pred_check
          %p1014 = pneg %p1013
        $region126: #{forward.1} parent=99 // pred_check_branch
          %1016 = sbr.rel (%p1014) target = $region128
        $region127: #{forward.1} parent=99 // pred_region
          %v1017 = vld [vmem:[%s0] sm:$0xff]
          %v1018 = vld [vmem:[%s0 + $0x8] sm:$0xff]
          %v1019 = vld [vmem:[%s0 + $0x10] sm:$0xff]
          %v1020 = vld [vmem:[%s0 + $0x18] sm:$0xff]
          %1021 = vst [vmem:[#allocation2] sm:$0xff] %v1017
          %1022 = vst [vmem:[#allocation2 + $0x8] sm:$0xff] %v1018
          %1023 = vst [vmem:[#allocation2 + $0x10] sm:$0xff] %v1019
          %1024 = vst [vmem:[#allocation2 + $0x18] sm:$0xff] %v1020
        $region128: #{forward.1} parent=99 // pred_fallthru
          _
        %v1025 = vld [vmem:[#allocation2] sm:$0xff]
        %v1026 = vld [vmem:[#allocation2 + $0x8] sm:$0xff]
        %v1027 = vld [vmem:[#allocation2 + $0x10] sm:$0xff]
        %v1028 = vld [vmem:[#allocation2 + $0x18] sm:$0xff]
        %v1029 = vld [vmem:[%s973] sm:$0x1f]
        %v1030 = vld [vmem:[%s977] sm:$0x1f]
        %v1031 = vld [vmem:[%s982] sm:$0xf]
        %v1032 = vld [vmem:[%s986] sm:$0x3]
        %1033 = vadd.xlane.f32.xlu0 %v1025
        %v1034 = vpop.xlane.xlu0 %1033
        %1035 = vadd.xlane.f32.xlu0 %v1026
        %v1036 = vpop.xlane.xlu0 %1035
        %1037 = vadd.xlane.f32.xlu0 %v1027
        %v1038 = vpop.xlane.xlu0 %1037
        %1039 = vadd.xlane.f32.xlu0 %v1028
        %v1040 = vpop.xlane.xlu0 %1039
        %v1041 = vrcp.pop 128.0
        %v1042 = vmul.f32 %v1034, %v1041
        %v1043 = vmul.f32 %v1036, %v1041
        %v1044 = vmul.f32 %v1038, %v1041
        %v1045 = vmul.f32 %v1040, %v1041
        %v1046 = vsub.f32 %v1025, %v1042
        %v1047 = vsub.f32 %v1026, %v1043
        %v1048 = vsub.f32 %v1027, %v1044
        %v1049 = vsub.f32 %v1028, %v1045
        %v1050 = vmul.f32 %v1046, %v1046
        %v1051 = vmul.f32 %v1047, %v1047
        %v1052 = vmul.f32 %v1048, %v1048
        %v1053 = vmul.f32 %v1049, %v1049
        %1054 = vadd.xlane.f32.xlu0 %v1050
        %v1055 = vpop.xlane.xlu0 %1054
        %1056 = vadd.xlane.f32.xlu0 %v1051
        %v1057 = vpop.xlane.xlu0 %1056
        %1058 = vadd.xlane.f32.xlu0 %v1052
        %v1059 = vpop.xlane.xlu0 %1058
        %1060 = vadd.xlane.f32.xlu0 %v1053
        %v1061 = vpop.xlane.xlu0 %1060
        %v1062 = vmul.f32 %v1055, %v1041
        %v1063 = vmul.f32 %v1057, %v1041
        %v1064 = vmul.f32 %v1059, %v1041
        %v1065 = vmul.f32 %v1061, %v1041
        %v1066 = vadd.f32 %v1062, 1e-05
        %v1067 = vadd.f32 %v1063, 1e-05
        %v1068 = vadd.f32 %v1064, 1e-05
        %v1069 = vadd.f32 %v1065, 1e-05
        %v1070 = vrsqrt.pop %v1066
        %v1071 = vrsqrt.pop %v1067
        %v1072 = vrsqrt.pop %v1068
        %v1073 = vrsqrt.pop %v1069
        %v1074 = vmul.f32 %v1046, %v1070
        %v1075 = vmul.f32 %v1047, %v1071
        %v1076 = vmul.f32 %v1048, %v1072
        %v1077 = vmul.f32 %v1049, %v1073
        %v1078 = vlaneseq
        %v1079 = vshrl.u32 %v1078, 7
        %v1080 = vsub.s32 0, %v1079
        %v1081 = vrot.slane %v1029, %v1080
        %v1082 = vmul.f32 %v1074, %v1081
        %v1083 = vmul.f32 %v1075, %v1081
        %v1084 = vmul.f32 %v1076, %v1081
        %v1085 = vmul.f32 %v1077, %v1081
        %v1086 = vlaneseq
        %v1087 = vshrl.u32 %v1086, 7
        %v1088 = vsub.s32 0, %v1087
        %v1089 = vrot.slane %v1030, %v1088
        %v1090 = vadd.f32 %v1082, %v1089
        %v1091 = vadd.f32 %v1083, %v1089
        %v1092 = vadd.f32 %v1084, %v1089
        %v1093 = vadd.f32 %v1085, %v1089
        %v1094 = vld [vmem:[%s806] sm:$0xff]
        %v1095 = vld [vmem:[%s806 + $0x8] sm:$0xff]
        %v1096 = vld [vmem:[%s806 + $0x10] sm:$0xff]
        %v1097 = vld [vmem:[%s806 + $0x18] sm:$0xff]
        %v1098 = vld [vmem:[%s806 + $0x20] sm:$0xff]
        %v1099 = vld [vmem:[%s806 + $0x28] sm:$0xff]
        %v1100 = vld [vmem:[%s806 + $0x30] sm:$0xff]
        %v1101 = vld [vmem:[%s806 + $0x38] sm:$0xff]
        %v1102 = vld [vmem:[%s806 + $0x40] sm:$0xff]
        %v1103 = vld [vmem:[%s806 + $0x48] sm:$0xff]
        %v1104 = vld [vmem:[%s806 + $0x50] sm:$0xff]
        %v1105 = vld [vmem:[%s806 + $0x58] sm:$0xff]
        %v1106 = vld [vmem:[%s806 + $0x60] sm:$0xff]
        %v1107 = vld [vmem:[%s806 + $0x68] sm:$0xff]
        %v1108 = vld [vmem:[%s806 + $0x70] sm:$0xff]
        %v1109 = vld [vmem:[%s806 + $0x78] sm:$0xff]
        %v1110 = vpack.c.bf16 %v1091, %v1090
        %v1111 = vpack.c.bf16 %v1093, %v1092
        %v1113 = vlaneseq
        %v1114 = vshrl.u32 %v1113, 7
        %v1115 = vsub.s32 0, %v1114
        %v1116 = vrot.slane %v1031, %v1115
        %v1117 = vlaneseq
        %v1118 = vshrl.u32 %v1117, 7
        %v1119 = vsub.s32 2, %v1118
        %v1120 = vrot.slane %v1031, %v1119
        %v1123 = vlaneseq
        %v1124 = vshrl.u32 %v1123, 7
        %v1125 = vsub.s32 0, %v1124
        %v1126 = vrot.slane %v1116, %v1125
        %v1127 = vlaneseq
        %v1128 = vshrl.u32 %v1127, 7
        %v1129 = vsub.s32 0, %v1128
        %v1130 = vrot.slane %v1120, %v1129
        %v1147 = vunpack.c.l.b16 %v1094
        %v1148 = vunpack.c.h.b16 %v1094
        %v1149 = vunpack.c.l.b16 %v1095
        %v1150 = vunpack.c.h.b16 %v1095
        %v1151 = vunpack.c.l.b16 %v1096
        %v1152 = vunpack.c.h.b16 %v1096
        %v1153 = vunpack.c.l.b16 %v1097
        %v1154 = vunpack.c.h.b16 %v1097
        %v1155 = vunpack.c.l.b16 %v1098
        %v1156 = vunpack.c.h.b16 %v1098
        %v1157 = vunpack.c.l.b16 %v1099
        %v1158 = vunpack.c.h.b16 %v1099
        %v1159 = vunpack.c.l.b16 %v1100
        %v1160 = vunpack.c.h.b16 %v1100
        %v1161 = vunpack.c.l.b16 %v1101
        %v1162 = vunpack.c.h.b16 %v1101
        %v1163 = vunpack.c.l.b16 %v1102
        %v1164 = vunpack.c.h.b16 %v1102
        %v1165 = vunpack.c.l.b16 %v1103
        %v1166 = vunpack.c.h.b16 %v1103
        %v1167 = vunpack.c.l.b16 %v1104
        %v1168 = vunpack.c.h.b16 %v1104
        %v1169 = vunpack.c.l.b16 %v1105
        %v1170 = vunpack.c.h.b16 %v1105
        %v1171 = vunpack.c.l.b16 %v1106
        %v1172 = vunpack.c.h.b16 %v1106
        %v1173 = vunpack.c.l.b16 %v1107
        %v1174 = vunpack.c.h.b16 %v1107
        %v1175 = vunpack.c.l.b16 %v1108
        %v1176 = vunpack.c.h.b16 %v1108
        %v1177 = vunpack.c.l.b16 %v1109
        %v1178 = vunpack.c.h.b16 %v1109
        %v1179 = vpack.c.b16 %v1149, %v1147
        %v1180 = vpack.c.b16 %v1150, %v1148
        %v1181 = vpack.c.b16 %v1153, %v1151
        %v1182 = vpack.c.b16 %v1154, %v1152
        %v1183 = vpack.c.b16 %v1157, %v1155
        %v1184 = vpack.c.b16 %v1158, %v1156
        %v1185 = vpack.c.b16 %v1161, %v1159
        %v1186 = vpack.c.b16 %v1162, %v1160
        %v1187 = vpack.c.b16 %v1165, %v1163
        %v1188 = vpack.c.b16 %v1166, %v1164
        %v1189 = vpack.c.b16 %v1169, %v1167
        %v1190 = vpack.c.b16 %v1170, %v1168
        %v1191 = vpack.c.b16 %v1173, %v1171
        %v1192 = vpack.c.b16 %v1174, %v1172
        %v1193 = vpack.c.b16 %v1177, %v1175
        %v1194 = vpack.c.b16 %v1178, %v1176
        %1211 = vmatprep.subr.bf16.mxu0 %v1180
        %1212 = vmatpush1.bf16.msra.mxu0 %v1179
        %1213 = vmatprep.subr.bf16.mxu0 %v1182
        %1214 = vmatpush1.bf16.msra.mxu0 %v1181
        %1215 = vmatprep.subr.bf16.mxu0 %v1184
        %1216 = vmatpush1.bf16.msra.mxu0 %v1183
        %1217 = vmatprep.subr.bf16.mxu0 %v1186
        %1218 = vmatpush1.bf16.msra.mxu0 %v1185
        %1219 = vmatprep.subr.bf16.mxu0 %v1188
        %1220 = vmatpush1.bf16.msra.mxu0 %v1187
        %1221 = vmatprep.subr.bf16.mxu0 %v1190
        %1222 = vmatpush1.bf16.msra.mxu0 %v1189
        %1223 = vmatprep.subr.bf16.mxu0 %v1192
        %1224 = vmatpush1.bf16.msra.mxu0 %v1191
        %1225 = vmatprep.subr.bf16.mxu0 %v1194
        %1226 = vmatpush1.bf16.msra.mxu0 %v1193
        %1227 = vmatprep.subr.bf16.mxu0 0
        %1228 = vmatpush1.bf16.msra.mxu0 0
        %1229 = vmatprep.subr.bf16.mxu0 0
        %1230 = vmatpush1.bf16.msra.mxu0 0
        %1231 = vmatprep.subr.bf16.mxu0 0
        %1232 = vmatpush1.bf16.msra.mxu0 0
        %1233 = vmatprep.subr.bf16.mxu0 0
        %1234 = vmatpush1.bf16.msra.mxu0 0
        %1235 = vmatprep.subr.bf16.mxu0 0
        %1236 = vmatpush1.bf16.msra.mxu0 0
        %1237 = vmatprep.subr.bf16.mxu0 0
        %1238 = vmatpush1.bf16.msra.mxu0 0
        %1239 = vmatprep.subr.bf16.mxu0 0
        %1240 = vmatpush1.bf16.msra.mxu0 0
        %1241 = vmatprep.subr.bf16.mxu0 0
        %1242 = vmatpush1.bf16.msra.mxu0 0
        %1243 = vmatprep.mubr.bf16.mxu0 0
        %1244 = vmatmul.mubr.bf16.gmra.mrb[0].mxu0 %v1110
        %v1245 = vpop.f32.mrb[0].mxu0
        %v1246 = vadd.f32 %v1126, %v1245
        %v1247 = vpop.f32.mrb[0].mxu0
        %v1248 = vadd.f32 %v1130, %v1247
        %v1249 = vpop.f32.mrb[0].mxu0
        %v1250 = vadd.f32 %v1126, %v1249
        %v1251 = vpop.f32.mrb[0].mxu0
        %v1252 = vadd.f32 %v1130, %v1251
        %1253 = vmatprep.mubr.bf16.mxu0 0
        %1254 = vmatmul.mubr.bf16.gmra.mrb[0].mxu0 %v1111
        %v1255 = vpop.f32.mrb[0].mxu0
        %v1256 = vadd.f32 %v1126, %v1255
        %v1257 = vpop.f32.mrb[0].mxu0
        %v1258 = vadd.f32 %v1130, %v1257
        %v1259 = vpop.f32.mrb[0].mxu0
        %v1260 = vadd.f32 %v1126, %v1259
        %v1261 = vpop.f32.mrb[0].mxu0
        %v1262 = vadd.f32 %v1130, %v1261
        %1263 = vdwg.mxu0
        %v1264 = vsub.f32 0.0, %v1246
        %v1265 = vsub.f32 0.0, %v1248
        %v1266 = vsub.f32 0.0, %v1250
        %v1267 = vsub.f32 0.0, %v1252
        %v1268 = vsub.f32 0.0, %v1256
        %v1269 = vsub.f32 0.0, %v1258
        %v1270 = vsub.f32 0.0, %v1260
        %v1271 = vsub.f32 0.0, %v1262
        %v1272 = vmul.f32 %v1264, 1.442695
        %v1273 = vpow.pop %v1272
        %v1274 = vmul.f32 %v1265, 1.442695
        %v1275 = vpow.pop %v1274
        %v1276 = vmul.f32 %v1266, 1.442695
        %v1277 = vpow.pop %v1276
        %v1278 = vmul.f32 %v1267, 1.442695
        %v1279 = vpow.pop %v1278
        %v1280 = vmul.f32 %v1268, 1.442695
        %v1281 = vpow.pop %v1280
        %v1282 = vmul.f32 %v1269, 1.442695
        %v1283 = vpow.pop %v1282
        %v1284 = vmul.f32 %v1270, 1.442695
        %v1285 = vpow.pop %v1284
        %v1286 = vmul.f32 %v1271, 1.442695
        %v1287 = vpow.pop %v1286
        %v1288 = vadd.f32 %v1273, 1.0
        %v1289 = vadd.f32 %v1275, 1.0
        %v1290 = vadd.f32 %v1277, 1.0
        %v1291 = vadd.f32 %v1279, 1.0
        %v1292 = vadd.f32 %v1281, 1.0
        %v1293 = vadd.f32 %v1283, 1.0
        %v1294 = vadd.f32 %v1285, 1.0
        %v1295 = vadd.f32 %v1287, 1.0
        %v1296 = vrcp.pop %v1288
        %v1297 = vmul.f32 1.0, %v1296
        %v1298 = vrcp.pop %v1289
        %v1299 = vmul.f32 1.0, %v1298
        %v1300 = vrcp.pop %v1290
        %v1301 = vmul.f32 1.0, %v1300
        %v1302 = vrcp.pop %v1291
        %v1303 = vmul.f32 1.0, %v1302
        %v1304 = vrcp.pop %v1292
        %v1305 = vmul.f32 1.0, %v1304
        %v1306 = vrcp.pop %v1293
        %v1307 = vmul.f32 1.0, %v1306
        %v1308 = vrcp.pop %v1294
        %v1309 = vmul.f32 1.0, %v1308
        %v1310 = vrcp.pop %v1295
        %v1311 = vmul.f32 1.0, %v1310
        %v1312 = vmul.f32 %v1246, %v1297
        %v1313 = vmul.f32 %v1248, %v1299
        %v1314 = vmul.f32 %v1250, %v1301
        %v1315 = vmul.f32 %v1252, %v1303
        %v1316 = vmul.f32 %v1256, %v1305
        %v1317 = vmul.f32 %v1258, %v1307
        %v1318 = vmul.f32 %v1260, %v1309
        %v1319 = vmul.f32 %v1262, %v1311
        %v1320 = vld [vmem:[%s815] sm:$0xf]
        %v1321 = vld [vmem:[%s815 + $0x4] sm:$0xf]
        %v1322 = vld [vmem:[%s815 + $0x8] sm:$0xf]
        %v1323 = vld [vmem:[%s815 + $0xc] sm:$0xf]
        %v1324 = vld [vmem:[%s815 + $0x10] sm:$0xf]
        %v1325 = vld [vmem:[%s815 + $0x14] sm:$0xf]
        %v1326 = vld [vmem:[%s815 + $0x18] sm:$0xf]
        %v1327 = vld [vmem:[%s815 + $0x1c] sm:$0xf]
        %v1328 = vld [vmem:[%s815 + $0x20] sm:$0xf]
        %v1329 = vld [vmem:[%s815 + $0x24] sm:$0xf]
        %v1330 = vld [vmem:[%s815 + $0x28] sm:$0xf]
        %v1331 = vld [vmem:[%s815 + $0x2c] sm:$0xf]
        %v1332 = vld [vmem:[%s815 + $0x30] sm:$0xf]
        %v1333 = vld [vmem:[%s815 + $0x34] sm:$0xf]
        %v1334 = vld [vmem:[%s815 + $0x38] sm:$0xf]
        %v1335 = vld [vmem:[%s815 + $0x3c] sm:$0xf]
        %v1336 = vld [vmem:[%s815 + $0x40] sm:$0xf]
        %v1337 = vld [vmem:[%s815 + $0x44] sm:$0xf]
        %v1338 = vld [vmem:[%s815 + $0x48] sm:$0xf]
        %v1339 = vld [vmem:[%s815 + $0x4c] sm:$0xf]
        %v1340 = vld [vmem:[%s815 + $0x50] sm:$0xf]
        %v1341 = vld [vmem:[%s815 + $0x54] sm:$0xf]
        %v1342 = vld [vmem:[%s815 + $0x58] sm:$0xf]
        %v1343 = vld [vmem:[%s815 + $0x5c] sm:$0xf]
        %v1344 = vld [vmem:[%s815 + $0x60] sm:$0xf]
        %v1345 = vld [vmem:[%s815 + $0x64] sm:$0xf]
        %v1346 = vld [vmem:[%s815 + $0x68] sm:$0xf]
        %v1347 = vld [vmem:[%s815 + $0x6c] sm:$0xf]
        %v1348 = vld [vmem:[%s815 + $0x70] sm:$0xf]
        %v1349 = vld [vmem:[%s815 + $0x74] sm:$0xf]
        %v1350 = vld [vmem:[%s815 + $0x78] sm:$0xf]
        %v1351 = vld [vmem:[%s815 + $0x7c] sm:$0xf]
        %v1352 = vpack.c.bf16 %v1314, %v1312
        %v1353 = vpack.c.bf16 %v1315, %v1313
        %v1354 = vpack.c.bf16 %v1318, %v1316
        %v1355 = vpack.c.bf16 %v1319, %v1317
        %v1356 = vlaneseq
        %v1357 = vshrl.u32 %v1356, 7
        %v1358 = vsub.s32 0, %v1357
        %v1359 = vrot.slane %v1032, %v1358
        %v1392 = vunpack.c.l.b16 %v1320
        %v1393 = vunpack.c.l.b16 %v1321
        %v1394 = vunpack.c.l.b16 %v1322
        %v1395 = vunpack.c.l.b16 %v1323
        %v1396 = vunpack.c.l.b16 %v1324
        %v1397 = vunpack.c.l.b16 %v1325
        %v1398 = vunpack.c.l.b16 %v1326
        %v1399 = vunpack.c.l.b16 %v1327
        %v1400 = vunpack.c.l.b16 %v1328
        %v1401 = vunpack.c.l.b16 %v1329
        %v1402 = vunpack.c.l.b16 %v1330
        %v1403 = vunpack.c.l.b16 %v1331
        %v1404 = vunpack.c.l.b16 %v1332
        %v1405 = vunpack.c.l.b16 %v1333
        %v1406 = vunpack.c.l.b16 %v1334
        %v1407 = vunpack.c.l.b16 %v1335
        %v1408 = vunpack.c.l.b16 %v1336
        %v1409 = vunpack.c.l.b16 %v1337
        %v1410 = vunpack.c.l.b16 %v1338
        %v1411 = vunpack.c.l.b16 %v1339
        %v1412 = vunpack.c.l.b16 %v1340
        %v1413 = vunpack.c.l.b16 %v1341
        %v1414 = vunpack.c.l.b16 %v1342
        %v1415 = vunpack.c.l.b16 %v1343
        %v1416 = vunpack.c.l.b16 %v1344
        %v1417 = vunpack.c.l.b16 %v1345
        %v1418 = vunpack.c.l.b16 %v1346
        %v1419 = vunpack.c.l.b16 %v1347
        %v1420 = vunpack.c.l.b16 %v1348
        %v1421 = vunpack.c.l.b16 %v1349
        %v1422 = vunpack.c.l.b16 %v1350
        %v1423 = vunpack.c.l.b16 %v1351
        %v1424 = vpack.c.b16 %v1393, %v1392
        %v1425 = vpack.c.b16 %v1395, %v1394
        %v1426 = vpack.c.b16 %v1397, %v1396
        %v1427 = vpack.c.b16 %v1399, %v1398
        %v1428 = vpack.c.b16 %v1401, %v1400
        %v1429 = vpack.c.b16 %v1403, %v1402
        %v1430 = vpack.c.b16 %v1405, %v1404
        %v1431 = vpack.c.b16 %v1407, %v1406
        %v1432 = vpack.c.b16 %v1409, %v1408
        %v1433 = vpack.c.b16 %v1411, %v1410
        %v1434 = vpack.c.b16 %v1413, %v1412
        %v1435 = vpack.c.b16 %v1415, %v1414
        %v1436 = vpack.c.b16 %v1417, %v1416
        %v1437 = vpack.c.b16 %v1419, %v1418
        %v1438 = vpack.c.b16 %v1421, %v1420
        %v1439 = vpack.c.b16 %v1423, %v1422
        %1456 = vmatprep.subr.bf16.mxu0 0
        %1457 = vmatpush1.bf16.msra.mxu0 %v1424
        %1458 = vmatprep.subr.bf16.mxu0 0
        %1459 = vmatpush1.bf16.msra.mxu0 %v1425
        %1460 = vmatprep.subr.bf16.mxu0 0
        %1461 = vmatpush1.bf16.msra.mxu0 %v1426
        %1462 = vmatprep.subr.bf16.mxu0 0
        %1463 = vmatpush1.bf16.msra.mxu0 %v1427
        %1464 = vmatprep.subr.bf16.mxu0 0
        %1465 = vmatpush1.bf16.msra.mxu0 %v1428
        %1466 = vmatprep.subr.bf16.mxu0 0
        %1467 = vmatpush1.bf16.msra.mxu0 %v1429
        %1468 = vmatprep.subr.bf16.mxu0 0
        %1469 = vmatpush1.bf16.msra.mxu0 %v1430
        %1470 = vmatprep.subr.bf16.mxu0 0
        %1471 = vmatpush1.bf16.msra.mxu0 %v1431
        %1472 = vmatprep.subr.bf16.mxu0 0
        %1473 = vmatpush1.bf16.msra.mxu0 %v1432
        %1474 = vmatprep.subr.bf16.mxu0 0
        %1475 = vmatpush1.bf16.msra.mxu0 %v1433
        %1476 = vmatprep.subr.bf16.mxu0 0
        %1477 = vmatpush1.bf16.msra.mxu0 %v1434
        %1478 = vmatprep.subr.bf16.mxu0 0
        %1479 = vmatpush1.bf16.msra.mxu0 %v1435
        %1480 = vmatprep.subr.bf16.mxu0 0
        %1481 = vmatpush1.bf16.msra.mxu0 %v1436
        %1482 = vmatprep.subr.bf16.mxu0 0
        %1483 = vmatpush1.bf16.msra.mxu0 %v1437
        %1484 = vmatprep.subr.bf16.mxu0 0
        %1485 = vmatpush1.bf16.msra.mxu0 %v1438
        %1486 = vmatprep.subr.bf16.mxu0 0
        %1487 = vmatpush1.bf16.msra.mxu0 %v1439
        %1488 = vmatprep.mubr.bf16.mxu0 %v1353
        %1489 = vmatmul.mubr.bf16.gmra.mrb[0].mxu0 %v1352
        %v1490 = vpop.f32.mrb[0].mxu0
        %v1491 = vadd.f32 %v1359, %v1490
        %v1492 = vpop.f32.mrb[0].mxu0
        %v1493 = vpop.f32.mrb[0].mxu0
        %v1494 = vadd.f32 %v1359, %v1493
        %v1495 = vpop.f32.mrb[0].mxu0
        %1496 = vmatprep.mubr.bf16.mxu0 %v1355
        %1497 = vmatmul.mubr.bf16.gmra.mrb[0].mxu0 %v1354
        %v1498 = vpop.f32.mrb[0].mxu0
        %v1499 = vadd.f32 %v1359, %v1498
        %v1500 = vpop.f32.mrb[0].mxu0
        %v1501 = vpop.f32.mrb[0].mxu0
        %v1502 = vadd.f32 %v1359, %v1501
        %v1503 = vpop.f32.mrb[0].mxu0
        %1504 = vdwg.mxu0
        %v1505 = vmul.f32 %v1491, 0.5
        %v1506 = vmul.f32 %v1494, 0.5
        %v1507 = vmul.f32 %v1499, 0.5
        %v1508 = vmul.f32 %v1502, 0.5
        %v1509 = vadd.f32 %v1025, %v1505
        %v1510 = vadd.f32 %v1026, %v1506
        %v1511 = vadd.f32 %v1027, %v1507
        %v1512 = vadd.f32 %v1028, %v1508
        %1513 = vadd.xlane.f32.xlu0 %v1509
        %v1514 = vpop.xlane.xlu0 %1513
        %1515 = vadd.xlane.f32.xlu0 %v1510
        %v1516 = vpop.xlane.xlu0 %1515
        %1517 = vadd.xlane.f32.xlu0 %v1511
        %v1518 = vpop.xlane.xlu0 %1517
        %1519 = vadd.xlane.f32.xlu0 %v1512
        %v1520 = vpop.xlane.xlu0 %1519
        %v1521 = vmul.f32 %v1514, %v1041
        %v1522 = vmul.f32 %v1516, %v1041
        %v1523 = vmul.f32 %v1518, %v1041
        %v1524 = vmul.f32 %v1520, %v1041
        %v1525 = vsub.f32 %v1509, %v1521
        %v1526 = vsub.f32 %v1510, %v1522
        %v1527 = vsub.f32 %v1511, %v1523
        %v1528 = vsub.f32 %v1512, %v1524
        %v1529 = vmul.f32 %v1525, %v1525
        %v1530 = vmul.f32 %v1526, %v1526
        %v1531 = vmul.f32 %v1527, %v1527
        %v1532 = vmul.f32 %v1528, %v1528
        %1533 = vadd.xlane.f32.xlu0 %v1529
        %v1534 = vpop.xlane.xlu0 %1533
        %1535 = vadd.xlane.f32.xlu0 %v1530
        %v1536 = vpop.xlane.xlu0 %1535
        %1537 = vadd.xlane.f32.xlu0 %v1531
        %v1538 = vpop.xlane.xlu0 %1537
        %1539 = vadd.xlane.f32.xlu0 %v1532
        %v1540 = vpop.xlane.xlu0 %1539
        %v1541 = vmul.f32 %v1534, %v1041
        %v1542 = vmul.f32 %v1536, %v1041
        %v1543 = vmul.f32 %v1538, %v1041
        %v1544 = vmul.f32 %v1540, %v1041
        %v1545 = vadd.f32 %v1541, 1e-05
        %v1546 = vadd.f32 %v1542, 1e-05
        %v1547 = vadd.f32 %v1543, 1e-05
        %v1548 = vadd.f32 %v1544, 1e-05
        %v1549 = vrsqrt.pop %v1545
        %v1550 = vrsqrt.pop %v1546
        %v1551 = vrsqrt.pop %v1547
        %v1552 = vrsqrt.pop %v1548
        %v1553 = vmul.f32 %v1525, %v1549
        %v1554 = vmul.f32 %v1526, %v1550
        %v1555 = vmul.f32 %v1527, %v1551
        %v1556 = vmul.f32 %v1528, %v1552
        %v1557 = vlaneseq
        %v1558 = vshrl.u32 %v1557, 7
        %v1559 = vsub.s32 1, %v1558
        %v1560 = vrot.slane %v1029, %v1559
        %v1561 = vmul.f32 %v1553, %v1560
        %v1562 = vmul.f32 %v1554, %v1560
        %v1563 = vmul.f32 %v1555, %v1560
        %v1564 = vmul.f32 %v1556, %v1560
        %v1565 = vlaneseq
        %v1566 = vshrl.u32 %v1565, 7
        %v1567 = vsub.s32 1, %v1566
        %v1568 = vrot.slane %v1030, %v1567
        %v1569 = vadd.f32 %v1561, %v1568
        %v1570 = vadd.f32 %v1562, %v1568
        %v1571 = vadd.f32 %v1563, %v1568
        %v1572 = vadd.f32 %v1564, %v1568
        %v1573 = vld [vmem:[%s824] sm:$0xff]
        %v1574 = vld [vmem:[%s824 + $0x8] sm:$0xf]
        %v1575 = vld [vmem:[%s824 + $0xc] sm:$0xff]
        %v1576 = vld [vmem:[%s824 + $0x14] sm:$0xf]
        %v1577 = vld [vmem:[%s824 + $0x18] sm:$0xff]
        %v1578 = vld [vmem:[%s824 + $0x20] sm:$0xf]
        %v1579 = vld [vmem:[%s824 + $0x24] sm:$0xff]
        %v1580 = vld [vmem:[%s824 + $0x2c] sm:$0xf]
        %v1581 = vld [vmem:[%s824 + $0x30] sm:$0xff]
        %v1582 = vld [vmem:[%s824 + $0x38] sm:$0xf]
        %v1583 = vld [vmem:[%s824 + $0x3c] sm:$0xff]
        %v1584 = vld [vmem:[%s824 + $0x44] sm:$0xf]
        %v1585 = vld [vmem:[%s824 + $0x48] sm:$0xff]
        %v1586 = vld [vmem:[%s824 + $0x50] sm:$0xf]
        %v1587 = vld [vmem:[%s824 + $0x54] sm:$0xff]
        %v1588 = vld [vmem:[%s824 + $0x5c] sm:$0xf]
        %v1589 = vld [vmem:[%s824 + $0x60] sm:$0xff]
        %v1590 = vld [vmem:[%s824 + $0x68] sm:$0xf]
        %v1591 = vld [vmem:[%s824 + $0x6c] sm:$0xff]
        %v1592 = vld [vmem:[%s824 + $0x74] sm:$0xf]
        %v1593 = vld [vmem:[%s824 + $0x78] sm:$0xff]
        %v1594 = vld [vmem:[%s824 + $0x80] sm:$0xf]
        %v1595 = vld [vmem:[%s824 + $0x84] sm:$0xff]
        %v1596 = vld [vmem:[%s824 + $0x8c] sm:$0xf]
        %v1597 = vld [vmem:[%s824 + $0x90] sm:$0xff]
        %v1598 = vld [vmem:[%s824 + $0x98] sm:$0xf]
        %v1599 = vld [vmem:[%s824 + $0x9c] sm:$0xff]
        %v1600 = vld [vmem:[%s824 + $0xa4] sm:$0xf]
        %v1601 = vld [vmem:[%s824 + $0xa8] sm:$0xff]
        %v1602 = vld [vmem:[%s824 + $0xb0] sm:$0xf]
        %v1603 = vld [vmem:[%s824 + $0xb4] sm:$0xff]
        %v1604 = vld [vmem:[%s824 + $0xbc] sm:$0xf]
        %v1605 = vpack.c.bf16 %v1570, %v1569
        %v1606 = vpack.c.bf16 %v1572, %v1571
        %v1607 = vld [vmem:[%s990] sm:$0x7]
        %v1609 = vlaneseq
        %v1610 = vshrl.u32 %v1609, 7
        %v1611 = vsub.s32 0, %v1610
        %v1612 = vrot.slane %v1607, %v1611
        %v1613 = vlaneseq
        %v1614 = vshrl.u32 %v1613, 7
        %v1615 = vsub.s32 1, %v1614
        %v1616 = vrot.slane %v1607, %v1615
        %v1617 = vlaneseq
        %v1618 = vshrl.u32 %v1617, 7
        %v1619 = vsub.s32 2, %v1618
        %v1620 = vrot.slane %v1607, %v1619
        %v1656 = vunpack.c.l.b16 %v1573
        %v1657 = vunpack.c.h.b16 %v1573
        %v1658 = vunpack.c.l.b16 %v1574
        %v1659 = vunpack.c.l.b16 %v1575
        %v1660 = vunpack.c.h.b16 %v1575
        %v1661 = vunpack.c.l.b16 %v1576
        %v1662 = vunpack.c.l.b16 %v1577
        %v1663 = vunpack.c.h.b16 %v1577
        %v1664 = vunpack.c.l.b16 %v1578
        %v1665 = vunpack.c.l.b16 %v1579
        %v1666 = vunpack.c.h.b16 %v1579
        %v1667 = vunpack.c.l.b16 %v1580
        %v1668 = vunpack.c.l.b16 %v1581
        %v1669 = vunpack.c.h.b16 %v1581
        %v1670 = vunpack.c.l.b16 %v1582
        %v1671 = vunpack.c.l.b16 %v1583
        %v1672 = vunpack.c.h.b16 %v1583
        %v1673 = vunpack.c.l.b16 %v1584
        %v1674 = vunpack.c.l.b16 %v1585
        %v1675 = vunpack.c.h.b16 %v1585
        %v1676 = vunpack.c.l.b16 %v1586
        %v1677 = vunpack.c.l.b16 %v1587
        %v1678 = vunpack.c.h.b16 %v1587
        %v1679 = vunpack.c.l.b16 %v1588
        %v1680 = vunpack.c.l.b16 %v1589
        %v1681 = vunpack.c.h.b16 %v1589
        %v1682 = vunpack.c.l.b16 %v1590
        %v1683 = vunpack.c.l.b16 %v1591
        %v1684 = vunpack.c.h.b16 %v1591
        %v1685 = vunpack.c.l.b16 %v1592
        %v1686 = vunpack.c.l.b16 %v1593
        %v1687 = vunpack.c.h.b16 %v1593
        %v1688 = vunpack.c.l.b16 %v1594
        %v1689 = vunpack.c.l.b16 %v1595
        %v1690 = vunpack.c.h.b16 %v1595
        %v1691 = vunpack.c.l.b16 %v1596
        %v1692 = vunpack.c.l.b16 %v1597
        %v1693 = vunpack.c.h.b16 %v1597
        %v1694 = vunpack.c.l.b16 %v1598
        %v1695 = vunpack.c.l.b16 %v1599
        %v1696 = vunpack.c.h.b16 %v1599
        %v1697 = vunpack.c.l.b16 %v1600
        %v1698 = vunpack.c.l.b16 %v1601
        %v1699 = vunpack.c.h.b16 %v1601
        %v1700 = vunpack.c.l.b16 %v1602
        %v1701 = vunpack.c.l.b16 %v1603
        %v1702 = vunpack.c.h.b16 %v1603
        %v1703 = vunpack.c.l.b16 %v1604
        %v1704 = vpack.c.b16 %v1659, %v1656
        %v1705 = vpack.c.b16 %v1660, %v1657
        %v1706 = vpack.c.b16 %v1661, %v1658
        %v1707 = vpack.c.b16 %v1665, %v1662
        %v1708 = vpack.c.b16 %v1666, %v1663
        %v1709 = vpack.c.b16 %v1667, %v1664
        %v1710 = vpack.c.b16 %v1671, %v1668
        %v1711 = vpack.c.b16 %v1672, %v1669
        %v1712 = vpack.c.b16 %v1673, %v1670
        %v1713 = vpack.c.b16 %v1677, %v1674
        %v1714 = vpack.c.b16 %v1678, %v1675
        %v1715 = vpack.c.b16 %v1679, %v1676
        %v1716 = vpack.c.b16 %v1683, %v1680
        %v1717 = vpack.c.b16 %v1684, %v1681
        %v1718 = vpack.c.b16 %v1685, %v1682
        %v1719 = vpack.c.b16 %v1689, %v1686
        %v1720 = vpack.c.b16 %v1690, %v1687
        %v1721 = vpack.c.b16 %v1691, %v1688
        %v1722 = vpack.c.b16 %v1695, %v1692
        %v1723 = vpack.c.b16 %v1696, %v1693
        %v1724 = vpack.c.b16 %v1697, %v1694
        %v1725 = vpack.c.b16 %v1701, %v1698
        %v1726 = vpack.c.b16 %v1702, %v1699
        %v1727 = vpack.c.b16 %v1703, %v1700
        %1752 = vmatprep.subr.bf16.mxu0 %v1705
        %1753 = vmatpush1.bf16.msra.mxu0 %v1704
        %1754 = vmatprep.subr.bf16.mxu0 %v1708
        %1755 = vmatpush1.bf16.msra.mxu0 %v1707
        %1756 = vmatprep.subr.bf16.mxu0 %v1711
        %1757 = vmatpush1.bf16.msra.mxu0 %v1710
        %1758 = vmatprep.subr.bf16.mxu0 %v1714
        %1759 = vmatpush1.bf16.msra.mxu0 %v1713
        %1760 = vmatprep.subr.bf16.mxu0 %v1717
        %1761 = vmatpush1.bf16.msra.mxu0 %v1716
        %1762 = vmatprep.subr.bf16.mxu0 %v1720
        %1763 = vmatpush1.bf16.msra.mxu0 %v1719
        %1764 = vmatprep.subr.bf16.mxu0 %v1723
        %1765 = vmatpush1.bf16.msra.mxu0 %v1722
        %1766 = vmatprep.subr.bf16.mxu0 %v1726
        %1767 = vmatpush1.bf16.msra.mxu0 %v1725
        %1768 = vmatprep.subr.bf16.mxu0 0
        %1769 = vmatpush1.bf16.msra.mxu0 0
        %1770 = vmatprep.subr.bf16.mxu0 0
        %1771 = vmatpush1.bf16.msra.mxu0 0
        %1772 = vmatprep.subr.bf16.mxu0 0
        %1773 = vmatpush1.bf16.msra.mxu0 0
        %1774 = vmatprep.subr.bf16.mxu0 0
        %1775 = vmatpush1.bf16.msra.mxu0 0
        %1776 = vmatprep.subr.bf16.mxu0 0
        %1777 = vmatpush1.bf16.msra.mxu0 0
        %1778 = vmatprep.subr.bf16.mxu0 0
        %1779 = vmatpush1.bf16.msra.mxu0 0
        %1780 = vmatprep.subr.bf16.mxu0 0
        %1781 = vmatpush1.bf16.msra.mxu0 0
        %1782 = vmatprep.subr.bf16.mxu0 0
        %1783 = vmatpush1.bf16.msra.mxu0 0
        %1784 = vmatprep.mubr.bf16.mxu0 0
        %1785 = vmatmul.mubr.bf16.gmra.mrb[0].mxu0 %v1605
        %v1786 = vpop.f32.mrb[0].mxu0
        %v1787 = vadd.f32 %v1612, %v1786
        %v1788 = vpop.f32.mrb[0].mxu0
        %v1789 = vadd.f32 %v1616, %v1788
        %v1790 = vpop.f32.mrb[0].mxu0
        %v1791 = vadd.f32 %v1612, %v1790
        %v1792 = vpop.f32.mrb[0].mxu0
        %v1793 = vadd.f32 %v1616, %v1792
        %1794 = vmatprep.mubr.bf16.mxu0 0
        %1795 = vmatmul.mubr.bf16.gmra.mrb[0].mxu0 %v1606
        %v1796 = vpop.f32.mrb[0].mxu0
        %v1797 = vadd.f32 %v1612, %v1796
        %v1798 = vpop.f32.mrb[0].mxu0
        %v1799 = vadd.f32 %v1616, %v1798
        %v1800 = vpop.f32.mrb[0].mxu0
        %v1801 = vadd.f32 %v1612, %v1800
        %v1802 = vpop.f32.mrb[0].mxu0
        %v1803 = vadd.f32 %v1616, %v1802
        %1804 = vdwg.mxu0
        %1805 = vmatprep.subr.bf16.mxu0 0
        %1806 = vmatpush1.bf16.msra.mxu0 %v1706
        %1807 = vmatprep.subr.bf16.mxu0 0
        %1808 = vmatpush1.bf16.msra.mxu0 %v1709
        %1809 = vmatprep.subr.bf16.mxu0 0
        %1810 = vmatpush1.bf16.msra.mxu0 %v1712
        %1811 = vmatprep.subr.bf16.mxu0 0
        %1812 = vmatpush1.bf16.msra.mxu0 %v1715
        %1813 = vmatprep.subr.bf16.mxu0 0
        %1814 = vmatpush1.bf16.msra.mxu0 %v1718
        %1815 = vmatprep.subr.bf16.mxu0 0
        %1816 = vmatpush1.bf16.msra.mxu0 %v1721
        %1817 = vmatprep.subr.bf16.mxu0 0
        %1818 = vmatpush1.bf16.msra.mxu0 %v1724
        %1819 = vmatprep.subr.bf16.mxu0 0
        %1820 = vmatpush1.bf16.msra.mxu0 %v1727
        %1821 = vmatprep.subr.bf16.mxu0 0
        %1822 = vmatpush1.bf16.msra.mxu0 0
        %1823 = vmatprep.subr.bf16.mxu0 0
        %1824 = vmatpush1.bf16.msra.mxu0 0
        %1825 = vmatprep.subr.bf16.mxu0 0
        %1826 = vmatpush1.bf16.msra.mxu0 0
        %1827 = vmatprep.subr.bf16.mxu0 0
        %1828 = vmatpush1.bf16.msra.mxu0 0
        %1829 = vmatprep.subr.bf16.mxu0 0
        %1830 = vmatpush1.bf16.msra.mxu0 0
        %1831 = vmatprep.subr.bf16.mxu0 0
        %1832 = vmatpush1.bf16.msra.mxu0 0
        %1833 = vmatprep.subr.bf16.mxu0 0
        %1834 = vmatpush1.bf16.msra.mxu0 0
        %1835 = vmatprep.subr.bf16.mxu0 0
        %1836 = vmatpush1.bf16.msra.mxu0 0
        %1837 = vmatprep.mubr.bf16.mxu0 0
        %1838 = vmatmul.mubr.bf16.gmra.mrb[0].mxu0 %v1605
        %v1839 = vpop.f32.mrb[0].mxu0
        %v1840 = vadd.f32 %v1620, %v1839
        %v1841 = vpop.f32.mrb[0].mxu0
        %v1842 = vpop.f32.mrb[0].mxu0
        %v1843 = vadd.f32 %v1620, %v1842
        %v1844 = vpop.f32.mrb[0].mxu0
        %1845 = vmatprep.mubr.bf16.mxu0 0
        %1846 = vmatmul.mubr.bf16.gmra.mrb[0].mxu0 %v1606
        %v1847 = vpop.f32.mrb[0].mxu0
        %v1848 = vadd.f32 %v1620, %v1847
        %v1849 = vpop.f32.mrb[0].mxu0
        %v1850 = vpop.f32.mrb[0].mxu0
        %v1851 = vadd.f32 %v1620, %v1850
        %v1852 = vpop.f32.mrb[0].mxu0
        %1853 = vdwg.mxu0
        %v1854 = vmul.f32 %v1787, 0.17677669
        %v1855 = vmul.f32 %v1791, 0.17677669
        %v1856 = vmul.f32 %v1797, 0.17677669
        %v1857 = vmul.f32 %v1801, 0.17677669
        %v1858 = vpack.c.bf16 %v1855, %v1854
        %v1859 = vpack.c.bf16 %v1857, %v1856
        %v1860 = vpack.c.bf16 %v1793, %v1789
        %v1861 = vpack.c.bf16 %v1803, %v1799
        %vm1862 = vcmask 261120
        %v1864 = vsel %vm1862, %v1858, 0
        %v1867 = vsel %vm1862, %v1860, 0
        %1869 = vmatprep.subr.bf16.mxu0 0
        %1870 = vmatpush1.bf16.xpose.msra.mxu0 %v1867
        %1871 = vmatprep.subr.bf16.mxu0 0
        %1872 = vmatpush1.bf16.xpose.msra.mxu0 0
        %1873 = vmatprep.subr.bf16.mxu0 0
        %1874 = vmatpush1.bf16.xpose.msra.mxu0 0
        %1875 = vmatprep.subr.bf16.mxu0 0
        %1876 = vmatpush1.bf16.xpose.msra.mxu0 0
        %1877 = vmatprep.subr.bf16.mxu0 0
        %1878 = vmatpush1.bf16.xpose.msra.mxu0 0
        %1879 = vmatprep.subr.bf16.mxu0 0
        %1880 = vmatpush1.bf16.xpose.msra.mxu0 0
        %1881 = vmatprep.subr.bf16.mxu0 0
        %1882 = vmatpush1.bf16.xpose.msra.mxu0 0
        %1883 = vmatprep.subr.bf16.mxu0 0
        %1884 = vmatpush1.bf16.xpose.msra.mxu0 0
        %1885 = vmatprep.subr.bf16.mxu0 0
        %1886 = vmatpush1.bf16.xpose.msra.mxu0 0
        %1887 = vmatprep.subr.bf16.mxu0 0
        %1888 = vmatpush1.bf16.xpose.msra.mxu0 0
        %1889 = vmatprep.subr.bf16.mxu0 0
        %1890 = vmatpush1.bf16.xpose.msra.mxu0 0
        %1891 = vmatprep.subr.bf16.mxu0 0
        %1892 = vmatpush1.bf16.xpose.msra.mxu0 0
        %1893 = vmatprep.subr.bf16.mxu0 0
        %1894 = vmatpush1.bf16.xpose.msra.mxu0 0
        %1895 = vmatprep.subr.bf16.mxu0 0
        %1896 = vmatpush1.bf16.xpose.msra.mxu0 0
        %1897 = vmatprep.subr.bf16.mxu0 0
        %1898 = vmatpush1.bf16.xpose.msra.mxu0 0
        %1899 = vmatprep.subr.bf16.mxu0 0
        %1900 = vmatpush1.bf16.xpose.msra.mxu0 0
        %1901 = vmatprep.mubr.bf16.mxu0 0
        %1902 = vmatmul.mubr.bf16.gmra.mrb[0].mxu0 %v1864
        %v1903 = vpop.f32.mrb[0].mxu0
        %v1904 = vadd.f32 0.0, %v1903
        %v1905 = vpop.f32.mrb[0].mxu0
        %v1906 = vpop.f32.mrb[0].mxu0
        %v1907 = vadd.f32 0.0, %v1906
        %v1908 = vpop.f32.mrb[0].mxu0
        %1909 = vdwg.mxu0
        %v1911 = vsel %vm1862, %v1859, 0
        %v1914 = vsel %vm1862, %v1861, 0
        %1916 = vmatprep.subr.bf16.mxu0 0
        %1917 = vmatpush1.bf16.xpose.msra.mxu0 %v1914
        %1918 = vmatprep.subr.bf16.mxu0 0
        %1919 = vmatpush1.bf16.xpose.msra.mxu0 0
        %1920 = vmatprep.subr.bf16.mxu0 0
        %1921 = vmatpush1.bf16.xpose.msra.mxu0 0
        %1922 = vmatprep.subr.bf16.mxu0 0
        %1923 = vmatpush1.bf16.xpose.msra.mxu0 0
        %1924 = vmatprep.subr.bf16.mxu0 0
        %1925 = vmatpush1.bf16.xpose.msra.mxu0 0
        %1926 = vmatprep.subr.bf16.mxu0 0
        %1927 = vmatpush1.bf16.xpose.msra.mxu0 0
        %1928 = vmatprep.subr.bf16.mxu0 0
        %1929 = vmatpush1.bf16.xpose.msra.mxu0 0
        %1930 = vmatprep.subr.bf16.mxu0 0
        %1931 = vmatpush1.bf16.xpose.msra.mxu0 0
        %1932 = vmatprep.subr.bf16.mxu0 0
        %1933 = vmatpush1.bf16.xpose.msra.mxu0 0
        %1934 = vmatprep.subr.bf16.mxu0 0
        %1935 = vmatpush1.bf16.xpose.msra.mxu0 0
        %1936 = vmatprep.subr.bf16.mxu0 0
        %1937 = vmatpush1.bf16.xpose.msra.mxu0 0
        %1938 = vmatprep.subr.bf16.mxu0 0
        %1939 = vmatpush1.bf16.xpose.msra.mxu0 0
        %1940 = vmatprep.subr.bf16.mxu0 0
        %1941 = vmatpush1.bf16.xpose.msra.mxu0 0
        %1942 = vmatprep.subr.bf16.mxu0 0
        %1943 = vmatpush1.bf16.xpose.msra.mxu0 0
        %1944 = vmatprep.subr.bf16.mxu0 0
        %1945 = vmatpush1.bf16.xpose.msra.mxu0 0
        %1946 = vmatprep.subr.bf16.mxu0 0
        %1947 = vmatpush1.bf16.xpose.msra.mxu0 0
        %1948 = vmatprep.mubr.bf16.mxu0 0
        %1949 = vmatmul.mubr.bf16.gmra.mrb[0].mxu0 %v1911
        %v1950 = vpop.f32.mrb[0].mxu0
        %v1951 = vadd.f32 0.0, %v1950
        %v1952 = vpop.f32.mrb[0].mxu0
        %v1953 = vpop.f32.mrb[0].mxu0
        %v1954 = vadd.f32 0.0, %v1953
        %v1955 = vpop.f32.mrb[0].mxu0
        %1956 = vdwg.mxu0
        %vm1957 = vcmask 130048
        %v1958 = vsel %vm1957, %v1904, -inf
        %1959 = vmax.xlane.f32.xlu0 %v1958
        %v1960 = vpop.xlane.xlu0 %1959
        %v1961 = vsel %vm1957, %v1907, -inf
        %1962 = vmax.xlane.f32.xlu0 %v1961
        %v1963 = vpop.xlane.xlu0 %1962
        %v1964 = vsel %vm1957, %v1951, -inf
        %1965 = vmax.xlane.f32.xlu0 %v1964
        %v1966 = vpop.xlane.xlu0 %1965
        %v1967 = vsel %vm1957, %v1954, -inf
        %1968 = vmax.xlane.f32.xlu0 %v1967
        %v1969 = vpop.xlane.xlu0 %1968
        %v1970 = vsub.f32 %v1904, %v1960
        %v1971 = vsub.f32 %v1907, %v1963
        %v1972 = vsub.f32 %v1951, %v1966
        %v1973 = vsub.f32 %v1954, %v1969
        %v1974 = vmul.f32 %v1970, 1.442695
        %v1975 = vpow.pop %v1974
        %v1976 = vmul.f32 %v1971, 1.442695
        %v1977 = vpow.pop %v1976
        %v1978 = vmul.f32 %v1972, 1.442695
        %v1979 = vpow.pop %v1978
        %v1980 = vmul.f32 %v1973, 1.442695
        %v1981 = vpow.pop %v1980
        %v1982 = vsel %vm1957, %v1975, 0.0
        %1983 = vadd.xlane.f32.xlu0 %v1982
        %v1984 = vpop.xlane.xlu0 %1983
        %v1985 = vsel %vm1957, %v1977, 0.0
        %1986 = vadd.xlane.f32.xlu0 %v1985
        %v1987 = vpop.xlane.xlu0 %1986
        %v1988 = vsel %vm1957, %v1979, 0.0
        %1989 = vadd.xlane.f32.xlu0 %v1988
        %v1990 = vpop.xlane.xlu0 %1989
        %v1991 = vsel %vm1957, %v1981, 0.0
        %1992 = vadd.xlane.f32.xlu0 %v1991
        %v1993 = vpop.xlane.xlu0 %1992
        %v1994 = vrcp.pop %v1984
        %v1995 = vmul.f32 %v1975, %v1994
        %v1996 = vrcp.pop %v1987
        %v1997 = vmul.f32 %v1977, %v1996
        %v1998 = vrcp.pop %v1990
        %v1999 = vmul.f32 %v1979, %v1998
        %v2000 = vrcp.pop %v1993
        %v2001 = vmul.f32 %v1981, %v2000
        %v2002 = vpack.c.bf16 %v1997, %v1995
        %v2003 = vpack.c.bf16 %v2001, %v1999
        %v2004 = vpack.c.bf16 %v1843, %v1840
        %v2005 = vpack.c.bf16 %v1851, %v1848
        %v2007 = vsel %vm1957, %v2002, 0
        %2009 = vmatprep.subr.bf16.mxu0 0
        %2010 = vmatpush1.bf16.msra.mxu0 %v2004
        %2011 = vmatprep.subr.bf16.mxu0 0
        %2012 = vmatpush1.bf16.msra.mxu0 0
        %2013 = vmatprep.subr.bf16.mxu0 0
        %2014 = vmatpush1.bf16.msra.mxu0 0
        %2015 = vmatprep.subr.bf16.mxu0 0
        %2016 = vmatpush1.bf16.msra.mxu0 0
        %2017 = vmatprep.subr.bf16.mxu0 0
        %2018 = vmatpush1.bf16.msra.mxu0 0
        %2019 = vmatprep.subr.bf16.mxu0 0
        %2020 = vmatpush1.bf16.msra.mxu0 0
        %2021 = vmatprep.subr.bf16.mxu0 0
        %2022 = vmatpush1.bf16.msra.mxu0 0
        %2023 = vmatprep.subr.bf16.mxu0 0
        %2024 = vmatpush1.bf16.msra.mxu0 0
        %2025 = vmatprep.subr.bf16.mxu0 0
        %2026 = vmatpush1.bf16.msra.mxu0 0
        %2027 = vmatprep.subr.bf16.mxu0 0
        %2028 = vmatpush1.bf16.msra.mxu0 0
        %2029 = vmatprep.subr.bf16.mxu0 0
        %2030 = vmatpush1.bf16.msra.mxu0 0
        %2031 = vmatprep.subr.bf16.mxu0 0
        %2032 = vmatpush1.bf16.msra.mxu0 0
        %2033 = vmatprep.subr.bf16.mxu0 0
        %2034 = vmatpush1.bf16.msra.mxu0 0
        %2035 = vmatprep.subr.bf16.mxu0 0
        %2036 = vmatpush1.bf16.msra.mxu0 0
        %2037 = vmatprep.subr.bf16.mxu0 0
        %2038 = vmatpush1.bf16.msra.mxu0 0
        %2039 = vmatprep.subr.bf16.mxu0 0
        %2040 = vmatpush1.bf16.msra.mxu0 0
        %2041 = vmatprep.mubr.bf16.mxu0 0
        %2042 = vmatmul.mubr.bf16.gmra.mrb[0].mxu0 %v2007
        %v2043 = vpop.f32.mrb[0].mxu0
        %v2044 = vadd.f32 0.0, %v2043
        %v2045 = vpop.f32.mrb[0].mxu0
        %v2046 = vpop.f32.mrb[0].mxu0
        %v2047 = vadd.f32 0.0, %v2046
        %v2048 = vpop.f32.mrb[0].mxu0
        %2049 = vdwg.mxu0
        %v2051 = vsel %vm1957, %v2003, 0
        %2053 = vmatprep.subr.bf16.mxu0 0
        %2054 = vmatpush1.bf16.msra.mxu0 %v2005
        %2055 = vmatprep.subr.bf16.mxu0 0
        %2056 = vmatpush1.bf16.msra.mxu0 0
        %2057 = vmatprep.subr.bf16.mxu0 0
        %2058 = vmatpush1.bf16.msra.mxu0 0
        %2059 = vmatprep.subr.bf16.mxu0 0
        %2060 = vmatpush1.bf16.msra.mxu0 0
        %2061 = vmatprep.subr.bf16.mxu0 0
        %2062 = vmatpush1.bf16.msra.mxu0 0
        %2063 = vmatprep.subr.bf16.mxu0 0
        %2064 = vmatpush1.bf16.msra.mxu0 0
        %2065 = vmatprep.subr.bf16.mxu0 0
        %2066 = vmatpush1.bf16.msra.mxu0 0
        %2067 = vmatprep.subr.bf16.mxu0 0
        %2068 = vmatpush1.bf16.msra.mxu0 0
        %2069 = vmatprep.subr.bf16.mxu0 0
        %2070 = vmatpush1.bf16.msra.mxu0 0
        %2071 = vmatprep.subr.bf16.mxu0 0
        %2072 = vmatpush1.bf16.msra.mxu0 0
        %2073 = vmatprep.subr.bf16.mxu0 0
        %2074 = vmatpush1.bf16.msra.mxu0 0
        %2075 = vmatprep.subr.bf16.mxu0 0
        %2076 = vmatpush1.bf16.msra.mxu0 0
        %2077 = vmatprep.subr.bf16.mxu0 0
        %2078 = vmatpush1.bf16.msra.mxu0 0
        %2079 = vmatprep.subr.bf16.mxu0 0
        %2080 = vmatpush1.bf16.msra.mxu0 0
        %2081 = vmatprep.subr.bf16.mxu0 0
        %2082 = vmatpush1.bf16.msra.mxu0 0
        %2083 = vmatprep.subr.bf16.mxu0 0
        %2084 = vmatpush1.bf16.msra.mxu0 0
        %2085 = vmatprep.mubr.bf16.mxu0 0
        %2086 = vmatmul.mubr.bf16.gmra.mrb[0].mxu0 %v2051
        %v2087 = vpop.f32.mrb[0].mxu0
        %v2088 = vadd.f32 0.0, %v2087
        %v2089 = vpop.f32.mrb[0].mxu0
        %v2090 = vpop.f32.mrb[0].mxu0
        %v2091 = vadd.f32 0.0, %v2090
        %v2092 = vpop.f32.mrb[0].mxu0
        %2093 = vdwg.mxu0
        %2095 = vrot.lane.b32.xlu0 %v1858, 96
        %v2096 = vpop.permute.xlu0 %2095
        %2098 = vrot.lane.b32.xlu0 %v1860, 96
        %v2099 = vpop.permute.xlu0 %2098
        %v2101 = vsel %vm1862, %v2096, 0
        %v2104 = vsel %vm1862, %v2099, 0
        %2106 = vmatprep.subr.bf16.mxu0 0
        %2107 = vmatpush1.bf16.xpose.msra.mxu0 %v2104
        %2108 = vmatprep.subr.bf16.mxu0 0
        %2109 = vmatpush1.bf16.xpose.msra.mxu0 0
        %2110 = vmatprep.subr.bf16.mxu0 0
        %2111 = vmatpush1.bf16.xpose.msra.mxu0 0
        %2112 = vmatprep.subr.bf16.mxu0 0
        %2113 = vmatpush1.bf16.xpose.msra.mxu0 0
        %2114 = vmatprep.subr.bf16.mxu0 0
        %2115 = vmatpush1.bf16.xpose.msra.mxu0 0
        %2116 = vmatprep.subr.bf16.mxu0 0
        %2117 = vmatpush1.bf16.xpose.msra.mxu0 0
        %2118 = vmatprep.subr.bf16.mxu0 0
        %2119 = vmatpush1.bf16.xpose.msra.mxu0 0
        %2120 = vmatprep.subr.bf16.mxu0 0
        %2121 = vmatpush1.bf16.xpose.msra.mxu0 0
        %2122 = vmatprep.subr.bf16.mxu0 0
        %2123 = vmatpush1.bf16.xpose.msra.mxu0 0
        %2124 = vmatprep.subr.bf16.mxu0 0
        %2125 = vmatpush1.bf16.xpose.msra.mxu0 0
        %2126 = vmatprep.subr.bf16.mxu0 0
        %2127 = vmatpush1.bf16.xpose.msra.mxu0 0
        %2128 = vmatprep.subr.bf16.mxu0 0
        %2129 = vmatpush1.bf16.xpose.msra.mxu0 0
        %2130 = vmatprep.subr.bf16.mxu0 0
        %2131 = vmatpush1.bf16.xpose.msra.mxu0 0
        %2132 = vmatprep.subr.bf16.mxu0 0
        %2133 = vmatpush1.bf16.xpose.msra.mxu0 0
        %2134 = vmatprep.subr.bf16.mxu0 0
        %2135 = vmatpush1.bf16.xpose.msra.mxu0 0
        %2136 = vmatprep.subr.bf16.mxu0 0
        %2137 = vmatpush1.bf16.xpose.msra.mxu0 0
        %2138 = vmatprep.mubr.bf16.mxu0 0
        %2139 = vmatmul.mubr.bf16.gmra.mrb[0].mxu0 %v2101
        %v2140 = vpop.f32.mrb[0].mxu0
        %v2141 = vadd.f32 0.0, %v2140
        %v2142 = vpop.f32.mrb[0].mxu0
        %v2143 = vpop.f32.mrb[0].mxu0
        %v2144 = vadd.f32 0.0, %v2143
        %v2145 = vpop.f32.mrb[0].mxu0
        %2146 = vdwg.mxu0
        %2148 = vrot.lane.b32.xlu0 %v1859, 96
        %v2149 = vpop.permute.xlu0 %2148
        %2151 = vrot.lane.b32.xlu0 %v1861, 96
        %v2152 = vpop.permute.xlu0 %2151
        %v2154 = vsel %vm1862, %v2149, 0
        %v2157 = vsel %vm1862, %v2152, 0
        %2159 = vmatprep.subr.bf16.mxu0 0
        %2160 = vmatpush1.bf16.xpose.msra.mxu0 %v2157
        %2161 = vmatprep.subr.bf16.mxu0 0
        %2162 = vmatpush1.bf16.xpose.msra.mxu0 0
        %2163 = vmatprep.subr.bf16.mxu0 0
        %2164 = vmatpush1.bf16.xpose.msra.mxu0 0
        %2165 = vmatprep.subr.bf16.mxu0 0
        %2166 = vmatpush1.bf16.xpose.msra.mxu0 0
        %2167 = vmatprep.subr.bf16.mxu0 0
        %2168 = vmatpush1.bf16.xpose.msra.mxu0 0
        %2169 = vmatprep.subr.bf16.mxu0 0
        %2170 = vmatpush1.bf16.xpose.msra.mxu0 0
        %2171 = vmatprep.subr.bf16.mxu0 0
        %2172 = vmatpush1.bf16.xpose.msra.mxu0 0
        %2173 = vmatprep.subr.bf16.mxu0 0
        %2174 = vmatpush1.bf16.xpose.msra.mxu0 0
        %2175 = vmatprep.subr.bf16.mxu0 0
        %2176 = vmatpush1.bf16.xpose.msra.mxu0 0
        %2177 = vmatprep.subr.bf16.mxu0 0
        %2178 = vmatpush1.bf16.xpose.msra.mxu0 0
        %2179 = vmatprep.subr.bf16.mxu0 0
        %2180 = vmatpush1.bf16.xpose.msra.mxu0 0
        %2181 = vmatprep.subr.bf16.mxu0 0
        %2182 = vmatpush1.bf16.xpose.msra.mxu0 0
        %2183 = vmatprep.subr.bf16.mxu0 0
        %2184 = vmatpush1.bf16.xpose.msra.mxu0 0
        %2185 = vmatprep.subr.bf16.mxu0 0
        %2186 = vmatpush1.bf16.xpose.msra.mxu0 0
        %2187 = vmatprep.subr.bf16.mxu0 0
        %2188 = vmatpush1.bf16.xpose.msra.mxu0 0
        %2189 = vmatprep.subr.bf16.mxu0 0
        %2190 = vmatpush1.bf16.xpose.msra.mxu0 0
        %2191 = vmatprep.mubr.bf16.mxu0 0
        %2192 = vmatmul.mubr.bf16.gmra.mrb[0].mxu0 %v2154
        %v2193 = vpop.f32.mrb[0].mxu0
        %v2194 = vadd.f32 0.0, %v2193
        %v2195 = vpop.f32.mrb[0].mxu0
        %v2196 = vpop.f32.mrb[0].mxu0
        %v2197 = vadd.f32 0.0, %v2196
        %v2198 = vpop.f32.mrb[0].mxu0
        %2199 = vdwg.mxu0
        %v2200 = vsel %vm1957, %v2141, -inf
        %2201 = vmax.xlane.f32.xlu0 %v2200
        %v2202 = vpop.xlane.xlu0 %2201
        %v2203 = vsel %vm1957, %v2144, -inf
        %2204 = vmax.xlane.f32.xlu0 %v2203
        %v2205 = vpop.xlane.xlu0 %2204
        %v2206 = vsel %vm1957, %v2194, -inf
        %2207 = vmax.xlane.f32.xlu0 %v2206
        %v2208 = vpop.xlane.xlu0 %2207
        %v2209 = vsel %vm1957, %v2197, -inf
        %2210 = vmax.xlane.f32.xlu0 %v2209
        %v2211 = vpop.xlane.xlu0 %2210
        %v2212 = vsub.f32 %v2141, %v2202
        %v2213 = vsub.f32 %v2144, %v2205
        %v2214 = vsub.f32 %v2194, %v2208
        %v2215 = vsub.f32 %v2197, %v2211
        %v2216 = vmul.f32 %v2212, 1.442695
        %v2217 = vpow.pop %v2216
        %v2218 = vmul.f32 %v2213, 1.442695
        %v2219 = vpow.pop %v2218
        %v2220 = vmul.f32 %v2214, 1.442695
        %v2221 = vpow.pop %v2220
        %v2222 = vmul.f32 %v2215, 1.442695
        %v2223 = vpow.pop %v2222
        %v2224 = vsel %vm1957, %v2217, 0.0
        %2225 = vadd.xlane.f32.xlu0 %v2224
        %v2226 = vpop.xlane.xlu0 %2225
        %v2227 = vsel %vm1957, %v2219, 0.0
        %2228 = vadd.xlane.f32.xlu0 %v2227
        %v2229 = vpop.xlane.xlu0 %2228
        %v2230 = vsel %vm1957, %v2221, 0.0
        %2231 = vadd.xlane.f32.xlu0 %v2230
        %v2232 = vpop.xlane.xlu0 %2231
        %v2233 = vsel %vm1957, %v2223, 0.0
        %2234 = vadd.xlane.f32.xlu0 %v2233
        %v2235 = vpop.xlane.xlu0 %2234
        %v2236 = vrcp.pop %v2226
        %v2237 = vmul.f32 %v2217, %v2236
        %v2238 = vrcp.pop %v2229
        %v2239 = vmul.f32 %v2219, %v2238
        %v2240 = vrcp.pop %v2232
        %v2241 = vmul.f32 %v2221, %v2240
        %v2242 = vrcp.pop %v2235
        %v2243 = vmul.f32 %v2223, %v2242
        %v2244 = vpack.c.bf16 %v2239, %v2237
        %v2245 = vpack.c.bf16 %v2243, %v2241
        %2247 = vrot.lane.b32.xlu0 %v2004, 96
        %v2248 = vpop.permute.xlu0 %2247
        %v2251 = vsel %vm1957, %v2244, 0
        %2253 = vmatprep.subr.bf16.mxu0 0
        %2254 = vmatpush1.bf16.msra.mxu0 %v2248
        %2255 = vmatprep.subr.bf16.mxu0 0
        %2256 = vmatpush1.bf16.msra.mxu0 0
        %2257 = vmatprep.subr.bf16.mxu0 0
        %2258 = vmatpush1.bf16.msra.mxu0 0
        %2259 = vmatprep.subr.bf16.mxu0 0
        %2260 = vmatpush1.bf16.msra.mxu0 0
        %2261 = vmatprep.subr.bf16.mxu0 0
        %2262 = vmatpush1.bf16.msra.mxu0 0
        %2263 = vmatprep.subr.bf16.mxu0 0
        %2264 = vmatpush1.bf16.msra.mxu0 0
        %2265 = vmatprep.subr.bf16.mxu0 0
        %2266 = vmatpush1.bf16.msra.mxu0 0
        %2267 = vmatprep.subr.bf16.mxu0 0
        %2268 = vmatpush1.bf16.msra.mxu0 0
        %2269 = vmatprep.subr.bf16.mxu0 0
        %2270 = vmatpush1.bf16.msra.mxu0 0
        %2271 = vmatprep.subr.bf16.mxu0 0
        %2272 = vmatpush1.bf16.msra.mxu0 0
        %2273 = vmatprep.subr.bf16.mxu0 0
        %2274 = vmatpush1.bf16.msra.mxu0 0
        %2275 = vmatprep.subr.bf16.mxu0 0
        %2276 = vmatpush1.bf16.msra.mxu0 0
        %2277 = vmatprep.subr.bf16.mxu0 0
        %2278 = vmatpush1.bf16.msra.mxu0 0
        %2279 = vmatprep.subr.bf16.mxu0 0
        %2280 = vmatpush1.bf16.msra.mxu0 0
        %2281 = vmatprep.subr.bf16.mxu0 0
        %2282 = vmatpush1.bf16.msra.mxu0 0
        %2283 = vmatprep.subr.bf16.mxu0 0
        %2284 = vmatpush1.bf16.msra.mxu0 0
        %2285 = vmatprep.mubr.bf16.mxu0 0
        %2286 = vmatmul.mubr.bf16.gmra.mrb[0].mxu0 %v2251
        %v2287 = vpop.f32.mrb[0].mxu0
        %v2288 = vadd.f32 0.0, %v2287
        %v2289 = vpop.f32.mrb[0].mxu0
        %v2290 = vpop.f32.mrb[0].mxu0
        %v2291 = vadd.f32 0.0, %v2290
        %v2292 = vpop.f32.mrb[0].mxu0
        %2293 = vdwg.mxu0
        %2295 = vrot.lane.b32.xlu0 %v2005, 96
        %v2296 = vpop.permute.xlu0 %2295
        %v2299 = vsel %vm1957, %v2245, 0
        %2301 = vmatprep.subr.bf16.mxu0 0
        %2302 = vmatpush1.bf16.msra.mxu0 %v2296
        %2303 = vmatprep.subr.bf16.mxu0 0
        %2304 = vmatpush1.bf16.msra.mxu0 0
        %2305 = vmatprep.subr.bf16.mxu0 0
        %2306 = vmatpush1.bf16.msra.mxu0 0
        %2307 = vmatprep.subr.bf16.mxu0 0
        %2308 = vmatpush1.bf16.msra.mxu0 0
        %2309 = vmatprep.subr.bf16.mxu0 0
        %2310 = vmatpush1.bf16.msra.mxu0 0
        %2311 = vmatprep.subr.bf16.mxu0 0
        %2312 = vmatpush1.bf16.msra.mxu0 0
        %2313 = vmatprep.subr.bf16.mxu0 0
        %2314 = vmatpush1.bf16.msra.mxu0 0
        %2315 = vmatprep.subr.bf16.mxu0 0
        %2316 = vmatpush1.bf16.msra.mxu0 0
        %2317 = vmatprep.subr.bf16.mxu0 0
        %2318 = vmatpush1.bf16.msra.mxu0 0
        %2319 = vmatprep.subr.bf16.mxu0 0
        %2320 = vmatpush1.bf16.msra.mxu0 0
        %2321 = vmatprep.subr.bf16.mxu0 0
        %2322 = vmatpush1.bf16.msra.mxu0 0
        %2323 = vmatprep.subr.bf16.mxu0 0
        %2324 = vmatpush1.bf16.msra.mxu0 0
        %2325 = vmatprep.subr.bf16.mxu0 0
        %2326 = vmatpush1.bf16.msra.mxu0 0
        %2327 = vmatprep.subr.bf16.mxu0 0
        %2328 = vmatpush1.bf16.msra.mxu0 0
        %2329 = vmatprep.subr.bf16.mxu0 0
        %2330 = vmatpush1.bf16.msra.mxu0 0
        %2331 = vmatprep.subr.bf16.mxu0 0
        %2332 = vmatpush1.bf16.msra.mxu0 0
        %2333 = vmatprep.mubr.bf16.mxu0 0
        %2334 = vmatmul.mubr.bf16.gmra.mrb[0].mxu0 %v2299
        %v2335 = vpop.f32.mrb[0].mxu0
        %v2336 = vadd.f32 0.0, %v2335
        %v2337 = vpop.f32.mrb[0].mxu0
        %v2338 = vpop.f32.mrb[0].mxu0
        %v2339 = vadd.f32 0.0, %v2338
        %v2340 = vpop.f32.mrb[0].mxu0
        %2341 = vdwg.mxu0
        %2342 = vrot.lane.b32.xlu0 %v1858, 64
        %v2343 = vpop.permute.xlu0 %2342
        %2344 = vrot.lane.b32.xlu0 %v1860, 64
        %v2345 = vpop.permute.xlu0 %2344
        %v2347 = vsel %vm1862, %v2343, 0
        %v2350 = vsel %vm1862, %v2345, 0
        %2352 = vmatprep.subr.bf16.mxu0 0
        %2353 = vmatpush1.bf16.xpose.msra.mxu0 %v2350
        %2354 = vmatprep.subr.bf16.mxu0 0
        %2355 = vmatpush1.bf16.xpose.msra.mxu0 0
        %2356 = vmatprep.subr.bf16.mxu0 0
        %2357 = vmatpush1.bf16.xpose.msra.mxu0 0
        %2358 = vmatprep.subr.bf16.mxu0 0
        %2359 = vmatpush1.bf16.xpose.msra.mxu0 0
        %2360 = vmatprep.subr.bf16.mxu0 0
        %2361 = vmatpush1.bf16.xpose.msra.mxu0 0
        %2362 = vmatprep.subr.bf16.mxu0 0
        %2363 = vmatpush1.bf16.xpose.msra.mxu0 0
        %2364 = vmatprep.subr.bf16.mxu0 0
        %2365 = vmatpush1.bf16.xpose.msra.mxu0 0
        %2366 = vmatprep.subr.bf16.mxu0 0
        %2367 = vmatpush1.bf16.xpose.msra.mxu0 0
        %2368 = vmatprep.subr.bf16.mxu0 0
        %2369 = vmatpush1.bf16.xpose.msra.mxu0 0
        %2370 = vmatprep.subr.bf16.mxu0 0
        %2371 = vmatpush1.bf16.xpose.msra.mxu0 0
        %2372 = vmatprep.subr.bf16.mxu0 0
        %2373 = vmatpush1.bf16.xpose.msra.mxu0 0
        %2374 = vmatprep.subr.bf16.mxu0 0
        %2375 = vmatpush1.bf16.xpose.msra.mxu0 0
        %2376 = vmatprep.subr.bf16.mxu0 0
        %2377 = vmatpush1.bf16.xpose.msra.mxu0 0
        %2378 = vmatprep.subr.bf16.mxu0 0
        %2379 = vmatpush1.bf16.xpose.msra.mxu0 0
        %2380 = vmatprep.subr.bf16.mxu0 0
        %2381 = vmatpush1.bf16.xpose.msra.mxu0 0
        %2382 = vmatprep.subr.bf16.mxu0 0
        %2383 = vmatpush1.bf16.xpose.msra.mxu0 0
        %2384 = vmatprep.mubr.bf16.mxu0 0
        %2385 = vmatmul.mubr.bf16.gmra.mrb[0].mxu0 %v2347
        %v2386 = vpop.f32.mrb[0].mxu0
        %v2387 = vadd.f32 0.0, %v2386
        %v2388 = vpop.f32.mrb[0].mxu0
        %v2389 = vpop.f32.mrb[0].mxu0
        %v2390 = vadd.f32 0.0, %v2389
        %v2391 = vpop.f32.mrb[0].mxu0
        %2392 = vdwg.mxu0
        %2393 = vrot.lane.b32.xlu0 %v1859, 64
        %v2394 = vpop.permute.xlu0 %2393
        %2395 = vrot.lane.b32.xlu0 %v1861, 64
        %v2396 = vpop.permute.xlu0 %2395
        %v2398 = vsel %vm1862, %v2394, 0
        %v2401 = vsel %vm1862, %v2396, 0
        %2403 = vmatprep.subr.bf16.mxu0 0
        %2404 = vmatpush1.bf16.xpose.msra.mxu0 %v2401
        %2405 = vmatprep.subr.bf16.mxu0 0
        %2406 = vmatpush1.bf16.xpose.msra.mxu0 0
        %2407 = vmatprep.subr.bf16.mxu0 0
        %2408 = vmatpush1.bf16.xpose.msra.mxu0 0
        %2409 = vmatprep.subr.bf16.mxu0 0
        %2410 = vmatpush1.bf16.xpose.msra.mxu0 0
        %2411 = vmatprep.subr.bf16.mxu0 0
        %2412 = vmatpush1.bf16.xpose.msra.mxu0 0
        %2413 = vmatprep.subr.bf16.mxu0 0
        %2414 = vmatpush1.bf16.xpose.msra.mxu0 0
        %2415 = vmatprep.subr.bf16.mxu0 0
        %2416 = vmatpush1.bf16.xpose.msra.mxu0 0
        %2417 = vmatprep.subr.bf16.mxu0 0
        %2418 = vmatpush1.bf16.xpose.msra.mxu0 0
        %2419 = vmatprep.subr.bf16.mxu0 0
        %2420 = vmatpush1.bf16.xpose.msra.mxu0 0
        %2421 = vmatprep.subr.bf16.mxu0 0
        %2422 = vmatpush1.bf16.xpose.msra.mxu0 0
        %2423 = vmatprep.subr.bf16.mxu0 0
        %2424 = vmatpush1.bf16.xpose.msra.mxu0 0
        %2425 = vmatprep.subr.bf16.mxu0 0
        %2426 = vmatpush1.bf16.xpose.msra.mxu0 0
        %2427 = vmatprep.subr.bf16.mxu0 0
        %2428 = vmatpush1.bf16.xpose.msra.mxu0 0
        %2429 = vmatprep.subr.bf16.mxu0 0
        %2430 = vmatpush1.bf16.xpose.msra.mxu0 0
        %2431 = vmatprep.subr.bf16.mxu0 0
        %2432 = vmatpush1.bf16.xpose.msra.mxu0 0
        %2433 = vmatprep.subr.bf16.mxu0 0
        %2434 = vmatpush1.bf16.xpose.msra.mxu0 0
        %2435 = vmatprep.mubr.bf16.mxu0 0
        %2436 = vmatmul.mubr.bf16.gmra.mrb[0].mxu0 %v2398
        %v2437 = vpop.f32.mrb[0].mxu0
        %v2438 = vadd.f32 0.0, %v2437
        %v2439 = vpop.f32.mrb[0].mxu0
        %v2440 = vpop.f32.mrb[0].mxu0
        %v2441 = vadd.f32 0.0, %v2440
        %v2442 = vpop.f32.mrb[0].mxu0
        %2443 = vdwg.mxu0
        %v2444 = vsel %vm1957, %v2387, -inf
        %2445 = vmax.xlane.f32.xlu0 %v2444
        %v2446 = vpop.xlane.xlu0 %2445
        %v2447 = vsel %vm1957, %v2390, -inf
        %2448 = vmax.xlane.f32.xlu0 %v2447
        %v2449 = vpop.xlane.xlu0 %2448
        %v2450 = vsel %vm1957, %v2438, -inf
        %2451 = vmax.xlane.f32.xlu0 %v2450
        %v2452 = vpop.xlane.xlu0 %2451
        %v2453 = vsel %vm1957, %v2441, -inf
        %2454 = vmax.xlane.f32.xlu0 %v2453
        %v2455 = vpop.xlane.xlu0 %2454
        %v2456 = vsub.f32 %v2387, %v2446
        %v2457 = vsub.f32 %v2390, %v2449
        %v2458 = vsub.f32 %v2438, %v2452
        %v2459 = vsub.f32 %v2441, %v2455
        %v2460 = vmul.f32 %v2456, 1.442695
        %v2461 = vpow.pop %v2460
        %v2462 = vmul.f32 %v2457, 1.442695
        %v2463 = vpow.pop %v2462
        %v2464 = vmul.f32 %v2458, 1.442695
        %v2465 = vpow.pop %v2464
        %v2466 = vmul.f32 %v2459, 1.442695
        %v2467 = vpow.pop %v2466
        %v2468 = vsel %vm1957, %v2461, 0.0
        %2469 = vadd.xlane.f32.xlu0 %v2468
        %v2470 = vpop.xlane.xlu0 %2469
        %v2471 = vsel %vm1957, %v2463, 0.0
        %2472 = vadd.xlane.f32.xlu0 %v2471
        %v2473 = vpop.xlane.xlu0 %2472
        %v2474 = vsel %vm1957, %v2465, 0.0
        %2475 = vadd.xlane.f32.xlu0 %v2474
        %v2476 = vpop.xlane.xlu0 %2475
        %v2477 = vsel %vm1957, %v2467, 0.0
        %2478 = vadd.xlane.f32.xlu0 %v2477
        %v2479 = vpop.xlane.xlu0 %2478
        %v2480 = vrcp.pop %v2470
        %v2481 = vmul.f32 %v2461, %v2480
        %v2482 = vrcp.pop %v2473
        %v2483 = vmul.f32 %v2463, %v2482
        %v2484 = vrcp.pop %v2476
        %v2485 = vmul.f32 %v2465, %v2484
        %v2486 = vrcp.pop %v2479
        %v2487 = vmul.f32 %v2467, %v2486
        %v2488 = vpack.c.bf16 %v2483, %v2481
        %v2489 = vpack.c.bf16 %v2487, %v2485
        %2490 = vrot.lane.b32.xlu0 %v2004, 64
        %v2491 = vpop.permute.xlu0 %2490
        %v2494 = vsel %vm1957, %v2488, 0
        %2496 = vmatprep.subr.bf16.mxu0 0
        %2497 = vmatpush1.bf16.msra.mxu0 %v2491
        %2498 = vmatprep.subr.bf16.mxu0 0
        %2499 = vmatpush1.bf16.msra.mxu0 0
        %2500 = vmatprep.subr.bf16.mxu0 0
        %2501 = vmatpush1.bf16.msra.mxu0 0
        %2502 = vmatprep.subr.bf16.mxu0 0
        %2503 = vmatpush1.bf16.msra.mxu0 0
        %2504 = vmatprep.subr.bf16.mxu0 0
        %2505 = vmatpush1.bf16.msra.mxu0 0
        %2506 = vmatprep.subr.bf16.mxu0 0
        %2507 = vmatpush1.bf16.msra.mxu0 0
        %2508 = vmatprep.subr.bf16.mxu0 0
        %2509 = vmatpush1.bf16.msra.mxu0 0
        %2510 = vmatprep.subr.bf16.mxu0 0
        %2511 = vmatpush1.bf16.msra.mxu0 0
        %2512 = vmatprep.subr.bf16.mxu0 0
        %2513 = vmatpush1.bf16.msra.mxu0 0
        %2514 = vmatprep.subr.bf16.mxu0 0
        %2515 = vmatpush1.bf16.msra.mxu0 0
        %2516 = vmatprep.subr.bf16.mxu0 0
        %2517 = vmatpush1.bf16.msra.mxu0 0
        %2518 = vmatprep.subr.bf16.mxu0 0
        %2519 = vmatpush1.bf16.msra.mxu0 0
        %2520 = vmatprep.subr.bf16.mxu0 0
        %2521 = vmatpush1.bf16.msra.mxu0 0
        %2522 = vmatprep.subr.bf16.mxu0 0
        %2523 = vmatpush1.bf16.msra.mxu0 0
        %2524 = vmatprep.subr.bf16.mxu0 0
        %2525 = vmatpush1.bf16.msra.mxu0 0
        %2526 = vmatprep.subr.bf16.mxu0 0
        %2527 = vmatpush1.bf16.msra.mxu0 0
        %2528 = vmatprep.mubr.bf16.mxu0 0
        %2529 = vmatmul.mubr.bf16.gmra.mrb[0].mxu0 %v2494
        %v2530 = vpop.f32.mrb[0].mxu0
        %v2531 = vadd.f32 0.0, %v2530
        %v2532 = vpop.f32.mrb[0].mxu0
        %v2533 = vpop.f32.mrb[0].mxu0
        %v2534 = vadd.f32 0.0, %v2533
        %v2535 = vpop.f32.mrb[0].mxu0
        %2536 = vdwg.mxu0
        %2537 = vrot.lane.b32.xlu0 %v2005, 64
        %v2538 = vpop.permute.xlu0 %2537
        %v2541 = vsel %vm1957, %v2489, 0
        %2543 = vmatprep.subr.bf16.mxu0 0
        %2544 = vmatpush1.bf16.msra.mxu0 %v2538
        %2545 = vmatprep.subr.bf16.mxu0 0
        %2546 = vmatpush1.bf16.msra.mxu0 0
        %2547 = vmatprep.subr.bf16.mxu0 0
        %2548 = vmatpush1.bf16.msra.mxu0 0
        %2549 = vmatprep.subr.bf16.mxu0 0
        %2550 = vmatpush1.bf16.msra.mxu0 0
        %2551 = vmatprep.subr.bf16.mxu0 0
        %2552 = vmatpush1.bf16.msra.mxu0 0
        %2553 = vmatprep.subr.bf16.mxu0 0
        %2554 = vmatpush1.bf16.msra.mxu0 0
        %2555 = vmatprep.subr.bf16.mxu0 0
        %2556 = vmatpush1.bf16.msra.mxu0 0
        %2557 = vmatprep.subr.bf16.mxu0 0
        %2558 = vmatpush1.bf16.msra.mxu0 0
        %2559 = vmatprep.subr.bf16.mxu0 0
        %2560 = vmatpush1.bf16.msra.mxu0 0
        %2561 = vmatprep.subr.bf16.mxu0 0
        %2562 = vmatpush1.bf16.msra.mxu0 0
        %2563 = vmatprep.subr.bf16.mxu0 0
        %2564 = vmatpush1.bf16.msra.mxu0 0
        %2565 = vmatprep.subr.bf16.mxu0 0
        %2566 = vmatpush1.bf16.msra.mxu0 0
        %2567 = vmatprep.subr.bf16.mxu0 0
        %2568 = vmatpush1.bf16.msra.mxu0 0
        %2569 = vmatprep.subr.bf16.mxu0 0
        %2570 = vmatpush1.bf16.msra.mxu0 0
        %2571 = vmatprep.subr.bf16.mxu0 0
        %2572 = vmatpush1.bf16.msra.mxu0 0
        %2573 = vmatprep.subr.bf16.mxu0 0
        %2574 = vmatpush1.bf16.msra.mxu0 0
        %2575 = vmatprep.mubr.bf16.mxu0 0
        %2576 = vmatmul.mubr.bf16.gmra.mrb[0].mxu0 %v2541
        %v2577 = vpop.f32.mrb[0].mxu0
        %v2578 = vadd.f32 0.0, %v2577
        %v2579 = vpop.f32.mrb[0].mxu0
        %v2580 = vpop.f32.mrb[0].mxu0
        %v2581 = vadd.f32 0.0, %v2580
        %v2582 = vpop.f32.mrb[0].mxu0
        %2583 = vdwg.mxu0
        %2584 = vrot.lane.b32.xlu0 %v1858, 32
        %v2585 = vpop.permute.xlu0 %2584
        %2586 = vrot.lane.b32.xlu0 %v1860, 32
        %v2587 = vpop.permute.xlu0 %2586
        %v2589 = vsel %vm1862, %v2585, 0
        %v2592 = vsel %vm1862, %v2587, 0
        %2594 = vmatprep.subr.bf16.mxu0 0
        %2595 = vmatpush1.bf16.xpose.msra.mxu0 %v2592
        %2596 = vmatprep.subr.bf16.mxu0 0
        %2597 = vmatpush1.bf16.xpose.msra.mxu0 0
        %2598 = vmatprep.subr.bf16.mxu0 0
        %2599 = vmatpush1.bf16.xpose.msra.mxu0 0
        %2600 = vmatprep.subr.bf16.mxu0 0
        %2601 = vmatpush1.bf16.xpose.msra.mxu0 0
        %2602 = vmatprep.subr.bf16.mxu0 0
        %2603 = vmatpush1.bf16.xpose.msra.mxu0 0
        %2604 = vmatprep.subr.bf16.mxu0 0
        %2605 = vmatpush1.bf16.xpose.msra.mxu0 0
        %2606 = vmatprep.subr.bf16.mxu0 0
        %2607 = vmatpush1.bf16.xpose.msra.mxu0 0
        %2608 = vmatprep.subr.bf16.mxu0 0
        %2609 = vmatpush1.bf16.xpose.msra.mxu0 0
        %2610 = vmatprep.subr.bf16.mxu0 0
        %2611 = vmatpush1.bf16.xpose.msra.mxu0 0
        %2612 = vmatprep.subr.bf16.mxu0 0
        %2613 = vmatpush1.bf16.xpose.msra.mxu0 0
        %2614 = vmatprep.subr.bf16.mxu0 0
        %2615 = vmatpush1.bf16.xpose.msra.mxu0 0
        %2616 = vmatprep.subr.bf16.mxu0 0
        %2617 = vmatpush1.bf16.xpose.msra.mxu0 0
        %2618 = vmatprep.subr.bf16.mxu0 0
        %2619 = vmatpush1.bf16.xpose.msra.mxu0 0
        %2620 = vmatprep.subr.bf16.mxu0 0
        %2621 = vmatpush1.bf16.xpose.msra.mxu0 0
        %2622 = vmatprep.subr.bf16.mxu0 0
        %2623 = vmatpush1.bf16.xpose.msra.mxu0 0
        %2624 = vmatprep.subr.bf16.mxu0 0
        %2625 = vmatpush1.bf16.xpose.msra.mxu0 0
        %2626 = vmatprep.mubr.bf16.mxu0 0
        %2627 = vmatmul.mubr.bf16.gmra.mrb[0].mxu0 %v2589
        %v2628 = vpop.f32.mrb[0].mxu0
        %v2629 = vadd.f32 0.0, %v2628
        %v2630 = vpop.f32.mrb[0].mxu0
        %v2631 = vpop.f32.mrb[0].mxu0
        %v2632 = vadd.f32 0.0, %v2631
        %v2633 = vpop.f32.mrb[0].mxu0
        %2634 = vdwg.mxu0
        %2635 = vrot.lane.b32.xlu0 %v1859, 32
        %v2636 = vpop.permute.xlu0 %2635
        %2637 = vrot.lane.b32.xlu0 %v1861, 32
        %v2638 = vpop.permute.xlu0 %2637
        %v2640 = vsel %vm1862, %v2636, 0
        %v2643 = vsel %vm1862, %v2638, 0
        %2645 = vmatprep.subr.bf16.mxu0 0
        %2646 = vmatpush1.bf16.xpose.msra.mxu0 %v2643
        %2647 = vmatprep.subr.bf16.mxu0 0
        %2648 = vmatpush1.bf16.xpose.msra.mxu0 0
        %2649 = vmatprep.subr.bf16.mxu0 0
        %2650 = vmatpush1.bf16.xpose.msra.mxu0 0
        %2651 = vmatprep.subr.bf16.mxu0 0
        %2652 = vmatpush1.bf16.xpose.msra.mxu0 0
        %2653 = vmatprep.subr.bf16.mxu0 0
        %2654 = vmatpush1.bf16.xpose.msra.mxu0 0
        %2655 = vmatprep.subr.bf16.mxu0 0
        %2656 = vmatpush1.bf16.xpose.msra.mxu0 0
        %2657 = vmatprep.subr.bf16.mxu0 0
        %2658 = vmatpush1.bf16.xpose.msra.mxu0 0
        %2659 = vmatprep.subr.bf16.mxu0 0
        %2660 = vmatpush1.bf16.xpose.msra.mxu0 0
        %2661 = vmatprep.subr.bf16.mxu0 0
        %2662 = vmatpush1.bf16.xpose.msra.mxu0 0
        %2663 = vmatprep.subr.bf16.mxu0 0
        %2664 = vmatpush1.bf16.xpose.msra.mxu0 0
        %2665 = vmatprep.subr.bf16.mxu0 0
        %2666 = vmatpush1.bf16.xpose.msra.mxu0 0
        %2667 = vmatprep.subr.bf16.mxu0 0
        %2668 = vmatpush1.bf16.xpose.msra.mxu0 0
        %2669 = vmatprep.subr.bf16.mxu0 0
        %2670 = vmatpush1.bf16.xpose.msra.mxu0 0
        %2671 = vmatprep.subr.bf16.mxu0 0
        %2672 = vmatpush1.bf16.xpose.msra.mxu0 0
        %2673 = vmatprep.subr.bf16.mxu0 0
        %2674 = vmatpush1.bf16.xpose.msra.mxu0 0
        %2675 = vmatprep.subr.bf16.mxu0 0
        %2676 = vmatpush1.bf16.xpose.msra.mxu0 0
        %2677 = vmatprep.mubr.bf16.mxu0 0
        %2678 = vmatmul.mubr.bf16.gmra.mrb[0].mxu0 %v2640
        %v2679 = vpop.f32.mrb[0].mxu0
        %v2680 = vadd.f32 0.0, %v2679
        %v2681 = vpop.f32.mrb[0].mxu0
        %v2682 = vpop.f32.mrb[0].mxu0
        %v2683 = vadd.f32 0.0, %v2682
        %v2684 = vpop.f32.mrb[0].mxu0
        %2685 = vdwg.mxu0
        %v2686 = vsel %vm1957, %v2629, -inf
        %2687 = vmax.xlane.f32.xlu0 %v2686
        %v2688 = vpop.xlane.xlu0 %2687
        %v2689 = vsel %vm1957, %v2632, -inf
        %2690 = vmax.xlane.f32.xlu0 %v2689
        %v2691 = vpop.xlane.xlu0 %2690
        %v2692 = vsel %vm1957, %v2680, -inf
        %2693 = vmax.xlane.f32.xlu0 %v2692
        %v2694 = vpop.xlane.xlu0 %2693
        %v2695 = vsel %vm1957, %v2683, -inf
        %2696 = vmax.xlane.f32.xlu0 %v2695
        %v2697 = vpop.xlane.xlu0 %2696
        %v2698 = vsub.f32 %v2629, %v2688
        %v2699 = vsub.f32 %v2632, %v2691
        %v2700 = vsub.f32 %v2680, %v2694
        %v2701 = vsub.f32 %v2683, %v2697
        %v2702 = vmul.f32 %v2698, 1.442695
        %v2703 = vpow.pop %v2702
        %v2704 = vmul.f32 %v2699, 1.442695
        %v2705 = vpow.pop %v2704
        %v2706 = vmul.f32 %v2700, 1.442695
        %v2707 = vpow.pop %v2706
        %v2708 = vmul.f32 %v2701, 1.442695
        %v2709 = vpow.pop %v2708
        %v2710 = vsel %vm1957, %v2703, 0.0
        %2711 = vadd.xlane.f32.xlu0 %v2710
        %v2712 = vpop.xlane.xlu0 %2711
        %v2713 = vsel %vm1957, %v2705, 0.0
        %2714 = vadd.xlane.f32.xlu0 %v2713
        %v2715 = vpop.xlane.xlu0 %2714
        %v2716 = vsel %vm1957, %v2707, 0.0
        %2717 = vadd.xlane.f32.xlu0 %v2716
        %v2718 = vpop.xlane.xlu0 %2717
        %v2719 = vsel %vm1957, %v2709, 0.0
        %2720 = vadd.xlane.f32.xlu0 %v2719
        %v2721 = vpop.xlane.xlu0 %2720
        %v2722 = vrcp.pop %v2712
        %v2723 = vmul.f32 %v2703, %v2722
        %v2724 = vrcp.pop %v2715
        %v2725 = vmul.f32 %v2705, %v2724
        %v2726 = vrcp.pop %v2718
        %v2727 = vmul.f32 %v2707, %v2726
        %v2728 = vrcp.pop %v2721
        %v2729 = vmul.f32 %v2709, %v2728
        %v2730 = vpack.c.bf16 %v2725, %v2723
        %v2731 = vpack.c.bf16 %v2729, %v2727
        %2732 = vrot.lane.b32.xlu0 %v2004, 32
        %v2733 = vpop.permute.xlu0 %2732
        %v2736 = vsel %vm1957, %v2730, 0
        %2738 = vmatprep.subr.bf16.mxu0 0
        %2739 = vmatpush1.bf16.msra.mxu0 %v2733
        %2740 = vmatprep.subr.bf16.mxu0 0
        %2741 = vmatpush1.bf16.msra.mxu0 0
        %2742 = vmatprep.subr.bf16.mxu0 0
        %2743 = vmatpush1.bf16.msra.mxu0 0
        %2744 = vmatprep.subr.bf16.mxu0 0
        %2745 = vmatpush1.bf16.msra.mxu0 0
        %2746 = vmatprep.subr.bf16.mxu0 0
        %2747 = vmatpush1.bf16.msra.mxu0 0
        %2748 = vmatprep.subr.bf16.mxu0 0
        %2749 = vmatpush1.bf16.msra.mxu0 0
        %2750 = vmatprep.subr.bf16.mxu0 0
        %2751 = vmatpush1.bf16.msra.mxu0 0
        %2752 = vmatprep.subr.bf16.mxu0 0
        %2753 = vmatpush1.bf16.msra.mxu0 0
        %2754 = vmatprep.subr.bf16.mxu0 0
        %2755 = vmatpush1.bf16.msra.mxu0 0
        %2756 = vmatprep.subr.bf16.mxu0 0
        %2757 = vmatpush1.bf16.msra.mxu0 0
        %2758 = vmatprep.subr.bf16.mxu0 0
        %2759 = vmatpush1.bf16.msra.mxu0 0
        %2760 = vmatprep.subr.bf16.mxu0 0
        %2761 = vmatpush1.bf16.msra.mxu0 0
        %2762 = vmatprep.subr.bf16.mxu0 0
        %2763 = vmatpush1.bf16.msra.mxu0 0
        %2764 = vmatprep.subr.bf16.mxu0 0
        %2765 = vmatpush1.bf16.msra.mxu0 0
        %2766 = vmatprep.subr.bf16.mxu0 0
        %2767 = vmatpush1.bf16.msra.mxu0 0
        %2768 = vmatprep.subr.bf16.mxu0 0
        %2769 = vmatpush1.bf16.msra.mxu0 0
        %2770 = vmatprep.mubr.bf16.mxu0 0
        %2771 = vmatmul.mubr.bf16.gmra.mrb[0].mxu0 %v2736
        %v2772 = vpop.f32.mrb[0].mxu0
        %v2773 = vadd.f32 0.0, %v2772
        %v2774 = vpop.f32.mrb[0].mxu0
        %v2775 = vpop.f32.mrb[0].mxu0
        %v2776 = vadd.f32 0.0, %v2775
        %v2777 = vpop.f32.mrb[0].mxu0
        %2778 = vdwg.mxu0
        %2779 = vrot.lane.b32.xlu0 %v2005, 32
        %v2780 = vpop.permute.xlu0 %2779
        %v2783 = vsel %vm1957, %v2731, 0
        %2785 = vmatprep.subr.bf16.mxu0 0
        %2786 = vmatpush1.bf16.msra.mxu0 %v2780
        %2787 = vmatprep.subr.bf16.mxu0 0
        %2788 = vmatpush1.bf16.msra.mxu0 0
        %2789 = vmatprep.subr.bf16.mxu0 0
        %2790 = vmatpush1.bf16.msra.mxu0 0
        %2791 = vmatprep.subr.bf16.mxu0 0
        %2792 = vmatpush1.bf16.msra.mxu0 0
        %2793 = vmatprep.subr.bf16.mxu0 0
        %2794 = vmatpush1.bf16.msra.mxu0 0
        %2795 = vmatprep.subr.bf16.mxu0 0
        %2796 = vmatpush1.bf16.msra.mxu0 0
        %2797 = vmatprep.subr.bf16.mxu0 0
        %2798 = vmatpush1.bf16.msra.mxu0 0
        %2799 = vmatprep.subr.bf16.mxu0 0
        %2800 = vmatpush1.bf16.msra.mxu0 0
        %2801 = vmatprep.subr.bf16.mxu0 0
        %2802 = vmatpush1.bf16.msra.mxu0 0
        %2803 = vmatprep.subr.bf16.mxu0 0
        %2804 = vmatpush1.bf16.msra.mxu0 0
        %2805 = vmatprep.subr.bf16.mxu0 0
        %2806 = vmatpush1.bf16.msra.mxu0 0
        %2807 = vmatprep.subr.bf16.mxu0 0
        %2808 = vmatpush1.bf16.msra.mxu0 0
        %2809 = vmatprep.subr.bf16.mxu0 0
        %2810 = vmatpush1.bf16.msra.mxu0 0
        %2811 = vmatprep.subr.bf16.mxu0 0
        %2812 = vmatpush1.bf16.msra.mxu0 0
        %2813 = vmatprep.subr.bf16.mxu0 0
        %2814 = vmatpush1.bf16.msra.mxu0 0
        %2815 = vmatprep.subr.bf16.mxu0 0
        %2816 = vmatpush1.bf16.msra.mxu0 0
        %2817 = vmatprep.mubr.bf16.mxu0 0
        %2818 = vmatmul.mubr.bf16.gmra.mrb[0].mxu0 %v2783
        %v2819 = vpop.f32.mrb[0].mxu0
        %v2820 = vadd.f32 0.0, %v2819
        %v2821 = vpop.f32.mrb[0].mxu0
        %v2822 = vpop.f32.mrb[0].mxu0
        %v2823 = vadd.f32 0.0, %v2822
        %v2824 = vpop.f32.mrb[0].mxu0
        %2825 = vdwg.mxu0
        %2830 = vrot.lane.b32.xlu0 %v2288, 32
        %v2831 = vpop.permute.xlu0 %2830
        %2832 = vrot.lane.b32.xlu0 %v2291, 32
        %v2833 = vpop.permute.xlu0 %2832
        %2834 = vrot.lane.b32.xlu0 %v2336, 32
        %v2835 = vpop.permute.xlu0 %2834
        %2836 = vrot.lane.b32.xlu0 %v2339, 32
        %v2837 = vpop.permute.xlu0 %2836
        %2846 = vrot.lane.b32.xlu0 %v2531, 64
        %v2847 = vpop.permute.xlu0 %2846
        %2848 = vrot.lane.b32.xlu0 %v2534, 64
        %v2849 = vpop.permute.xlu0 %2848
        %2850 = vrot.lane.b32.xlu0 %v2578, 64
        %v2851 = vpop.permute.xlu0 %2850
        %2852 = vrot.lane.b32.xlu0 %v2581, 64
        %v2853 = vpop.permute.xlu0 %2852
        %2862 = vrot.lane.b32.xlu0 %v2773, 96
        %v2863 = vpop.permute.xlu0 %2862
        %2864 = vrot.lane.b32.xlu0 %v2776, 96
        %v2865 = vpop.permute.xlu0 %2864
        %2866 = vrot.lane.b32.xlu0 %v2820, 96
        %v2867 = vpop.permute.xlu0 %2866
        %2868 = vrot.lane.b32.xlu0 %v2823, 96
        %v2869 = vpop.permute.xlu0 %2868
        %v2874 = vsel %vm1862, %v2044, %v2831
        %v2875 = vsel %vm1862, %v2047, %v2833
        %v2876 = vsel %vm1862, %v2088, %v2835
        %v2877 = vsel %vm1862, %v2091, %v2837
        %vm2878 = vcmask 523264
        %v2879 = vsel %vm2878, %v2874, %v2847
        %v2880 = vsel %vm2878, %v2875, %v2849
        %v2881 = vsel %vm2878, %v2876, %v2851
        %v2882 = vsel %vm2878, %v2877, %v2853
        %vm2883 = vcmask 785408
        %v2884 = vsel %vm2883, %v2879, %v2863
        %v2885 = vsel %vm2883, %v2880, %v2865
        %v2886 = vsel %vm2883, %v2881, %v2867
        %v2887 = vsel %vm2883, %v2882, %v2869
        %v2888 = vld [vmem:[%s833] sm:$0xf]
        %v2889 = vld [vmem:[%s833 + $0x4] sm:$0xf]
        %v2890 = vld [vmem:[%s833 + $0x8] sm:$0xf]
        %v2891 = vld [vmem:[%s833 + $0xc] sm:$0xf]
        %v2892 = vld [vmem:[%s833 + $0x10] sm:$0xf]
        %v2893 = vld [vmem:[%s833 + $0x14] sm:$0xf]
        %v2894 = vld [vmem:[%s833 + $0x18] sm:$0xf]
        %v2895 = vld [vmem:[%s833 + $0x1c] sm:$0xf]
        %v2896 = vld [vmem:[%s833 + $0x20] sm:$0xf]
        %v2897 = vld [vmem:[%s833 + $0x24] sm:$0xf]
        %v2898 = vld [vmem:[%s833 + $0x28] sm:$0xf]
        %v2899 = vld [vmem:[%s833 + $0x2c] sm:$0xf]
        %v2900 = vld [vmem:[%s833 + $0x30] sm:$0xf]
        %v2901 = vld [vmem:[%s833 + $0x34] sm:$0xf]
        %v2902 = vld [vmem:[%s833 + $0x38] sm:$0xf]
        %v2903 = vld [vmem:[%s833 + $0x3c] sm:$0xf]
        %v2904 = vpack.c.bf16 %v2885, %v2884
        %v2905 = vpack.c.bf16 %v2887, %v2886
        %v2906 = vld [vmem:[%s993] sm:$0x1]
        %v2908 = vlaneseq
        %v2909 = vshrl.u32 %v2908, 7
        %v2910 = vsub.s32 0, %v2909
        %v2911 = vrot.slane %v2906, %v2910
        %v2929 = vunpack.c.l.b16 %v2888
        %v2930 = vunpack.c.l.b16 %v2889
        %v2931 = vunpack.c.l.b16 %v2890
        %v2932 = vunpack.c.l.b16 %v2891
        %v2933 = vunpack.c.l.b16 %v2892
        %v2934 = vunpack.c.l.b16 %v2893
        %v2935 = vunpack.c.l.b16 %v2894
        %v2936 = vunpack.c.l.b16 %v2895
        %v2937 = vunpack.c.l.b16 %v2896
        %v2938 = vunpack.c.l.b16 %v2897
        %v2939 = vunpack.c.l.b16 %v2898
        %v2940 = vunpack.c.l.b16 %v2899
        %v2941 = vunpack.c.l.b16 %v2900
        %v2942 = vunpack.c.l.b16 %v2901
        %v2943 = vunpack.c.l.b16 %v2902
        %v2944 = vunpack.c.l.b16 %v2903
        %v2945 = vpack.c.b16 %v2930, %v2929
        %v2946 = vpack.c.b16 %v2932, %v2931
        %v2947 = vpack.c.b16 %v2934, %v2933
        %v2948 = vpack.c.b16 %v2936, %v2935
        %v2949 = vpack.c.b16 %v2938, %v2937
        %v2950 = vpack.c.b16 %v2940, %v2939
        %v2951 = vpack.c.b16 %v2942, %v2941
        %v2952 = vpack.c.b16 %v2944, %v2943
        %2961 = vmatprep.subr.bf16.mxu0 0
        %2962 = vmatpush1.bf16.msra.mxu0 %v2945
        %2963 = vmatprep.subr.bf16.mxu0 0
        %2964 = vmatpush1.bf16.msra.mxu0 %v2946
        %2965 = vmatprep.subr.bf16.mxu0 0
        %2966 = vmatpush1.bf16.msra.mxu0 %v2947
        %2967 = vmatprep.subr.bf16.mxu0 0
        %2968 = vmatpush1.bf16.msra.mxu0 %v2948
        %2969 = vmatprep.subr.bf16.mxu0 0
        %2970 = vmatpush1.bf16.msra.mxu0 %v2949
        %2971 = vmatprep.subr.bf16.mxu0 0
        %2972 = vmatpush1.bf16.msra.mxu0 %v2950
        %2973 = vmatprep.subr.bf16.mxu0 0
        %2974 = vmatpush1.bf16.msra.mxu0 %v2951
        %2975 = vmatprep.subr.bf16.mxu0 0
        %2976 = vmatpush1.bf16.msra.mxu0 %v2952
        %2977 = vmatprep.subr.bf16.mxu0 0
        %2978 = vmatpush1.bf16.msra.mxu0 0
        %2979 = vmatprep.subr.bf16.mxu0 0
        %2980 = vmatpush1.bf16.msra.mxu0 0
        %2981 = vmatprep.subr.bf16.mxu0 0
        %2982 = vmatpush1.bf16.msra.mxu0 0
        %2983 = vmatprep.subr.bf16.mxu0 0
        %2984 = vmatpush1.bf16.msra.mxu0 0
        %2985 = vmatprep.subr.bf16.mxu0 0
        %2986 = vmatpush1.bf16.msra.mxu0 0
        %2987 = vmatprep.subr.bf16.mxu0 0
        %2988 = vmatpush1.bf16.msra.mxu0 0
        %2989 = vmatprep.subr.bf16.mxu0 0
        %2990 = vmatpush1.bf16.msra.mxu0 0
        %2991 = vmatprep.subr.bf16.mxu0 0
        %2992 = vmatpush1.bf16.msra.mxu0 0
        %2993 = vmatprep.mubr.bf16.mxu0 0
        %2994 = vmatmul.mubr.bf16.gmra.mrb[0].mxu0 %v2904
        %v2995 = vpop.f32.mrb[0].mxu0
        %v2996 = vadd.f32 %v2911, %v2995
        %v2997 = vpop.f32.mrb[0].mxu0
        %v2998 = vpop.f32.mrb[0].mxu0
        %v2999 = vadd.f32 %v2911, %v2998
        %v3000 = vpop.f32.mrb[0].mxu0
        %3001 = vmatprep.mubr.bf16.mxu0 0
        %3002 = vmatmul.mubr.bf16.gmra.mrb[0].mxu0 %v2905
        %v3003 = vpop.f32.mrb[0].mxu0
        %v3004 = vadd.f32 %v2911, %v3003
        %v3005 = vpop.f32.mrb[0].mxu0
        %v3006 = vpop.f32.mrb[0].mxu0
        %v3007 = vadd.f32 %v2911, %v3006
        %v3008 = vpop.f32.mrb[0].mxu0
        %3009 = vdwg.mxu0
        %v3010 = vadd.f32 %v1509, %v2996
        %v3011 = vadd.f32 %v1510, %v2999
        %v3012 = vadd.f32 %v1511, %v3004
        %v3013 = vadd.f32 %v1512, %v3007
        %3014 = vadd.xlane.f32.xlu0 %v3010
        %v3015 = vpop.xlane.xlu0 %3014
        %3016 = vadd.xlane.f32.xlu0 %v3011
        %v3017 = vpop.xlane.xlu0 %3016
        %3018 = vadd.xlane.f32.xlu0 %v3012
        %v3019 = vpop.xlane.xlu0 %3018
        %3020 = vadd.xlane.f32.xlu0 %v3013
        %v3021 = vpop.xlane.xlu0 %3020
        %v3022 = vmul.f32 %v3015, %v1041
        %v3023 = vmul.f32 %v3017, %v1041
        %v3024 = vmul.f32 %v3019, %v1041
        %v3025 = vmul.f32 %v3021, %v1041
        %v3026 = vsub.f32 %v3010, %v3022
        %v3027 = vsub.f32 %v3011, %v3023
        %v3028 = vsub.f32 %v3012, %v3024
        %v3029 = vsub.f32 %v3013, %v3025
        %v3030 = vmul.f32 %v3026, %v3026
        %v3031 = vmul.f32 %v3027, %v3027
        %v3032 = vmul.f32 %v3028, %v3028
        %v3033 = vmul.f32 %v3029, %v3029
        %3034 = vadd.xlane.f32.xlu0 %v3030
        %v3035 = vpop.xlane.xlu0 %3034
        %3036 = vadd.xlane.f32.xlu0 %v3031
        %v3037 = vpop.xlane.xlu0 %3036
        %3038 = vadd.xlane.f32.xlu0 %v3032
        %v3039 = vpop.xlane.xlu0 %3038
        %3040 = vadd.xlane.f32.xlu0 %v3033
        %v3041 = vpop.xlane.xlu0 %3040
        %v3042 = vmul.f32 %v3035, %v1041
        %v3043 = vmul.f32 %v3037, %v1041
        %v3044 = vmul.f32 %v3039, %v1041
        %v3045 = vmul.f32 %v3041, %v1041
        %v3046 = vadd.f32 %v3042, 1e-05
        %v3047 = vadd.f32 %v3043, 1e-05
        %v3048 = vadd.f32 %v3044, 1e-05
        %v3049 = vadd.f32 %v3045, 1e-05
        %v3050 = vrsqrt.pop %v3046
        %v3051 = vrsqrt.pop %v3047
        %v3052 = vrsqrt.pop %v3048
        %v3053 = vrsqrt.pop %v3049
        %v3054 = vmul.f32 %v3026, %v3050
        %v3055 = vmul.f32 %v3027, %v3051
        %v3056 = vmul.f32 %v3028, %v3052
        %v3057 = vmul.f32 %v3029, %v3053
        %v3058 = vlaneseq
        %v3059 = vshrl.u32 %v3058, 7
        %v3060 = vsub.s32 2, %v3059
        %v3061 = vrot.slane %v1029, %v3060
        %v3062 = vmul.f32 %v3054, %v3061
        %v3063 = vmul.f32 %v3055, %v3061
        %v3064 = vmul.f32 %v3056, %v3061
        %v3065 = vmul.f32 %v3057, %v3061
        %v3066 = vlaneseq
        %v3067 = vshrl.u32 %v3066, 7
        %v3068 = vsub.s32 2, %v3067
        %v3069 = vrot.slane %v1030, %v3068
        %v3070 = vadd.f32 %v3062, %v3069
        %v3071 = vadd.f32 %v3063, %v3069
        %v3072 = vadd.f32 %v3064, %v3069
        %v3073 = vadd.f32 %v3065, %v3069
        %v3074 = vld [vmem:[%s842] sm:$0xff]
        %v3075 = vld [vmem:[%s842 + $0x8] sm:$0xff]
        %v3076 = vld [vmem:[%s842 + $0x10] sm:$0xff]
        %v3077 = vld [vmem:[%s842 + $0x18] sm:$0xff]
        %v3078 = vld [vmem:[%s842 + $0x20] sm:$0xff]
        %v3079 = vld [vmem:[%s842 + $0x28] sm:$0xff]
        %v3080 = vld [vmem:[%s842 + $0x30] sm:$0xff]
        %v3081 = vld [vmem:[%s842 + $0x38] sm:$0xff]
        %v3082 = vld [vmem:[%s842 + $0x40] sm:$0xff]
        %v3083 = vld [vmem:[%s842 + $0x48] sm:$0xff]
        %v3084 = vld [vmem:[%s842 + $0x50] sm:$0xff]
        %v3085 = vld [vmem:[%s842 + $0x58] sm:$0xff]
        %v3086 = vld [vmem:[%s842 + $0x60] sm:$0xff]
        %v3087 = vld [vmem:[%s842 + $0x68] sm:$0xff]
        %v3088 = vld [vmem:[%s842 + $0x70] sm:$0xff]
        %v3089 = vld [vmem:[%s842 + $0x78] sm:$0xff]
        %v3090 = vpack.c.bf16 %v3071, %v3070
        %v3091 = vpack.c.bf16 %v3073, %v3072
        %v3092 = vld [vmem:[%s997] sm:$0x3]
        %v3094 = vlaneseq
        %v3095 = vshrl.u32 %v3094, 7
        %v3096 = vsub.s32 0, %v3095
        %v3097 = vrot.slane %v3092, %v3096
        %v3098 = vlaneseq
        %v3099 = vshrl.u32 %v3098, 7
        %v3100 = vsub.s32 1, %v3099
        %v3101 = vrot.slane %v3092, %v3100
        %v3120 = vunpack.c.l.b16 %v3074
        %v3121 = vunpack.c.h.b16 %v3074
        %v3122 = vunpack.c.l.b16 %v3075
        %v3123 = vunpack.c.h.b16 %v3075
        %v3124 = vunpack.c.l.b16 %v3076
        %v3125 = vunpack.c.h.b16 %v3076
        %v3126 = vunpack.c.l.b16 %v3077
        %v3127 = vunpack.c.h.b16 %v3077
        %v3128 = vunpack.c.l.b16 %v3078
        %v3129 = vunpack.c.h.b16 %v3078
        %v3130 = vunpack.c.l.b16 %v3079
        %v3131 = vunpack.c.h.b16 %v3079
        %v3132 = vunpack.c.l.b16 %v3080
        %v3133 = vunpack.c.h.b16 %v3080
        %v3134 = vunpack.c.l.b16 %v3081
        %v3135 = vunpack.c.h.b16 %v3081
        %v3136 = vunpack.c.l.b16 %v3082
        %v3137 = vunpack.c.h.b16 %v3082
        %v3138 = vunpack.c.l.b16 %v3083
        %v3139 = vunpack.c.h.b16 %v3083
        %v3140 = vunpack.c.l.b16 %v3084
        %v3141 = vunpack.c.h.b16 %v3084
        %v3142 = vunpack.c.l.b16 %v3085
        %v3143 = vunpack.c.h.b16 %v3085
        %v3144 = vunpack.c.l.b16 %v3086
        %v3145 = vunpack.c.h.b16 %v3086
        %v3146 = vunpack.c.l.b16 %v3087
        %v3147 = vunpack.c.h.b16 %v3087
        %v3148 = vunpack.c.l.b16 %v3088
        %v3149 = vunpack.c.h.b16 %v3088
        %v3150 = vunpack.c.l.b16 %v3089
        %v3151 = vunpack.c.h.b16 %v3089
        %v3152 = vpack.c.b16 %v3122, %v3120
        %v3153 = vpack.c.b16 %v3123, %v3121
        %v3154 = vpack.c.b16 %v3126, %v3124
        %v3155 = vpack.c.b16 %v3127, %v3125
        %v3156 = vpack.c.b16 %v3130, %v3128
        %v3157 = vpack.c.b16 %v3131, %v3129
        %v3158 = vpack.c.b16 %v3134, %v3132
        %v3159 = vpack.c.b16 %v3135, %v3133
        %v3160 = vpack.c.b16 %v3138, %v3136
        %v3161 = vpack.c.b16 %v3139, %v3137
        %v3162 = vpack.c.b16 %v3142, %v3140
        %v3163 = vpack.c.b16 %v3143, %v3141
        %v3164 = vpack.c.b16 %v3146, %v3144
        %v3165 = vpack.c.b16 %v3147, %v3145
        %v3166 = vpack.c.b16 %v3150, %v3148
        %v3167 = vpack.c.b16 %v3151, %v3149
        %3184 = vmatprep.subr.bf16.mxu0 %v3153
        %3185 = vmatpush1.bf16.msra.mxu0 %v3152
        %3186 = vmatprep.subr.bf16.mxu0 %v3155
        %3187 = vmatpush1.bf16.msra.mxu0 %v3154
        %3188 = vmatprep.subr.bf16.mxu0 %v3157
        %3189 = vmatpush1.bf16.msra.mxu0 %v3156
        %3190 = vmatprep.subr.bf16.mxu0 %v3159
        %3191 = vmatpush1.bf16.msra.mxu0 %v3158
        %3192 = vmatprep.subr.bf16.mxu0 %v3161
        %3193 = vmatpush1.bf16.msra.mxu0 %v3160
        %3194 = vmatprep.subr.bf16.mxu0 %v3163
        %3195 = vmatpush1.bf16.msra.mxu0 %v3162
        %3196 = vmatprep.subr.bf16.mxu0 %v3165
        %3197 = vmatpush1.bf16.msra.mxu0 %v3164
        %3198 = vmatprep.subr.bf16.mxu0 %v3167
        %3199 = vmatpush1.bf16.msra.mxu0 %v3166
        %3200 = vmatprep.subr.bf16.mxu0 0
        %3201 = vmatpush1.bf16.msra.mxu0 0
        %3202 = vmatprep.subr.bf16.mxu0 0
        %3203 = vmatpush1.bf16.msra.mxu0 0
        %3204 = vmatprep.subr.bf16.mxu0 0
        %3205 = vmatpush1.bf16.msra.mxu0 0
        %3206 = vmatprep.subr.bf16.mxu0 0
        %3207 = vmatpush1.bf16.msra.mxu0 0
        %3208 = vmatprep.subr.bf16.mxu0 0
        %3209 = vmatpush1.bf16.msra.mxu0 0
        %3210 = vmatprep.subr.bf16.mxu0 0
        %3211 = vmatpush1.bf16.msra.mxu0 0
        %3212 = vmatprep.subr.bf16.mxu0 0
        %3213 = vmatpush1.bf16.msra.mxu0 0
        %3214 = vmatprep.subr.bf16.mxu0 0
        %3215 = vmatpush1.bf16.msra.mxu0 0
        %3216 = vmatprep.mubr.bf16.mxu0 0
        %3217 = vmatmul.mubr.bf16.gmra.mrb[0].mxu0 %v3090
        %v3218 = vpop.f32.mrb[0].mxu0
        %v3219 = vadd.f32 %v3097, %v3218
        %v3220 = vpop.f32.mrb[0].mxu0
        %v3221 = vadd.f32 %v3101, %v3220
        %v3222 = vpop.f32.mrb[0].mxu0
        %v3223 = vadd.f32 %v3097, %v3222
        %v3224 = vpop.f32.mrb[0].mxu0
        %v3225 = vadd.f32 %v3101, %v3224
        %3226 = vmatprep.mubr.bf16.mxu0 0
        %3227 = vmatmul.mubr.bf16.gmra.mrb[0].mxu0 %v3091
        %v3228 = vpop.f32.mrb[0].mxu0
        %v3229 = vadd.f32 %v3097, %v3228
        %v3230 = vpop.f32.mrb[0].mxu0
        %v3231 = vadd.f32 %v3101, %v3230
        %v3232 = vpop.f32.mrb[0].mxu0
        %v3233 = vadd.f32 %v3097, %v3232
        %v3234 = vpop.f32.mrb[0].mxu0
        %v3235 = vadd.f32 %v3101, %v3234
        %3236 = vdwg.mxu0
        %v3237 = vsub.f32 0.0, %v3221
        %v3238 = vsub.f32 0.0, %v3225
        %v3239 = vsub.f32 0.0, %v3231
        %v3240 = vsub.f32 0.0, %v3235
        %v3241 = vmul.f32 %v3237, 1.442695
        %v3242 = vpow.pop %v3241
        %v3243 = vmul.f32 %v3238, 1.442695
        %v3244 = vpow.pop %v3243
        %v3245 = vmul.f32 %v3239, 1.442695
        %v3246 = vpow.pop %v3245
        %v3247 = vmul.f32 %v3240, 1.442695
        %v3248 = vpow.pop %v3247
        %v3249 = vadd.f32 %v3242, 1.0
        %v3250 = vadd.f32 %v3244, 1.0
        %v3251 = vadd.f32 %v3246, 1.0
        %v3252 = vadd.f32 %v3248, 1.0
        %v3253 = vrcp.pop %v3249
        %v3254 = vmul.f32 1.0, %v3253
        %v3255 = vrcp.pop %v3250
        %v3256 = vmul.f32 1.0, %v3255
        %v3257 = vrcp.pop %v3251
        %v3258 = vmul.f32 1.0, %v3257
        %v3259 = vrcp.pop %v3252
        %v3260 = vmul.f32 1.0, %v3259
        %v3261 = vmul.f32 %v3219, %v3254
        %v3262 = vmul.f32 %v3223, %v3256
        %v3263 = vmul.f32 %v3229, %v3258
        %v3264 = vmul.f32 %v3233, %v3260
        %vm3269 = vcmask 1041408
        %v3270 = vrot.slane %v3261, 6
        %v3271 = vrot.slane %v3262, 6
        %v3272 = vsel %vm3269, %v3270, %v3271
        %v3273 = vrot.slane %v3263, 6
        %v3274 = vrot.slane %v3264, 6
        %v3275 = vsel %vm3269, %v3273, %v3274
        %v3282 = vsel %vm3269, 0.0, %v3270
        %v3283 = vsel %vm3269, 0.0, %v3273
        %v3284 = vsel %vm3269, %v3271, 0.0
        %v3285 = vsel %vm3269, %v3274, 0.0
        %v3286 = vld [vmem:[%s1001] sm:$0x1f]
        %v3287 = vlaneseq
        %v3288 = vshrl.u32 %v3287, 7
        %v3289 = vsub.s32 0, %v3288
        %v3290 = vrot.slane %v3286, %v3289
        %v3291 = vmul.f32 %v3282, %v3290
        %v3292 = vmul.f32 %v3272, %v3290
        %v3293 = vmul.f32 %v3283, %v3290
        %v3294 = vmul.f32 %v3275, %v3290
        %v3295 = vadd.f32 %v3291, 0.0
        %v3296 = vadd.f32 %v3292, 0.0
        %v3297 = vadd.f32 %v3293, 0.0
        %v3298 = vadd.f32 %v3294, 0.0
        %v3299 = vlaneseq
        %v3300 = vshrl.u32 %v3299, 7
        %v3301 = vsub.s32 1, %v3300
        %v3302 = vrot.slane %v3286, %v3301
        %v3303 = vmul.f32 %v3282, %v3302
        %v3304 = vmul.f32 %v3272, %v3302
        %v3305 = vmul.f32 %v3284, %v3302
        %v3306 = vmul.f32 %v3283, %v3302
        %v3307 = vmul.f32 %v3275, %v3302
        %v3308 = vmul.f32 %v3285, %v3302
        %vm3315 = vcmask 1046528
        %v3316 = vrot.slane %v3303, 1
        %v3317 = vrot.slane %v3304, 1
        %v3318 = vsel %vm3315, %v3316, %v3317
        %v3319 = vrot.slane %v3305, 1
        %v3320 = vsel %vm3315, %v3317, %v3319
        %v3321 = vrot.slane %v3306, 1
        %v3322 = vrot.slane %v3307, 1
        %v3323 = vsel %vm3315, %v3321, %v3322
        %v3324 = vrot.slane %v3308, 1
        %v3325 = vsel %vm3315, %v3322, %v3324
        %v3330 = vadd.f32 %v3295, %v3318
        %v3331 = vadd.f32 %v3296, %v3320
        %v3332 = vadd.f32 %v3297, %v3323
        %v3333 = vadd.f32 %v3298, %v3325
        %v3334 = vlaneseq
        %v3335 = vshrl.u32 %v3334, 7
        %v3336 = vsub.s32 2, %v3335
        %v3337 = vrot.slane %v3286, %v3336
        %v3338 = vmul.f32 %v3282, %v3337
        %v3339 = vmul.f32 %v3272, %v3337
        %v3340 = vmul.f32 %v3284, %v3337
        %v3341 = vmul.f32 %v3283, %v3337
        %v3342 = vmul.f32 %v3275, %v3337
        %v3343 = vmul.f32 %v3285, %v3337
        %vm3350 = vcmask 1045504
        %v3351 = vrot.slane %v3338, 2
        %v3352 = vrot.slane %v3339, 2
        %v3353 = vsel %vm3350, %v3351, %v3352
        %v3354 = vrot.slane %v3340, 2
        %v3355 = vsel %vm3350, %v3352, %v3354
        %v3356 = vrot.slane %v3341, 2
        %v3357 = vrot.slane %v3342, 2
        %v3358 = vsel %vm3350, %v3356, %v3357
        %v3359 = vrot.slane %v3343, 2
        %v3360 = vsel %vm3350, %v3357, %v3359
        %v3365 = vadd.f32 %v3330, %v3353
        %v3366 = vadd.f32 %v3331, %v3355
        %v3367 = vadd.f32 %v3332, %v3358
        %v3368 = vadd.f32 %v3333, %v3360
        %v3369 = vlaneseq
        %v3370 = vshrl.u32 %v3369, 7
        %v3371 = vsub.s32 3, %v3370
        %v3372 = vrot.slane %v3286, %v3371
        %v3373 = vmul.f32 %v3282, %v3372
        %v3374 = vmul.f32 %v3272, %v3372
        %v3375 = vmul.f32 %v3284, %v3372
        %v3376 = vmul.f32 %v3283, %v3372
        %v3377 = vmul.f32 %v3275, %v3372
        %v3378 = vmul.f32 %v3285, %v3372
        %vm3385 = vcmask 1044480
        %v3386 = vrot.slane %v3373, 3
        %v3387 = vrot.slane %v3374, 3
        %v3388 = vsel %vm3385, %v3386, %v3387
        %v3389 = vrot.slane %v3375, 3
        %v3390 = vsel %vm3385, %v3387, %v3389
        %v3391 = vrot.slane %v3376, 3
        %v3392 = vrot.slane %v3377, 3
        %v3393 = vsel %vm3385, %v3391, %v3392
        %v3394 = vrot.slane %v3378, 3
        %v3395 = vsel %vm3385, %v3392, %v3394
        %v3400 = vadd.f32 %v3365, %v3388
        %v3401 = vadd.f32 %v3366, %v3390
        %v3402 = vadd.f32 %v3367, %v3393
        %v3403 = vadd.f32 %v3368, %v3395
        %v3404 = vlaneseq
        %v3405 = vshrl.u32 %v3404, 7
        %v3406 = vsub.s32 4, %v3405
        %v3407 = vrot.slane %v3286, %v3406
        %v3408 = vmul.f32 %v3282, %v3407
        %v3409 = vmul.f32 %v3272, %v3407
        %v3410 = vmul.f32 %v3284, %v3407
        %v3411 = vmul.f32 %v3283, %v3407
        %v3412 = vmul.f32 %v3275, %v3407
        %v3413 = vmul.f32 %v3285, %v3407
        %vm3420 = vcmask 1043456
        %v3421 = vrot.slane %v3408, 4
        %v3422 = vrot.slane %v3409, 4
        %v3423 = vsel %vm3420, %v3421, %v3422
        %v3424 = vrot.slane %v3410, 4
        %v3425 = vsel %vm3420, %v3422, %v3424
        %v3426 = vrot.slane %v3411, 4
        %v3427 = vrot.slane %v3412, 4
        %v3428 = vsel %vm3420, %v3426, %v3427
        %v3429 = vrot.slane %v3413, 4
        %v3430 = vsel %vm3420, %v3427, %v3429
        %v3435 = vadd.f32 %v3400, %v3423
        %v3436 = vadd.f32 %v3401, %v3425
        %v3437 = vadd.f32 %v3402, %v3428
        %v3438 = vadd.f32 %v3403, %v3430
        %v3439 = vld [vmem:[%s1004] sm:$0x1]
        %v3441 = vlaneseq
        %v3442 = vshrl.u32 %v3441, 7
        %v3443 = vsub.s32 0, %v3442
        %v3444 = vrot.slane %v3439, %v3443
        %v3446 = vadd.f32 %v3435, %v3444
        %v3447 = vadd.f32 %v3436, %v3444
        %v3448 = vadd.f32 %v3437, %v3444
        %v3449 = vadd.f32 %v3438, %v3444
        %v3450 = vld [vmem:[%s1008] sm:$0xf]
        %v3451 = vlaneseq
        %v3452 = vshrl.u32 %v3451, 7
        %v3453 = vsub.s32 2, %v3452
        %v3454 = vrot.slane %v3450, %v3453
        %v3455 = vsub.f32 %v3446, %v3454
        %v3456 = vsub.f32 %v3447, %v3454
        %v3457 = vsub.f32 %v3448, %v3454
        %v3458 = vsub.f32 %v3449, %v3454
        %v3459 = vadd.f32 %v3450, 1e-05
        %v3460 = vrsqrt.pop %v3459
        %v3461 = vlaneseq
        %v3462 = vshrl.u32 %v3461, 7
        %v3463 = vsub.s32 3, %v3462
        %v3464 = vrot.slane %v3460, %v3463
        %v3465 = vmul.f32 %v3455, %v3464
        %v3466 = vmul.f32 %v3456, %v3464
        %v3467 = vmul.f32 %v3457, %v3464
        %v3468 = vmul.f32 %v3458, %v3464
        %v3469 = vlaneseq
        %v3470 = vshrl.u32 %v3469, 7
        %v3471 = vsub.s32 0, %v3470
        %v3472 = vrot.slane %v3450, %v3471
        %v3473 = vmul.f32 %v3465, %v3472
        %v3474 = vmul.f32 %v3466, %v3472
        %v3475 = vmul.f32 %v3467, %v3472
        %v3476 = vmul.f32 %v3468, %v3472
        %v3477 = vlaneseq
        %v3478 = vshrl.u32 %v3477, 7
        %v3479 = vsub.s32 1, %v3478
        %v3480 = vrot.slane %v3450, %v3479
        %v3481 = vadd.f32 %v3473, %v3480
        %v3482 = vadd.f32 %v3474, %v3480
        %v3483 = vadd.f32 %v3475, %v3480
        %v3484 = vadd.f32 %v3476, %v3480
        %v3485 = vsub.f32 0.0, %v3481
        %v3486 = vsub.f32 0.0, %v3482
        %v3487 = vsub.f32 0.0, %v3483
        %v3488 = vsub.f32 0.0, %v3484
        %v3489 = vmul.f32 %v3485, 1.442695
        %v3490 = vpow.pop %v3489
        %v3491 = vmul.f32 %v3486, 1.442695
        %v3492 = vpow.pop %v3491
        %v3493 = vmul.f32 %v3487, 1.442695
        %v3494 = vpow.pop %v3493
        %v3495 = vmul.f32 %v3488, 1.442695
        %v3496 = vpow.pop %v3495
        %v3497 = vadd.f32 %v3490, 1.0
        %v3498 = vadd.f32 %v3492, 1.0
        %v3499 = vadd.f32 %v3494, 1.0
        %v3500 = vadd.f32 %v3496, 1.0
        %v3501 = vrcp.pop %v3497
        %v3502 = vmul.f32 1.0, %v3501
        %v3503 = vrcp.pop %v3498
        %v3504 = vmul.f32 1.0, %v3503
        %v3505 = vrcp.pop %v3499
        %v3506 = vmul.f32 1.0, %v3505
        %v3507 = vrcp.pop %v3500
        %v3508 = vmul.f32 1.0, %v3507
        %v3509 = vmul.f32 %v3481, %v3502
        %v3510 = vmul.f32 %v3482, %v3504
        %v3511 = vmul.f32 %v3483, %v3506
        %v3512 = vmul.f32 %v3484, %v3508
        %v3513 = vld [vmem:[%s851] sm:$0xf]
        %v3514 = vld [vmem:[%s851 + $0x4] sm:$0xf]
        %v3515 = vld [vmem:[%s851 + $0x8] sm:$0xf]
        %v3516 = vld [vmem:[%s851 + $0xc] sm:$0xf]
        %v3517 = vld [vmem:[%s851 + $0x10] sm:$0xf]
        %v3518 = vld [vmem:[%s851 + $0x14] sm:$0xf]
        %v3519 = vld [vmem:[%s851 + $0x18] sm:$0xf]
        %v3520 = vld [vmem:[%s851 + $0x1c] sm:$0xf]
        %v3521 = vld [vmem:[%s851 + $0x20] sm:$0xf]
        %v3522 = vld [vmem:[%s851 + $0x24] sm:$0xf]
        %v3523 = vld [vmem:[%s851 + $0x28] sm:$0xf]
        %v3524 = vld [vmem:[%s851 + $0x2c] sm:$0xf]
        %v3525 = vld [vmem:[%s851 + $0x30] sm:$0xf]
        %v3526 = vld [vmem:[%s851 + $0x34] sm:$0xf]
        %v3527 = vld [vmem:[%s851 + $0x38] sm:$0xf]
        %v3528 = vld [vmem:[%s851 + $0x3c] sm:$0xf]
        %v3529 = vpack.c.bf16 %v3510, %v3509
        %v3530 = vpack.c.bf16 %v3512, %v3511
        %v3531 = vld [vmem:[%s1011] sm:$0x1]
        %v3533 = vlaneseq
        %v3534 = vshrl.u32 %v3533, 7
        %v3535 = vsub.s32 0, %v3534
        %v3536 = vrot.slane %v3531, %v3535
        %v3554 = vunpack.c.l.b16 %v3513
        %v3555 = vunpack.c.l.b16 %v3514
        %v3556 = vunpack.c.l.b16 %v3515
        %v3557 = vunpack.c.l.b16 %v3516
        %v3558 = vunpack.c.l.b16 %v3517
        %v3559 = vunpack.c.l.b16 %v3518
        %v3560 = vunpack.c.l.b16 %v3519
        %v3561 = vunpack.c.l.b16 %v3520
        %v3562 = vunpack.c.l.b16 %v3521
        %v3563 = vunpack.c.l.b16 %v3522
        %v3564 = vunpack.c.l.b16 %v3523
        %v3565 = vunpack.c.l.b16 %v3524
        %v3566 = vunpack.c.l.b16 %v3525
        %v3567 = vunpack.c.l.b16 %v3526
        %v3568 = vunpack.c.l.b16 %v3527
        %v3569 = vunpack.c.l.b16 %v3528
        %v3570 = vpack.c.b16 %v3555, %v3554
        %v3571 = vpack.c.b16 %v3557, %v3556
        %v3572 = vpack.c.b16 %v3559, %v3558
        %v3573 = vpack.c.b16 %v3561, %v3560
        %v3574 = vpack.c.b16 %v3563, %v3562
        %v3575 = vpack.c.b16 %v3565, %v3564
        %v3576 = vpack.c.b16 %v3567, %v3566
        %v3577 = vpack.c.b16 %v3569, %v3568
        %3586 = vmatprep.subr.bf16.mxu0 0
        %3587 = vmatpush1.bf16.msra.mxu0 %v3570
        %3588 = vmatprep.subr.bf16.mxu0 0
        %3589 = vmatpush1.bf16.msra.mxu0 %v3571
        %3590 = vmatprep.subr.bf16.mxu0 0
        %3591 = vmatpush1.bf16.msra.mxu0 %v3572
        %3592 = vmatprep.subr.bf16.mxu0 0
        %3593 = vmatpush1.bf16.msra.mxu0 %v3573
        %3594 = vmatprep.subr.bf16.mxu0 0
        %3595 = vmatpush1.bf16.msra.mxu0 %v3574
        %3596 = vmatprep.subr.bf16.mxu0 0
        %3597 = vmatpush1.bf16.msra.mxu0 %v3575
        %3598 = vmatprep.subr.bf16.mxu0 0
        %3599 = vmatpush1.bf16.msra.mxu0 %v3576
        %3600 = vmatprep.subr.bf16.mxu0 0
        %3601 = vmatpush1.bf16.msra.mxu0 %v3577
        %3602 = vmatprep.subr.bf16.mxu0 0
        %3603 = vmatpush1.bf16.msra.mxu0 0
        %3604 = vmatprep.subr.bf16.mxu0 0
        %3605 = vmatpush1.bf16.msra.mxu0 0
        %3606 = vmatprep.subr.bf16.mxu0 0
        %3607 = vmatpush1.bf16.msra.mxu0 0
        %3608 = vmatprep.subr.bf16.mxu0 0
        %3609 = vmatpush1.bf16.msra.mxu0 0
        %3610 = vmatprep.subr.bf16.mxu0 0
        %3611 = vmatpush1.bf16.msra.mxu0 0
        %3612 = vmatprep.subr.bf16.mxu0 0
        %3613 = vmatpush1.bf16.msra.mxu0 0
        %3614 = vmatprep.subr.bf16.mxu0 0
        %3615 = vmatpush1.bf16.msra.mxu0 0
        %3616 = vmatprep.subr.bf16.mxu0 0
        %3617 = vmatpush1.bf16.msra.mxu0 0
        %3618 = vmatprep.mubr.bf16.mxu0 0
        %3619 = vmatmul.mubr.bf16.gmra.mrb[0].mxu0 %v3529
        %v3620 = vpop.f32.mrb[0].mxu0
        %v3621 = vadd.f32 %v3536, %v3620
        %v3622 = vpop.f32.mrb[0].mxu0
        %v3623 = vpop.f32.mrb[0].mxu0
        %v3624 = vadd.f32 %v3536, %v3623
        %v3625 = vpop.f32.mrb[0].mxu0
        %3626 = vmatprep.mubr.bf16.mxu0 0
        %3627 = vmatmul.mubr.bf16.gmra.mrb[0].mxu0 %v3530
        %v3628 = vpop.f32.mrb[0].mxu0
        %v3629 = vadd.f32 %v3536, %v3628
        %v3630 = vpop.f32.mrb[0].mxu0
        %v3631 = vpop.f32.mrb[0].mxu0
        %v3632 = vadd.f32 %v3536, %v3631
        %v3633 = vpop.f32.mrb[0].mxu0
        %3634 = vdwg.mxu0
        %v3635 = vadd.f32 %v3010, %v3621
        %v3636 = vadd.f32 %v3011, %v3624
        %v3637 = vadd.f32 %v3012, %v3629
        %v3638 = vadd.f32 %v3013, %v3632
        %3639 = vadd.xlane.f32.xlu0 %v3635
        %v3640 = vpop.xlane.xlu0 %3639
        %3641 = vadd.xlane.f32.xlu0 %v3636
        %v3642 = vpop.xlane.xlu0 %3641
        %3643 = vadd.xlane.f32.xlu0 %v3637
        %v3644 = vpop.xlane.xlu0 %3643
        %3645 = vadd.xlane.f32.xlu0 %v3638
        %v3646 = vpop.xlane.xlu0 %3645
        %v3647 = vmul.f32 %v3640, %v1041
        %v3648 = vmul.f32 %v3642, %v1041
        %v3649 = vmul.f32 %v3644, %v1041
        %v3650 = vmul.f32 %v3646, %v1041
        %v3651 = vsub.f32 %v3635, %v3647
        %v3652 = vsub.f32 %v3636, %v3648
        %v3653 = vsub.f32 %v3637, %v3649
        %v3654 = vsub.f32 %v3638, %v3650
        %v3655 = vmul.f32 %v3651, %v3651
        %v3656 = vmul.f32 %v3652, %v3652
        %v3657 = vmul.f32 %v3653, %v3653
        %v3658 = vmul.f32 %v3654, %v3654
        %3659 = vadd.xlane.f32.xlu0 %v3655
        %v3660 = vpop.xlane.xlu0 %3659
        %3661 = vadd.xlane.f32.xlu0 %v3656
        %v3662 = vpop.xlane.xlu0 %3661
        %3663 = vadd.xlane.f32.xlu0 %v3657
        %v3664 = vpop.xlane.xlu0 %3663
        %3665 = vadd.xlane.f32.xlu0 %v3658
        %v3666 = vpop.xlane.xlu0 %3665
        %v3667 = vmul.f32 %v3660, %v1041
        %v3668 = vmul.f32 %v3662, %v1041
        %v3669 = vmul.f32 %v3664, %v1041
        %v3670 = vmul.f32 %v3666, %v1041
        %v3671 = vadd.f32 %v3667, 1e-05
        %v3672 = vadd.f32 %v3668, 1e-05
        %v3673 = vadd.f32 %v3669, 1e-05
        %v3674 = vadd.f32 %v3670, 1e-05
        %v3675 = vrsqrt.pop %v3671
        %v3676 = vrsqrt.pop %v3672
        %v3677 = vrsqrt.pop %v3673
        %v3678 = vrsqrt.pop %v3674
        %v3679 = vmul.f32 %v3651, %v3675
        %v3680 = vmul.f32 %v3652, %v3676
        %v3681 = vmul.f32 %v3653, %v3677
        %v3682 = vmul.f32 %v3654, %v3678
        %v3683 = vlaneseq
        %v3684 = vshrl.u32 %v3683, 7
        %v3685 = vsub.s32 3, %v3684
        %v3686 = vrot.slane %v1029, %v3685
        %v3687 = vmul.f32 %v3679, %v3686
        %v3688 = vmul.f32 %v3680, %v3686
        %v3689 = vmul.f32 %v3681, %v3686
        %v3690 = vmul.f32 %v3682, %v3686
        %v3691 = vlaneseq
        %v3692 = vshrl.u32 %v3691, 7
        %v3693 = vsub.s32 3, %v3692
        %v3694 = vrot.slane %v1030, %v3693
        %v3695 = vadd.f32 %v3687, %v3694
        %v3696 = vadd.f32 %v3688, %v3694
        %v3697 = vadd.f32 %v3689, %v3694
        %v3698 = vadd.f32 %v3690, %v3694
        %s3699 = scalar_lea.vmem %s806, 128 [#allocation4]
        %v3700 = vld [vmem:[%s3699] sm:$0xff]
        %v3701 = vld [vmem:[%s3699 + $0x8] sm:$0xff]
        %v3702 = vld [vmem:[%s3699 + $0x10] sm:$0xff]
        %v3703 = vld [vmem:[%s3699 + $0x18] sm:$0xff]
        %v3704 = vld [vmem:[%s3699 + $0x20] sm:$0xff]
        %v3705 = vld [vmem:[%s3699 + $0x28] sm:$0xff]
        %v3706 = vld [vmem:[%s3699 + $0x30] sm:$0xff]
        %v3707 = vld [vmem:[%s3699 + $0x38] sm:$0xff]
        %v3708 = vld [vmem:[%s3699 + $0x40] sm:$0xff]
        %v3709 = vld [vmem:[%s3699 + $0x48] sm:$0xff]
        %v3710 = vld [vmem:[%s3699 + $0x50] sm:$0xff]
        %v3711 = vld [vmem:[%s3699 + $0x58] sm:$0xff]
        %v3712 = vld [vmem:[%s3699 + $0x60] sm:$0xff]
        %v3713 = vld [vmem:[%s3699 + $0x68] sm:$0xff]
        %v3714 = vld [vmem:[%s3699 + $0x70] sm:$0xff]
        %v3715 = vld [vmem:[%s3699 + $0x78] sm:$0xff]
        %v3716 = vpack.c.bf16 %v3696, %v3695
        %v3717 = vpack.c.bf16 %v3698, %v3697
        %v3718 = vlaneseq
        %v3719 = vshrl.u32 %v3718, 7
        %v3720 = vsub.s32 1, %v3719
        %v3721 = vrot.slane %v1031, %v3720
        %v3722 = vlaneseq
        %v3723 = vshrl.u32 %v3722, 7
        %v3724 = vsub.s32 3, %v3723
        %v3725 = vrot.slane %v1031, %v3724
        %v3728 = vlaneseq
        %v3729 = vshrl.u32 %v3728, 7
        %v3730 = vsub.s32 1, %v3729
        %v3731 = vrot.slane %v3721, %v3730
        %v3732 = vlaneseq
        %v3733 = vshrl.u32 %v3732, 7
        %v3734 = vsub.s32 1, %v3733
        %v3735 = vrot.slane %v3725, %v3734
        %v3752 = vunpack.c.l.b16 %v3700
        %v3753 = vunpack.c.h.b16 %v3700
        %v3754 = vunpack.c.l.b16 %v3701
        %v3755 = vunpack.c.h.b16 %v3701
        %v3756 = vunpack.c.l.b16 %v3702
        %v3757 = vunpack.c.h.b16 %v3702
        %v3758 = vunpack.c.l.b16 %v3703
        %v3759 = vunpack.c.h.b16 %v3703
        %v3760 = vunpack.c.l.b16 %v3704
        %v3761 = vunpack.c.h.b16 %v3704
        %v3762 = vunpack.c.l.b16 %v3705
        %v3763 = vunpack.c.h.b16 %v3705
        %v3764 = vunpack.c.l.b16 %v3706
        %v3765 = vunpack.c.h.b16 %v3706
        %v3766 = vunpack.c.l.b16 %v3707
        %v3767 = vunpack.c.h.b16 %v3707
        %v3768 = vunpack.c.l.b16 %v3708
        %v3769 = vunpack.c.h.b16 %v3708
        %v3770 = vunpack.c.l.b16 %v3709
        %v3771 = vunpack.c.h.b16 %v3709
        %v3772 = vunpack.c.l.b16 %v3710
        %v3773 = vunpack.c.h.b16 %v3710
        %v3774 = vunpack.c.l.b16 %v3711
        %v3775 = vunpack.c.h.b16 %v3711
        %v3776 = vunpack.c.l.b16 %v3712
        %v3777 = vunpack.c.h.b16 %v3712
        %v3778 = vunpack.c.l.b16 %v3713
        %v3779 = vunpack.c.h.b16 %v3713
        %v3780 = vunpack.c.l.b16 %v3714
        %v3781 = vunpack.c.h.b16 %v3714
        %v3782 = vunpack.c.l.b16 %v3715
        %v3783 = vunpack.c.h.b16 %v3715
        %v3784 = vpack.c.b16 %v3754, %v3752
        %v3785 = vpack.c.b16 %v3755, %v3753
        %v3786 = vpack.c.b16 %v3758, %v3756
        %v3787 = vpack.c.b16 %v3759, %v3757
        %v3788 = vpack.c.b16 %v3762, %v3760
        %v3789 = vpack.c.b16 %v3763, %v3761
        %v3790 = vpack.c.b16 %v3766, %v3764
        %v3791 = vpack.c.b16 %v3767, %v3765
        %v3792 = vpack.c.b16 %v3770, %v3768
        %v3793 = vpack.c.b16 %v3771, %v3769
        %v3794 = vpack.c.b16 %v3774, %v3772
        %v3795 = vpack.c.b16 %v3775, %v3773
        %v3796 = vpack.c.b16 %v3778, %v3776
        %v3797 = vpack.c.b16 %v3779, %v3777
        %v3798 = vpack.c.b16 %v3782, %v3780
        %v3799 = vpack.c.b16 %v3783, %v3781
        %3816 = vmatprep.subr.bf16.mxu0 %v3785
        %3817 = vmatpush1.bf16.msra.mxu0 %v3784
        %3818 = vmatprep.subr.bf16.mxu0 %v3787
        %3819 = vmatpush1.bf16.msra.mxu0 %v3786
        %3820 = vmatprep.subr.bf16.mxu0 %v3789
        %3821 = vmatpush1.bf16.msra.mxu0 %v3788
        %3822 = vmatprep.subr.bf16.mxu0 %v3791
        %3823 = vmatpush1.bf16.msra.mxu0 %v3790
        %3824 = vmatprep.subr.bf16.mxu0 %v3793
        %3825 = vmatpush1.bf16.msra.mxu0 %v3792
        %3826 = vmatprep.subr.bf16.mxu0 %v3795
        %3827 = vmatpush1.bf16.msra.mxu0 %v3794
        %3828 = vmatprep.subr.bf16.mxu0 %v3797
        %3829 = vmatpush1.bf16.msra.mxu0 %v3796
        %3830 = vmatprep.subr.bf16.mxu0 %v3799
        %3831 = vmatpush1.bf16.msra.mxu0 %v3798
        %3832 = vmatprep.subr.bf16.mxu0 0
        %3833 = vmatpush1.bf16.msra.mxu0 0
        %3834 = vmatprep.subr.bf16.mxu0 0
        %3835 = vmatpush1.bf16.msra.mxu0 0
        %3836 = vmatprep.subr.bf16.mxu0 0
        %3837 = vmatpush1.bf16.msra.mxu0 0
        %3838 = vmatprep.subr.bf16.mxu0 0
        %3839 = vmatpush1.bf16.msra.mxu0 0
        %3840 = vmatprep.subr.bf16.mxu0 0
        %3841 = vmatpush1.bf16.msra.mxu0 0
        %3842 = vmatprep.subr.bf16.mxu0 0
        %3843 = vmatpush1.bf16.msra.mxu0 0
        %3844 = vmatprep.subr.bf16.mxu0 0
        %3845 = vmatpush1.bf16.msra.mxu0 0
        %3846 = vmatprep.subr.bf16.mxu0 0
        %3847 = vmatpush1.bf16.msra.mxu0 0
        %3848 = vmatprep.mubr.bf16.mxu0 0
        %3849 = vmatmul.mubr.bf16.gmra.mrb[0].mxu0 %v3716
        %v3850 = vpop.f32.mrb[0].mxu0
        %v3851 = vadd.f32 %v3731, %v3850
        %v3852 = vpop.f32.mrb[0].mxu0
        %v3853 = vadd.f32 %v3735, %v3852
        %v3854 = vpop.f32.mrb[0].mxu0
        %v3855 = vadd.f32 %v3731, %v3854
        %v3856 = vpop.f32.mrb[0].mxu0
        %v3857 = vadd.f32 %v3735, %v3856
        %3858 = vmatprep.mubr.bf16.mxu0 0
        %3859 = vmatmul.mubr.bf16.gmra.mrb[0].mxu0 %v3717
        %v3860 = vpop.f32.mrb[0].mxu0
        %v3861 = vadd.f32 %v3731, %v3860
        %v3862 = vpop.f32.mrb[0].mxu0
        %v3863 = vadd.f32 %v3735, %v3862
        %v3864 = vpop.f32.mrb[0].mxu0
        %v3865 = vadd.f32 %v3731, %v3864
        %v3866 = vpop.f32.mrb[0].mxu0
        %v3867 = vadd.f32 %v3735, %v3866
        %3868 = vdwg.mxu0
        %v3869 = vsub.f32 0.0, %v3851
        %v3870 = vsub.f32 0.0, %v3853
        %v3871 = vsub.f32 0.0, %v3855
        %v3872 = vsub.f32 0.0, %v3857
        %v3873 = vsub.f32 0.0, %v3861
        %v3874 = vsub.f32 0.0, %v3863
        %v3875 = vsub.f32 0.0, %v3865
        %v3876 = vsub.f32 0.0, %v3867
        %v3877 = vmul.f32 %v3869, 1.442695
        %v3878 = vpow.pop %v3877
        %v3879 = vmul.f32 %v3870, 1.442695
        %v3880 = vpow.pop %v3879
        %v3881 = vmul.f32 %v3871, 1.442695
        %v3882 = vpow.pop %v3881
        %v3883 = vmul.f32 %v3872, 1.442695
        %v3884 = vpow.pop %v3883
        %v3885 = vmul.f32 %v3873, 1.442695
        %v3886 = vpow.pop %v3885
        %v3887 = vmul.f32 %v3874, 1.442695
        %v3888 = vpow.pop %v3887
        %v3889 = vmul.f32 %v3875, 1.442695
        %v3890 = vpow.pop %v3889
        %v3891 = vmul.f32 %v3876, 1.442695
        %v3892 = vpow.pop %v3891
        %v3893 = vadd.f32 %v3878, 1.0
        %v3894 = vadd.f32 %v3880, 1.0
        %v3895 = vadd.f32 %v3882, 1.0
        %v3896 = vadd.f32 %v3884, 1.0
        %v3897 = vadd.f32 %v3886, 1.0
        %v3898 = vadd.f32 %v3888, 1.0
        %v3899 = vadd.f32 %v3890, 1.0
        %v3900 = vadd.f32 %v3892, 1.0
        %v3901 = vrcp.pop %v3893
        %v3902 = vmul.f32 1.0, %v3901
        %v3903 = vrcp.pop %v3894
        %v3904 = vmul.f32 1.0, %v3903
        %v3905 = vrcp.pop %v3895
        %v3906 = vmul.f32 1.0, %v3905
        %v3907 = vrcp.pop %v3896
        %v3908 = vmul.f32 1.0, %v3907
        %v3909 = vrcp.pop %v3897
        %v3910 = vmul.f32 1.0, %v3909
        %v3911 = vrcp.pop %v3898
        %v3912 = vmul.f32 1.0, %v3911
        %v3913 = vrcp.pop %v3899
        %v3914 = vmul.f32 1.0, %v3913
        %v3915 = vrcp.pop %v3900
        %v3916 = vmul.f32 1.0, %v3915
        %v3917 = vmul.f32 %v3851, %v3902
        %v3918 = vmul.f32 %v3853, %v3904
        %v3919 = vmul.f32 %v3855, %v3906
        %v3920 = vmul.f32 %v3857, %v3908
        %v3921 = vmul.f32 %v3861, %v3910
        %v3922 = vmul.f32 %v3863, %v3912
        %v3923 = vmul.f32 %v3865, %v3914
        %v3924 = vmul.f32 %v3867, %v3916
        %s3925 = scalar_lea.vmem %s815, 128 [#allocation6]
        %v3926 = vld [vmem:[%s3925] sm:$0xf]
        %v3927 = vld [vmem:[%s3925 + $0x4] sm:$0xf]
        %v3928 = vld [vmem:[%s3925 + $0x8] sm:$0xf]
        %v3929 = vld [vmem:[%s3925 + $0xc] sm:$0xf]
        %v3930 = vld [vmem:[%s3925 + $0x10] sm:$0xf]
        %v3931 = vld [vmem:[%s3925 + $0x14] sm:$0xf]
        %v3932 = vld [vmem:[%s3925 + $0x18] sm:$0xf]
        %v3933 = vld [vmem:[%s3925 + $0x1c] sm:$0xf]
        %v3934 = vld [vmem:[%s3925 + $0x20] sm:$0xf]
        %v3935 = vld [vmem:[%s3925 + $0x24] sm:$0xf]
        %v3936 = vld [vmem:[%s3925 + $0x28] sm:$0xf]
        %v3937 = vld [vmem:[%s3925 + $0x2c] sm:$0xf]
        %v3938 = vld [vmem:[%s3925 + $0x30] sm:$0xf]
        %v3939 = vld [vmem:[%s3925 + $0x34] sm:$0xf]
        %v3940 = vld [vmem:[%s3925 + $0x38] sm:$0xf]
        %v3941 = vld [vmem:[%s3925 + $0x3c] sm:$0xf]
        %v3942 = vld [vmem:[%s3925 + $0x40] sm:$0xf]
        %v3943 = vld [vmem:[%s3925 + $0x44] sm:$0xf]
        %v3944 = vld [vmem:[%s3925 + $0x48] sm:$0xf]
        %v3945 = vld [vmem:[%s3925 + $0x4c] sm:$0xf]
        %v3946 = vld [vmem:[%s3925 + $0x50] sm:$0xf]
        %v3947 = vld [vmem:[%s3925 + $0x54] sm:$0xf]
        %v3948 = vld [vmem:[%s3925 + $0x58] sm:$0xf]
        %v3949 = vld [vmem:[%s3925 + $0x5c] sm:$0xf]
        %v3950 = vld [vmem:[%s3925 + $0x60] sm:$0xf]
        %v3951 = vld [vmem:[%s3925 + $0x64] sm:$0xf]
        %v3952 = vld [vmem:[%s3925 + $0x68] sm:$0xf]
        %v3953 = vld [vmem:[%s3925 + $0x6c] sm:$0xf]
        %v3954 = vld [vmem:[%s3925 + $0x70] sm:$0xf]
        %v3955 = vld [vmem:[%s3925 + $0x74] sm:$0xf]
        %v3956 = vld [vmem:[%s3925 + $0x78] sm:$0xf]
        %v3957 = vld [vmem:[%s3925 + $0x7c] sm:$0xf]
        %v3958 = vpack.c.bf16 %v3919, %v3917
        %v3959 = vpack.c.bf16 %v3920, %v3918
        %v3960 = vpack.c.bf16 %v3923, %v3921
        %v3961 = vpack.c.bf16 %v3924, %v3922
        %v3962 = vlaneseq
        %v3963 = vshrl.u32 %v3962, 7
        %v3964 = vsub.s32 1, %v3963
        %v3965 = vrot.slane %v1032, %v3964
        %v3998 = vunpack.c.l.b16 %v3926
        %v3999 = vunpack.c.l.b16 %v3927
        %v4000 = vunpack.c.l.b16 %v3928
        %v4001 = vunpack.c.l.b16 %v3929
        %v4002 = vunpack.c.l.b16 %v3930
        %v4003 = vunpack.c.l.b16 %v3931
        %v4004 = vunpack.c.l.b16 %v3932
        %v4005 = vunpack.c.l.b16 %v3933
        %v4006 = vunpack.c.l.b16 %v3934
        %v4007 = vunpack.c.l.b16 %v3935
        %v4008 = vunpack.c.l.b16 %v3936
        %v4009 = vunpack.c.l.b16 %v3937
        %v4010 = vunpack.c.l.b16 %v3938
        %v4011 = vunpack.c.l.b16 %v3939
        %v4012 = vunpack.c.l.b16 %v3940
        %v4013 = vunpack.c.l.b16 %v3941
        %v4014 = vunpack.c.l.b16 %v3942
        %v4015 = vunpack.c.l.b16 %v3943
        %v4016 = vunpack.c.l.b16 %v3944
        %v4017 = vunpack.c.l.b16 %v3945
        %v4018 = vunpack.c.l.b16 %v3946
        %v4019 = vunpack.c.l.b16 %v3947
        %v4020 = vunpack.c.l.b16 %v3948
        %v4021 = vunpack.c.l.b16 %v3949
        %v4022 = vunpack.c.l.b16 %v3950
        %v4023 = vunpack.c.l.b16 %v3951
        %v4024 = vunpack.c.l.b16 %v3952
        %v4025 = vunpack.c.l.b16 %v3953
        %v4026 = vunpack.c.l.b16 %v3954
        %v4027 = vunpack.c.l.b16 %v3955
        %v4028 = vunpack.c.l.b16 %v3956
        %v4029 = vunpack.c.l.b16 %v3957
        %v4030 = vpack.c.b16 %v3999, %v3998
        %v4031 = vpack.c.b16 %v4001, %v4000
        %v4032 = vpack.c.b16 %v4003, %v4002
        %v4033 = vpack.c.b16 %v4005, %v4004
        %v4034 = vpack.c.b16 %v4007, %v4006
        %v4035 = vpack.c.b16 %v4009, %v4008
        %v4036 = vpack.c.b16 %v4011, %v4010
        %v4037 = vpack.c.b16 %v4013, %v4012
        %v4038 = vpack.c.b16 %v4015, %v4014
        %v4039 = vpack.c.b16 %v4017, %v4016
        %v4040 = vpack.c.b16 %v4019, %v4018
        %v4041 = vpack.c.b16 %v4021, %v4020
        %v4042 = vpack.c.b16 %v4023, %v4022
        %v4043 = vpack.c.b16 %v4025, %v4024
        %v4044 = vpack.c.b16 %v4027, %v4026
        %v4045 = vpack.c.b16 %v4029, %v4028
        %4062 = vmatprep.subr.bf16.mxu0 0
        %4063 = vmatpush1.bf16.msra.mxu0 %v4030
        %4064 = vmatprep.subr.bf16.mxu0 0
        %4065 = vmatpush1.bf16.msra.mxu0 %v4031
        %4066 = vmatprep.subr.bf16.mxu0 0
        %4067 = vmatpush1.bf16.msra.mxu0 %v4032
        %4068 = vmatprep.subr.bf16.mxu0 0
        %4069 = vmatpush1.bf16.msra.mxu0 %v4033
        %4070 = vmatprep.subr.bf16.mxu0 0
        %4071 = vmatpush1.bf16.msra.mxu0 %v4034
        %4072 = vmatprep.subr.bf16.mxu0 0
        %4073 = vmatpush1.bf16.msra.mxu0 %v4035
        %4074 = vmatprep.subr.bf16.mxu0 0
        %4075 = vmatpush1.bf16.msra.mxu0 %v4036
        %4076 = vmatprep.subr.bf16.mxu0 0
        %4077 = vmatpush1.bf16.msra.mxu0 %v4037
        %4078 = vmatprep.subr.bf16.mxu0 0
        %4079 = vmatpush1.bf16.msra.mxu0 %v4038
        %4080 = vmatprep.subr.bf16.mxu0 0
        %4081 = vmatpush1.bf16.msra.mxu0 %v4039
        %4082 = vmatprep.subr.bf16.mxu0 0
        %4083 = vmatpush1.bf16.msra.mxu0 %v4040
        %4084 = vmatprep.subr.bf16.mxu0 0
        %4085 = vmatpush1.bf16.msra.mxu0 %v4041
        %4086 = vmatprep.subr.bf16.mxu0 0
        %4087 = vmatpush1.bf16.msra.mxu0 %v4042
        %4088 = vmatprep.subr.bf16.mxu0 0
        %4089 = vmatpush1.bf16.msra.mxu0 %v4043
        %4090 = vmatprep.subr.bf16.mxu0 0
        %4091 = vmatpush1.bf16.msra.mxu0 %v4044
        %4092 = vmatprep.subr.bf16.mxu0 0
        %4093 = vmatpush1.bf16.msra.mxu0 %v4045
        %4094 = vmatprep.mubr.bf16.mxu0 %v3959
        %4095 = vmatmul.mubr.bf16.gmra.mrb[0].mxu0 %v3958
        %v4096 = vpop.f32.mrb[0].mxu0
        %v4097 = vadd.f32 %v3965, %v4096
        %v4098 = vpop.f32.mrb[0].mxu0
        %v4099 = vpop.f32.mrb[0].mxu0
        %v4100 = vadd.f32 %v3965, %v4099
        %v4101 = vpop.f32.mrb[0].mxu0
        %4102 = vmatprep.mubr.bf16.mxu0 %v3961
        %4103 = vmatmul.mubr.bf16.gmra.mrb[0].mxu0 %v3960
        %v4104 = vpop.f32.mrb[0].mxu0
        %v4105 = vadd.f32 %v3965, %v4104
        %v4106 = vpop.f32.mrb[0].mxu0
        %v4107 = vpop.f32.mrb[0].mxu0
        %v4108 = vadd.f32 %v3965, %v4107
        %v4109 = vpop.f32.mrb[0].mxu0
        %4110 = vdwg.mxu0
        %v4111 = vmul.f32 %v4097, 0.5
        %v4112 = vmul.f32 %v4100, 0.5
        %v4113 = vmul.f32 %v4105, 0.5
        %v4114 = vmul.f32 %v4108, 0.5
        %v4115 = vadd.f32 %v3635, %v4111
        %v4116 = vadd.f32 %v3636, %v4112
        %v4117 = vadd.f32 %v3637, %v4113
        %v4118 = vadd.f32 %v3638, %v4114
        %4119 = vadd.xlane.f32.xlu0 %v4115
        %v4120 = vpop.xlane.xlu0 %4119
        %4121 = vadd.xlane.f32.xlu0 %v4116
        %v4122 = vpop.xlane.xlu0 %4121
        %4123 = vadd.xlane.f32.xlu0 %v4117
        %v4124 = vpop.xlane.xlu0 %4123
        %4125 = vadd.xlane.f32.xlu0 %v4118
        %v4126 = vpop.xlane.xlu0 %4125
        %v4127 = vmul.f32 %v4120, %v1041
        %v4128 = vmul.f32 %v4122, %v1041
        %v4129 = vmul.f32 %v4124, %v1041
        %v4130 = vmul.f32 %v4126, %v1041
        %v4131 = vsub.f32 %v4115, %v4127
        %v4132 = vsub.f32 %v4116, %v4128
        %v4133 = vsub.f32 %v4117, %v4129
        %v4134 = vsub.f32 %v4118, %v4130
        %v4135 = vmul.f32 %v4131, %v4131
        %v4136 = vmul.f32 %v4132, %v4132
        %v4137 = vmul.f32 %v4133, %v4133
        %v4138 = vmul.f32 %v4134, %v4134
        %4139 = vadd.xlane.f32.xlu0 %v4135
        %v4140 = vpop.xlane.xlu0 %4139
        %4141 = vadd.xlane.f32.xlu0 %v4136
        %v4142 = vpop.xlane.xlu0 %4141
        %4143 = vadd.xlane.f32.xlu0 %v4137
        %v4144 = vpop.xlane.xlu0 %4143
        %4145 = vadd.xlane.f32.xlu0 %v4138
        %v4146 = vpop.xlane.xlu0 %4145
        %v4147 = vmul.f32 %v4140, %v1041
        %v4148 = vmul.f32 %v4142, %v1041
        %v4149 = vmul.f32 %v4144, %v1041
        %v4150 = vmul.f32 %v4146, %v1041
        %v4151 = vadd.f32 %v4147, 1e-05
        %v4152 = vadd.f32 %v4148, 1e-05
        %v4153 = vadd.f32 %v4149, 1e-05
        %v4154 = vadd.f32 %v4150, 1e-05
        %v4155 = vrsqrt.pop %v4151
        %v4156 = vrsqrt.pop %v4152
        %v4157 = vrsqrt.pop %v4153
        %v4158 = vrsqrt.pop %v4154
        %v4159 = vmul.f32 %v4131, %v4155
        %v4160 = vmul.f32 %v4132, %v4156
        %v4161 = vmul.f32 %v4133, %v4157
        %v4162 = vmul.f32 %v4134, %v4158
        %v4163 = vlaneseq
        %v4164 = vshrl.u32 %v4163, 7
        %v4165 = vsub.s32 4, %v4164
        %v4166 = vrot.slane %v1029, %v4165
        %v4167 = vmul.f32 %v4159, %v4166
        %v4168 = vmul.f32 %v4160, %v4166
        %v4169 = vmul.f32 %v4161, %v4166
        %v4170 = vmul.f32 %v4162, %v4166
        %v4171 = vlaneseq
        %v4172 = vshrl.u32 %v4171, 7
        %v4173 = vsub.s32 4, %v4172
        %v4174 = vrot.slane %v1030, %v4173
        %v4175 = vadd.f32 %v4167, %v4174
        %v4176 = vadd.f32 %v4168, %v4174
        %v4177 = vadd.f32 %v4169, %v4174
        %v4178 = vadd.f32 %v4170, %v4174
        %4179 = vst [vmem:[#allocation2] sm:$0xff] %v4175
        %4180 = vst [vmem:[#allocation2 + $0x8] sm:$0xff] %v4176
        %4181 = vst [vmem:[#allocation2 + $0x10] sm:$0xff] %v4177
        %4182 = vst [vmem:[#allocation2 + $0x18] sm:$0xff] %v4178
        %p4183 = scmp.eq.s32.totalorder %s45, 3
        // Predicated region
        $region129: #{forward.1} parent=99 // pred_check
          %p4184 = pneg %p4183
        $region130: #{forward.1} parent=99 // pred_check_branch
          %4186 = sbr.rel (%p4184) target = $region132
        $region131: #{forward.1} parent=99 // pred_region
          %v4187 = vld [vmem:[%s18] sm:$0xff]
          %v4188 = vld [vmem:[%s18 + $0x8] sm:$0xff]
          %v4189 = vmul.f32 %v4175, %v4187
          %v4190 = vmul.f32 %v4176, %v4188
          %v4191 = vmul.f32 %v4177, %v4187
          %v4192 = vmul.f32 %v4178, %v4188
          %4193 = vadd.xlane.f32.xlu0 %v4189
          %v4194 = vpop.xlane.xlu0 %4193
          %4195 = vadd.xlane.f32.xlu0 %v4190
          %v4196 = vpop.xlane.xlu0 %4195
          %4197 = vadd.xlane.f32.xlu0 %v4191
          %v4198 = vpop.xlane.xlu0 %4197
          %4199 = vadd.xlane.f32.xlu0 %v4192
          %v4200 = vpop.xlane.xlu0 %4199
          %v4205 = vlaneseq
          %v4206 = vand.u32 %v4205, 127
          %v4207 = vlaneseq
          %v4208 = vshrl.u32 %v4207, 7
          %v4209 = vsub.s32 %v4206, %v4208
          %v4210 = vrot.slane %v4194, %v4209
          %v4211 = vadd.s32 %v4206, 4294967288
          %v4212 = vlaneseq
          %v4213 = vshrl.u32 %v4212, 7
          %v4214 = vsub.s32 %v4211, %v4213
          %v4215 = vrot.slane %v4196, %v4214
          %vm4216 = vcmask 130112
          %v4217 = vsel %vm4216, %v4215, %v4210
          %v4218 = vlaneseq
          %v4219 = vshrl.u32 %v4218, 7
          %v4220 = vsub.s32 %v4206, %v4219
          %v4221 = vrot.slane %v4198, %v4220
          %v4222 = vlaneseq
          %v4223 = vshrl.u32 %v4222, 7
          %v4224 = vsub.s32 %v4211, %v4223
          %v4225 = vrot.slane %v4200, %v4224
          %v4226 = vsel %vm4216, %v4225, %v4221
          %vm4227 = vcmask 1041409
          %v4228 = vsel %vm4227, %v4226, %v4217
          %vm4230 = vcmask 123904
          %v4231 = vsel %vm4230, %v4228, 0.0
          %4232 = vadd.xlane.f32.xlu0 %v4231
          %v4233 = vpop.xlane.xlu0 %4232
          %v4234 = vld [vmem:[#allocation3] sm:$0x1]
          %v4236 = vlaneseq
          %v4237 = vshrl.u32 %v4236, 7
          %v4238 = vsub.s32 0, %v4237
          %v4239 = vrot.slane %v4234, %v4238
          %v4241 = vadd.f32 %v4233, %v4239
          %vm4242 = vcmask 1024
          %4243 = vst.msk [vmem:[%s20] sm:$0x3] %vm4242, %v4241
        $region132: #{forward.1} parent=99 // pred_fallthru
          _
        // Predicated region
        $region133: #{forward.1} parent=99 // pred_check
          %p4244 = pneg %p563
        $region134: #{forward.1} parent=99 // pred_check_branch
          %4246 = sbr.rel (%p4244) target = $region136
        $region135: #{forward.1} parent=99 // pred_region
          _
        $region136: #{forward.1} parent=99 // pred_fallthru
          _
        // Predicated region
        $region137: #{forward.1} parent=99 // pred_check
          %p4247 = pneg %p563
        $region138: #{forward.1} parent=99 // pred_check_branch
          %4249 = sbr.rel (%p4247) target = $region140
        $region139: #{forward.1} parent=99 // pred_region
          _
        $region140: #{forward.1} parent=99 // pred_fallthru
          _
      $region100: #{forward.1} parent=5 // pred_fallthru
        _
      %p4250 = scmp.le.s32.totalorder 2, %s40
      // Predicated region
      $region141: #{forward.1} parent=5 // pred_check
        %p4251 = pneg %p4250
      $region142: #{forward.1} parent=5 // pred_check_branch
        %4253 = sbr.rel (%p4251) target = $region144
      $region143: #{forward.1} parent=5 // pred_region
        %s4254 = ssub.s32 %s40, 2
      $region144: #{forward.1} parent=5 // pred_fallthru
        _
    $region6: #{forward.1} parent=1 // loop_footer
      %s44 = sadd.s32 1, %s40
    $region7: #{forward.1} parent=1 // loop_footer_branch
      %39 = sbr.rel target = $region3
    $region8: #{forward.1} parent=1 // loop_exit
      _
    %4255 = vsyncpa [#allocation5], 1
    %s4256 = scalar_lea.sflag [#allocation5], 1
    %4257 = vsyncpa %s4256, 1
    %4258 = vsyncpa [#allocation7], 1
    %s4259 = scalar_lea.sflag [#allocation7], 1
    %4260 = vsyncpa %s4259, 1
    %4261 = vsyncpa [#allocation10], 1
    %s4262 = scalar_lea.sflag [#allocation10], 1
    %4263 = vsyncpa %s4262, 1
    %4264 = vsyncpa [#allocation13], 1
    %s4265 = scalar_lea.sflag [#allocation13], 1
    %4266 = vsyncpa %s4265, 1

</llo_original>
